<compile_context>
chip_gen: v6e
topology: v6e:2x2x1
jax: 0.10.0
libtpu: 0.0.40
codegen_flags: <defaults>
</compile_context>

<pallas_src>
import functools

import jax
import jax.numpy as jnp
from jax.experimental import pallas as pl
from jax.experimental.pallas import tpu as pltpu

LANE = 128
_LATENT_VPU_MAX = 16  # latent dims at/below this bypass the MXU entirely


def _round_up(n, m):
    return ((n + m - 1) // m) * m


def _num_tensorcores():
    """TensorCores sharing the grid on one chip (v7x: 2, v5e/v6e: 1)."""
    try:
        kind = jax.devices()[0].device_kind.lower()
    except Exception:
        return 1
    return 2 if "v7" in kind else 1


def _vmem_cap_bytes():
    try:
        return int(pltpu.get_tpu_info().vmem_capacity_bytes)
    except Exception:
        return 64 << 20  # conservative fallback (v7x per-TC VMEM)


def make_wae_kernel(latent_dim, latent_via_mxu):
    """Build the fused encoder+decoder kernel for one batch tile."""

    def kernel(x_ref,
               w1_ref, b1_ref,   # encoder L1
               w2_ref, b2_ref,   # encoder L2 (latent)
               w3_ref, b3_ref,   # decoder L1 (latent)
               w4_ref, b4_ref,   # decoder L2
               recon_ref, z_ref):
        # ---- encoder layer 1: MXU (bf16 operands, f32 accumulate) + ReLU ----
        h1 = jnp.dot(x_ref[...], w1_ref[...],
                     preferred_element_type=jnp.float32) + b1_ref[...]
        h1 = jnp.maximum(h1, 0.0)

        if latent_via_mxu:
            # Lane-padded latent dim -> ordinary MXU matmuls.
            z = jnp.dot(h1.astype(w2_ref.dtype), w2_ref[...],
                        preferred_element_type=jnp.float32) + b2_ref[...]
            z_ref[...] = z.astype(z_ref.dtype)
            h2 = jnp.dot(z.astype(w3_ref.dtype), w3_ref[...],
                         preferred_element_type=jnp.float32) + b3_ref[...]
        else:
            # Tiny latent dim: avoid MXU matmuls that would be >98% zero-pad.
            #   w2_ref: w2^T rows, (Lrows, H_pad) f32
            #   b2_ref: (Lrows, 1) f32
            #   w3_ref: (Lrows, H_pad) f32
            h2 = jnp.zeros_like(h1)
            for j in range(latent_dim):                       # static unroll
                # z[:, j] = sum_h h1[:, h] * w2[h, j]  (VPU mul + XLU reduce)
                zj = jnp.sum(h1 * w2_ref[j:j + 1, :], axis=-1, keepdims=True)
                zj = zj + b2_ref[j:j + 1, :]                  # (tile, 1)
                z_ref[:, j:j + 1] = zj.astype(z_ref.dtype)
                # decoder layer 1: rank-1 update  h2 += z[:, j] * w3[j, :]
                h2 = h2 + zj * w3_ref[j:j + 1, :]
            h2 = h2 + b3_ref[...]

        h2 = jnp.maximum(h2, 0.0)                             # ReLU (VPU, f32)

        # ---- decoder layer 2: MXU ----
        recon = jnp.dot(h2.astype(w4_ref.dtype), w4_ref[...],
                        preferred_element_type=jnp.float32) + b4_ref[...]
        recon_ref[...] = recon.astype(recon_ref.dtype)

    return kernel


def prepare_params(params, *, compute_dtype=jnp.bfloat16,
                   latent_vpu_max=_LATENT_VPU_MAX):
    """Pad / cast / re-layout the weights ONCE (hoisted out of the forward)."""
    w1, b1, w2, b2, w3, b3, w4, b4 = params
    D, H = w1.shape
    L = w2.shape[1]
    D_pad, H_pad = _round_up(D, LANE), _round_up(H, LANE)
    latent_via_mxu = L > latent_vpu_max

    def pad2(a, rows, cols, dtype):
        a = a.astype(dtype)
        return jnp.pad(a, ((0, rows - a.shape[0]), (0, cols - a.shape[1])))

    w1p = pad2(w1, D_pad, H_pad, compute_dtype)
    b1p = pad2(b1, 1, H_pad, jnp.float32)
    w4p = pad2(w4, H_pad, D_pad, compute_dtype)
    b4p = pad2(b4, 1, D_pad, jnp.float32)

    if latent_via_mxu:
        L_pad = _round_up(L, LANE)
        w2p = pad2(w2, H_pad, L_pad, compute_dtype)
        b2p = pad2(b2, 1, L_pad, jnp.float32)
        w3p = pad2(w3, L_pad, H_pad, compute_dtype)
        b3p = pad2(b3, 1, H_pad, jnp.float32)
    else:
        L_rows = _round_up(max(L, 1), 8)                 # sublane-friendly rows
        w2p = pad2(w2.T, L_rows, H_pad, jnp.float32)     # w2^T: (L, H)
        b2p = pad2(b2.reshape(L, 1), L_rows, 1, jnp.float32)
        w3p = pad2(w3, L_rows, H_pad, jnp.float32)
        b3p = pad2(b3, 1, H_pad, jnp.float32)

    arrays = (w1p, b1p, w2p, b2p, w3p, b3p, w4p, b4p)
    dims = dict(D=D, H=H, L=L, D_pad=D_pad, H_pad=H_pad,
                latent_via_mxu=latent_via_mxu, compute_dtype=compute_dtype)
    return arrays, dims


def wae_forward_prepared(x, prepared_arrays, dims, *, batch_tile=1024,
                         out_dtype=jnp.float32):
    """Forward pass from pre-padded params. Jit this for repeated use."""
    w1p, b1p, w2p, b2p, w3p, b3p, w4p, b4p = prepared_arrays
    D, L = dims["D"], dims["L"]
    D_pad, H_pad = dims["D_pad"], dims["H_pad"]
    latent_via_mxu = dims["latent_via_mxu"]
    compute_dtype = dims["compute_dtype"]
    B = x.shape[0]

    # --- batch tile sizing --------------------------------------------------
    row_align = 16 if jnp.dtype(compute_dtype) == jnp.dtype(jnp.bfloat16) else 8
    tile = _round_up(min(batch_tile, max(B, row_align)), row_align)
    num_tc = _num_tensorcores()
    if num_tc > 1:
        # v7x: keep an even number of grid steps >= 2 so both TCs get work.
        steps = max(num_tc, pl.cdiv(_round_up(B, row_align), tile))
        steps = _round_up(steps, num_tc)
        tile = _round_up(pl.cdiv(B, steps), row_align)
    B_pad = _round_up(B, tile)
    grid = (B_pad // tile,)

    # --- batch padding + cast (zero rows are sliced off at the end) ----------
    x_p = jnp.pad(x.astype(compute_dtype), ((0, B_pad - B), (0, D_pad - D)))

    kernel = make_wae_kernel(L, latent_via_mxu)
    z_cols = w2p.shape[1] if latent_via_mxu else L       # lanes of the z output

    def full(a):
        n = a.ndim
        return pl.BlockSpec(a.shape, lambda i: (0,) * n)

    # --- cost / VMEM bookkeeping ---------------------------------------------
    cbytes = jnp.dtype(compute_dtype).itemsize
    obytes = jnp.dtype(out_dtype).itemsize
    weight_bytes = sum(int(a.size) * a.dtype.itemsize for a in prepared_arrays)
    flops = 2 * B_pad * H_pad * (2 * D_pad + 2 * z_cols)
    bytes_accessed = (B_pad * D_pad * cbytes + weight_bytes
                      + B_pad * D_pad * obytes + B_pad * z_cols * obytes)
    cost = pl.CostEstimate(flops=int(flops), transcendentals=0,
                           bytes_accessed=int(bytes_accessed))

    io_bytes = 2 * tile * (D_pad * cbytes + D_pad * obytes + z_cols * obytes)
    scratch_bytes = 3 * tile * max(H_pad, D_pad) * 4      # f32 intermediates
    need = 2 * weight_bytes + io_bytes + scratch_bytes + (8 << 20)
    vmem_limit = int(min(max(need, 16 << 20), int(_vmem_cap_bytes() * 0.75)))

    recon_p, z_p = pl.pallas_call(
        kernel,
        grid=grid,
        in_specs=[
            pl.BlockSpec((tile, D_pad), lambda i: (i, 0)),      # x tile
            full(w1p), full(b1p),                               # encoder L1
            full(w2p), full(b2p),                               # encoder L2
            full(w3p), full(b3p),                               # decoder L1
            full(w4p), full(b4p),                               # decoder L2
        ],
        out_specs=[
            pl.BlockSpec((tile, D_pad), lambda i: (i, 0)),      # reconstruction
            pl.BlockSpec((tile, z_cols), lambda i: (i, 0)),     # z
        ],
        out_shape=[
            jax.ShapeDtypeStruct((B_pad, D_pad), out_dtype),
            jax.ShapeDtypeStruct((B_pad, z_cols), out_dtype),
        ],
        compiler_params=pltpu.CompilerParams(
            dimension_semantics=("parallel",),
            vmem_limit_bytes=vmem_limit),
        cost_estimate=cost,
    )(x_p, w1p, b1p, w2p, b2p, w3p, b3p, w4p, b4p)

    # Strip batch / lane padding.
    return recon_p[:B, :D], z_p[:B, :L]


def wae_forward(x, params, *, batch_tile=1024, compute_dtype=jnp.bfloat16,
                out_dtype=jnp.float32):
    """One-shot convenience wrapper (pads params per call)."""
    arrays, dims = prepare_params(params, compute_dtype=compute_dtype)
    return wae_forward_prepared(x, arrays, dims, batch_tile=batch_tile,
                                out_dtype=out_dtype)


def init_params(key, original_dim, intermediate_dim, latent_dim):
    """Deterministic synthetic init (uniform, roughly matching nn.Linear scale)."""
    ks = jax.random.split(key, 8)

    def linear(kw, kb, fan_in, fan_out):
        bound = 1.0 / jnp.sqrt(fan_in)
        w = jax.random.uniform(kw, (fan_in, fan_out), jnp.float32, -bound, bound)
        b = jax.random.uniform(kb, (1, fan_out), jnp.float32, -bound, bound)
        return w, b

    w1, b1 = linear(ks[0], ks[1], original_dim, intermediate_dim)
    w2, b2 = linear(ks[2], ks[3], intermediate_dim, latent_dim)
    w3, b3 = linear(ks[4], ks[5], latent_dim, intermediate_dim)
    w4, b4 = linear(ks[6], ks[7], intermediate_dim, original_dim)
    return (w1, b1, w2, b2, w3, b3, w4, b4)


def wae_reference(x, params, compute_dtype=jnp.bfloat16):
    """Pure-JAX reference mirroring the kernel's precision plan:
    big matmuls (layers 1 and 4) with bf16 operands / f32 accumulation,
    tiny latent layers (2 and 3) in f32."""
    w1, b1, w2, b2, w3, b3, w4, b4 = params

    def mm(a, w):
        return jnp.dot(a.astype(compute_dtype), w.astype(compute_dtype),
                       preferred_element_type=jnp.float32)

    h1 = jnp.maximum(mm(x, w1) + b1, 0.0)
    z = jnp.dot(h1, w2) + b2
    h2 = jnp.maximum(jnp.dot(z, w3) + b3, 0.0)
    recon = mm(h2, w4) + b4
    return recon, z


if __name__ == "__main__":
    # Module defaults (intermediate_dim=512, latent_dim=2); ragged batch (250)
    # and a non-multiple-of-128 feature dim (200) exercise the padding paths.
    B, original_dim, intermediate_dim, latent_dim = 250, 200, 512, 2

    key = jax.random.PRNGKey(0)
    kx, kp = jax.random.split(key)
    x = jax.random.normal(kx, (B, original_dim), jnp.float32)
    params = init_params(kp, original_dim, intermediate_dim, latent_dim)

    # Hoist weight padding / cast out of the per-call path; jit the rest.
    arrays, dims = prepare_params(params)
    fwd = jax.jit(functools.partial(wae_forward_prepared, dims=dims))

    recon, z = fwd(x, arrays)
    jax.block_until_ready((recon, z))

    recon_want, z_want = wae_reference(x, params)
    assert recon.shape == (B, original_dim) and z.shape == (B, latent_dim)
    assert jnp.allclose(z, z_want, atol=2e-3, rtol=2e-3), \
        float(jnp.abs(z - z_want).max())
    assert jnp.allclose(recon, recon_want, atol=2e-3, rtol=2e-3), \
        float(jnp.abs(recon - recon_want).max())

    print("KERNEL_OK")
</pallas_src>

<mosaic_0001>
module attributes {stable_mosaic.version = 11 : i64} {
  func.func @kernel(%arg0: i32, %arg1: memref<256x256xbf16, #tpu.memory_space<vmem>>, %arg2: memref<256x512xbf16, #tpu.memory_space<vmem>>, %arg3: memref<1x512xf32, #tpu.memory_space<vmem>>, %arg4: memref<8x512xf32, #tpu.memory_space<vmem>>, %arg5: memref<8x1xf32, #tpu.memory_space<vmem>>, %arg6: memref<8x512xf32, #tpu.memory_space<vmem>>, %arg7: memref<1x512xf32, #tpu.memory_space<vmem>>, %arg8: memref<512x256xbf16, #tpu.memory_space<vmem>>, %arg9: memref<1x256xf32, #tpu.memory_space<vmem>>, %arg10: memref<256x256xf32, #tpu.memory_space<vmem>>, %arg11: memref<256x2xf32, #tpu.memory_space<vmem>>) attributes {dimension_semantics = [#tpu.dimension_semantics<parallel>], iteration_bounds = array<i64: 1>, scalar_prefetch = 0 : i64, scratch_operands = 0 : i64, tpu.core_type = #tpu.core_type<tc>, window_params = [{transform_indices = @transform_0, window_bounds = array<i64: 256, 256>}, {pipeline_mode = #tpu.pipeline_mode<synchronous>, transform_indices = @transform_1, window_bounds = array<i64: 256, 512>}, {pipeline_mode = #tpu.pipeline_mode<synchronous>, transform_indices = @transform_2, window_bounds = array<i64: 1, 512>}, {pipeline_mode = #tpu.pipeline_mode<synchronous>, transform_indices = @transform_3, window_bounds = array<i64: 8, 512>}, {pipeline_mode = #tpu.pipeline_mode<synchronous>, transform_indices = @transform_4, window_bounds = array<i64: 8, 1>}, {pipeline_mode = #tpu.pipeline_mode<synchronous>, transform_indices = @transform_5, window_bounds = array<i64: 8, 512>}, {pipeline_mode = #tpu.pipeline_mode<synchronous>, transform_indices = @transform_6, window_bounds = array<i64: 1, 512>}, {pipeline_mode = #tpu.pipeline_mode<synchronous>, transform_indices = @transform_7, window_bounds = array<i64: 512, 256>}, {pipeline_mode = #tpu.pipeline_mode<synchronous>, transform_indices = @transform_8, window_bounds = array<i64: 1, 256>}, {transform_indices = @transform_9, window_bounds = array<i64: 256, 256>}, {transform_indices = @transform_10, window_bounds = array<i64: 256, 2>}]} {
    %c0 = arith.constant 0 : index
    %c0_0 = arith.constant 0 : index
    %0 = vector.load %arg1[%c0, %c0_0] : memref<256x256xbf16, #tpu.memory_space<vmem>>, vector<256x256xbf16>
    %c0_1 = arith.constant 0 : index
    %c0_2 = arith.constant 0 : index
    %1 = vector.load %arg2[%c0_1, %c0_2] : memref<256x512xbf16, #tpu.memory_space<vmem>>, vector<256x512xbf16>
    %cst = arith.constant dense<0.000000e+00> : vector<256x512xf32>
    %2 = tpu.matmul %0, %1, %cst {dimension_numbers = #tpu.dot_dimension_numbers<[1], [0], [0], [1], [0, 0, 1, 1], [], []>} : vector<256x256xbf16>, vector<256x512xbf16>, vector<256x512xf32> -> vector<256x512xf32>
    %c0_3 = arith.constant 0 : index
    %c0_4 = arith.constant 0 : index
    %3 = vector.load %arg3[%c0_3, %c0_4] : memref<1x512xf32, #tpu.memory_space<vmem>>, vector<1x512xf32>
    %4 = vector.broadcast %3 : vector<1x512xf32> to vector<256x512xf32>
    %5 = arith.addf %2, %4 : vector<256x512xf32>
    %cst_5 = arith.constant 0.000000e+00 : f32
    %6 = vector.broadcast %cst_5 : f32 to vector<256x512xf32>
    %7 = arith.maximumf %5, %6 : vector<256x512xf32>
    %cst_6 = arith.constant 0.000000e+00 : f32
    %8 = vector.broadcast %cst_6 : f32 to vector<256x512xf32>
    %c0_7 = arith.constant 0 : index
    %c0_8 = arith.constant 0 : index
    %9 = vector.load %arg4[%c0_7, %c0_8] : memref<8x512xf32, #tpu.memory_space<vmem>>, vector<1x512xf32>
    %10 = vector.broadcast %9 : vector<1x512xf32> to vector<256x512xf32>
    %11 = arith.mulf %7, %10 : vector<256x512xf32>
    %cst_9 = arith.constant dense<0.000000e+00> : vector<256xf32>
    %12 = vector.multi_reduction <add>, %11, %cst_9 [1] : vector<256x512xf32> to vector<256xf32>
    %13 = vector.shape_cast %12 : vector<256xf32> to vector<256x1xf32>
    %c0_10 = arith.constant 0 : index
    %c0_11 = arith.constant 0 : index
    %14 = vector.load %arg5[%c0_10, %c0_11] : memref<8x1xf32, #tpu.memory_space<vmem>>, vector<1x1xf32>
    %15 = vector.broadcast %14 : vector<1x1xf32> to vector<256x1xf32>
    %16 = arith.addf %13, %15 : vector<256x1xf32>
    %c0_12 = arith.constant 0 : index
    %c0_13 = arith.constant 0 : index
    %17 = vector.load %arg11[%c0_12, %c0_13] : memref<256x2xf32, #tpu.memory_space<vmem>>, vector<256x1xf32>
    tpu.vector_store %arg11[%c0_12, %c0_13], %16 {strides = array<i32>} : memref<256x2xf32, #tpu.memory_space<vmem>>, vector<256x1xf32>,
    %c0_14 = arith.constant 0 : index
    %c0_15 = arith.constant 0 : index
    %18 = vector.load %arg6[%c0_14, %c0_15] : memref<8x512xf32, #tpu.memory_space<vmem>>, vector<1x512xf32>
    %19 = vector.broadcast %16 : vector<256x1xf32> to vector<256x512xf32>
    %20 = vector.broadcast %18 : vector<1x512xf32> to vector<256x512xf32>
    %21 = arith.mulf %19, %20 : vector<256x512xf32>
    %22 = arith.addf %8, %21 : vector<256x512xf32>
    %c1 = arith.constant 1 : index
    %c0_16 = arith.constant 0 : index
    %23 = vector.load %arg4[%c1, %c0_16] : memref<8x512xf32, #tpu.memory_space<vmem>>, vector<1x512xf32>
    %24 = vector.broadcast %23 : vector<1x512xf32> to vector<256x512xf32>
    %25 = arith.mulf %7, %24 : vector<256x512xf32>
    %cst_17 = arith.constant dense<0.000000e+00> : vector<256xf32>
    %26 = vector.multi_reduction <add>, %25, %cst_17 [1] : vector<256x512xf32> to vector<256xf32>
    %27 = vector.shape_cast %26 : vector<256xf32> to vector<256x1xf32>
    %c1_18 = arith.constant 1 : index
    %c0_19 = arith.constant 0 : index
    %28 = vector.load %arg5[%c1_18, %c0_19] : memref<8x1xf32, #tpu.memory_space<vmem>>, vector<1x1xf32>
    %29 = vector.broadcast %28 : vector<1x1xf32> to vector<256x1xf32>
    %30 = arith.addf %27, %29 : vector<256x1xf32>
    %c0_20 = arith.constant 0 : index
    %c1_21 = arith.constant 1 : index
    %31 = vector.load %arg11[%c0_20, %c1_21] : memref<256x2xf32, #tpu.memory_space<vmem>>, vector<256x1xf32>
    tpu.vector_store %arg11[%c0_20, %c1_21], %30 {strides = array<i32>} : memref<256x2xf32, #tpu.memory_space<vmem>>, vector<256x1xf32>,
    %c1_22 = arith.constant 1 : index
    %c0_23 = arith.constant 0 : index
    %32 = vector.load %arg6[%c1_22, %c0_23] : memref<8x512xf32, #tpu.memory_space<vmem>>, vector<1x512xf32>
    %33 = vector.broadcast %30 : vector<256x1xf32> to vector<256x512xf32>
    %34 = vector.broadcast %32 : vector<1x512xf32> to vector<256x512xf32>
    %35 = arith.mulf %33, %34 : vector<256x512xf32>
    %36 = arith.addf %22, %35 : vector<256x512xf32>
    %c0_24 = arith.constant 0 : index
    %c0_25 = arith.constant 0 : index
    %37 = vector.load %arg7[%c0_24, %c0_25] : memref<1x512xf32, #tpu.memory_space<vmem>>, vector<1x512xf32>
    %38 = vector.broadcast %37 : vector<1x512xf32> to vector<256x512xf32>
    %39 = arith.addf %36, %38 : vector<256x512xf32>
    %cst_26 = arith.constant 0.000000e+00 : f32
    %40 = vector.broadcast %cst_26 : f32 to vector<256x512xf32>
    %41 = arith.maximumf %39, %40 : vector<256x512xf32>
    %42 = arith.truncf %41 : vector<256x512xf32> to vector<256x512xbf16>
    %c0_27 = arith.constant 0 : index
    %c0_28 = arith.constant 0 : index
    %43 = vector.load %arg8[%c0_27, %c0_28] : memref<512x256xbf16, #tpu.memory_space<vmem>>, vector<512x256xbf16>
    %cst_29 = arith.constant dense<0.000000e+00> : vector<256x256xf32>
    %44 = tpu.matmul %42, %43, %cst_29 {dimension_numbers = #tpu.dot_dimension_numbers<[1], [0], [0], [1], [0, 0, 1, 1], [], []>} : vector<256x512xbf16>, vector<512x256xbf16>, vector<256x256xf32> -> vector<256x256xf32>
    %c0_30 = arith.constant 0 : index
    %c0_31 = arith.constant 0 : index
    %45 = vector.load %arg9[%c0_30, %c0_31] : memref<1x256xf32, #tpu.memory_space<vmem>>, vector<1x256xf32>
    %46 = vector.broadcast %45 : vector<1x256xf32> to vector<256x256xf32>
    %47 = arith.addf %44, %46 : vector<256x256xf32>
    %c0_32 = arith.constant 0 : index
    %c0_33 = arith.constant 0 : index
    %48 = vector.load %arg10[%c0_32, %c0_33] : memref<256x256xf32, #tpu.memory_space<vmem>>, vector<256x256xf32>
    tpu.vector_store %arg10[%c0_32, %c0_33], %47 {strides = array<i32>} : memref<256x256xf32, #tpu.memory_space<vmem>>, vector<256x256xf32>,
    return
  }
  func.func @transform_0(%arg0: i32) -> (i32, i32) {
    %c0_i32 = arith.constant 0 : i32
    %c0_i32_0 = arith.constant 0 : i32
    return %arg0, %c0_i32 : i32, i32
  }
  func.func @transform_1(%arg0: i32) -> (i32, i32) {
    %c0_i32 = arith.constant 0 : i32
    %c0_i32_0 = arith.constant 0 : i32
    %c0_i32_1 = arith.constant 0 : i32
    return %c0_i32, %c0_i32_0 : i32, i32
  }
  func.func @transform_2(%arg0: i32) -> (i32, i32) {
    %c0_i32 = arith.constant 0 : i32
    %c0_i32_0 = arith.constant 0 : i32
    %c0_i32_1 = arith.constant 0 : i32
    return %c0_i32, %c0_i32_0 : i32, i32
  }
  func.func @transform_3(%arg0: i32) -> (i32, i32) {
    %c0_i32 = arith.constant 0 : i32
    %c0_i32_0 = arith.constant 0 : i32
    %c0_i32_1 = arith.constant 0 : i32
    return %c0_i32, %c0_i32_0 : i32, i32
  }
  func.func @transform_4(%arg0: i32) -> (i32, i32) {
    %c0_i32 = arith.constant 0 : i32
    %c0_i32_0 = arith.constant 0 : i32
    %c0_i32_1 = arith.constant 0 : i32
    return %c0_i32, %c0_i32_0 : i32, i32
  }
  func.func @transform_5(%arg0: i32) -> (i32, i32) {
    %c0_i32 = arith.constant 0 : i32
    %c0_i32_0 = arith.constant 0 : i32
    %c0_i32_1 = arith.constant 0 : i32
    return %c0_i32, %c0_i32_0 : i32, i32
  }
  func.func @transform_6(%arg0: i32) -> (i32, i32) {
    %c0_i32 = arith.constant 0 : i32
    %c0_i32_0 = arith.constant 0 : i32
    %c0_i32_1 = arith.constant 0 : i32
    return %c0_i32, %c0_i32_0 : i32, i32
  }
  func.func @transform_7(%arg0: i32) -> (i32, i32) {
    %c0_i32 = arith.constant 0 : i32
    %c0_i32_0 = arith.constant 0 : i32
    %c0_i32_1 = arith.constant 0 : i32
    return %c0_i32, %c0_i32_0 : i32, i32
  }
  func.func @transform_8(%arg0: i32) -> (i32, i32) {
    %c0_i32 = arith.constant 0 : i32
    %c0_i32_0 = arith.constant 0 : i32
    %c0_i32_1 = arith.constant 0 : i32
    return %c0_i32, %c0_i32_0 : i32, i32
  }
  func.func @transform_9(%arg0: i32) -> (i32, i32) {
    %c0_i32 = arith.constant 0 : i32
    %c0_i32_0 = arith.constant 0 : i32
    return %arg0, %c0_i32 : i32, i32
  }
  func.func @transform_10(%arg0: i32) -> (i32, i32) {
    %c0_i32 = arith.constant 0 : i32
    %c0_i32_0 = arith.constant 0 : i32
    return %arg0, %c0_i32 : i32, i32
  }
}

</mosaic_0001>

<llo_original>
// kernel: wae_forward_prepared.1
$region0: #{wae_forward_prepared.1}
  #allocation0 [shape = 'u32[]', space=smem, size = 0x4, offset = 0x4, fixed_abs, tag = 'smem constant byte address 0x4 - core index']
  #allocation1 [shape = 'u32[144,128]{1,0:T(1,128)}', space=vmem, size = 0x12000, scoped, tag = 'internal scratch']
  %s0 = inlined_call_operand.vmem [shape: bf16[256,256], index: 0, kind: input, shape index: {}]
  %s1 = inlined_call_operand.vmem [shape: bf16[256,512], index: 1, kind: input, shape index: {}]
  %s2 = inlined_call_operand.vmem [shape: f32[1,512], index: 2, kind: input, shape index: {}]
  %s3 = inlined_call_operand.vmem [shape: f32[8,512], index: 3, kind: input, shape index: {}]
  %s4 = inlined_call_operand.vmem [shape: f32[8,1], index: 4, kind: input, shape index: {}]
  %s5 = inlined_call_operand.vmem [shape: f32[8,512], index: 5, kind: input, shape index: {}]
  %s6 = inlined_call_operand.vmem [shape: f32[1,512], index: 6, kind: input, shape index: {}]
  %s7 = inlined_call_operand.vmem [shape: bf16[512,256], index: 7, kind: input, shape index: {}]
  %s8 = inlined_call_operand.vmem [shape: f32[1,256], index: 8, kind: input, shape index: {}]
  %s9 = inlined_call_operand.vmem [shape: f32[256,256], index: 9, kind: output, shape index: {0}]
  %s10 = inlined_call_operand.vmem [shape: f32[256,2], index: 10, kind: output, shape index: {1}]
  %11 = xla_tuple %s9, %s10
  %s12 = sld [smem:[#allocation0]]
  $region54: #{wae_forward_prepared.1} parent=0
    _
  %s14 = ssub.s32 1, %s12
  %s15 = scalar_select 0, %s14, %s12
  // Predicated region
  $region2: #{wae_forward_prepared.1} parent=0 // pred_check
    _
  $region3: #{wae_forward_prepared.1} parent=0 // pred_check_branch
    %17 = sbr.rel (0) target = $region5
  $region4: #{wae_forward_prepared.1} parent=0 // pred_region
    _
  $region5: #{wae_forward_prepared.1} parent=0 // pred_fallthru
    _
  // Predicated region
  $region6: #{wae_forward_prepared.1} parent=0 // pred_check
    _
  $region7: #{wae_forward_prepared.1} parent=0 // pred_check_branch
    %19 = sbr.rel (0) target = $region9
  $region8: #{wae_forward_prepared.1} parent=0 // pred_region
    _
  $region9: #{wae_forward_prepared.1} parent=0 // pred_fallthru
    _
  // Predicated region
  $region10: #{wae_forward_prepared.1} parent=0 // pred_check
    _
  $region11: #{wae_forward_prepared.1} parent=0 // pred_check_branch
    %21 = sbr.rel (0) target = $region13
  $region12: #{wae_forward_prepared.1} parent=0 // pred_region
    _
  $region13: #{wae_forward_prepared.1} parent=0 // pred_fallthru
    _
  // Predicated region
  $region14: #{wae_forward_prepared.1} parent=0 // pred_check
    _
  $region15: #{wae_forward_prepared.1} parent=0 // pred_check_branch
    %23 = sbr.rel (0) target = $region17
  $region16: #{wae_forward_prepared.1} parent=0 // pred_region
    _
  $region17: #{wae_forward_prepared.1} parent=0 // pred_fallthru
    _
  // Predicated region
  $region18: #{wae_forward_prepared.1} parent=0 // pred_check
    _
  $region19: #{wae_forward_prepared.1} parent=0 // pred_check_branch
    %25 = sbr.rel (0) target = $region21
  $region20: #{wae_forward_prepared.1} parent=0 // pred_region
    _
  $region21: #{wae_forward_prepared.1} parent=0 // pred_fallthru
    _
  // Predicated region
  $region22: #{wae_forward_prepared.1} parent=0 // pred_check
    _
  $region23: #{wae_forward_prepared.1} parent=0 // pred_check_branch
    %27 = sbr.rel (0) target = $region25
  $region24: #{wae_forward_prepared.1} parent=0 // pred_region
    _
  $region25: #{wae_forward_prepared.1} parent=0 // pred_fallthru
    _
  // Predicated region
  $region26: #{wae_forward_prepared.1} parent=0 // pred_check
    _
  $region27: #{wae_forward_prepared.1} parent=0 // pred_check_branch
    %29 = sbr.rel (0) target = $region29
  $region28: #{wae_forward_prepared.1} parent=0 // pred_region
    _
  $region29: #{wae_forward_prepared.1} parent=0 // pred_fallthru
    _
  // Predicated region
  $region30: #{wae_forward_prepared.1} parent=0 // pred_check
    _
  $region31: #{wae_forward_prepared.1} parent=0 // pred_check_branch
    %31 = sbr.rel (0) target = $region33
  $region32: #{wae_forward_prepared.1} parent=0 // pred_region
    _
  $region33: #{wae_forward_prepared.1} parent=0 // pred_fallthru
    _
  // Predicated region
  $region34: #{wae_forward_prepared.1} parent=0 // pred_check
    _
  $region35: #{wae_forward_prepared.1} parent=0 // pred_check_branch
    %33 = sbr.rel (0) target = $region37
  $region36: #{wae_forward_prepared.1} parent=0 // pred_region
    _
  $region37: #{wae_forward_prepared.1} parent=0 // pred_fallthru
    _
  %v34 = vld [vmem:[%s0] sm:$0xff]
  %v35 = vld [vmem:[%s0 + $0x8] sm:$0xff]
  %v36 = vld [vmem:[%s0 + $0x10] sm:$0xff]
  %v37 = vld [vmem:[%s0 + $0x18] sm:$0xff]
  %v38 = vld [vmem:[%s0 + $0x20] sm:$0xff]
  %v39 = vld [vmem:[%s0 + $0x28] sm:$0xff]
  %v40 = vld [vmem:[%s0 + $0x30] sm:$0xff]
  %v41 = vld [vmem:[%s0 + $0x38] sm:$0xff]
  %v42 = vld [vmem:[%s0 + $0x40] sm:$0xff]
  %v43 = vld [vmem:[%s0 + $0x48] sm:$0xff]
  %v44 = vld [vmem:[%s0 + $0x50] sm:$0xff]
  %v45 = vld [vmem:[%s0 + $0x58] sm:$0xff]
  %v46 = vld [vmem:[%s0 + $0x60] sm:$0xff]
  %v47 = vld [vmem:[%s0 + $0x68] sm:$0xff]
  %v48 = vld [vmem:[%s0 + $0x70] sm:$0xff]
  %v49 = vld [vmem:[%s0 + $0x78] sm:$0xff]
  %v50 = vld [vmem:[%s0 + $0x80] sm:$0xff]
  %v51 = vld [vmem:[%s0 + $0x88] sm:$0xff]
  %v52 = vld [vmem:[%s0 + $0x90] sm:$0xff]
  %v53 = vld [vmem:[%s0 + $0x98] sm:$0xff]
  %v54 = vld [vmem:[%s0 + $0xa0] sm:$0xff]
  %v55 = vld [vmem:[%s0 + $0xa8] sm:$0xff]
  %v56 = vld [vmem:[%s0 + $0xb0] sm:$0xff]
  %v57 = vld [vmem:[%s0 + $0xb8] sm:$0xff]
  %v58 = vld [vmem:[%s0 + $0xc0] sm:$0xff]
  %v59 = vld [vmem:[%s0 + $0xc8] sm:$0xff]
  %v60 = vld [vmem:[%s0 + $0xd0] sm:$0xff]
  %v61 = vld [vmem:[%s0 + $0xd8] sm:$0xff]
  %v62 = vld [vmem:[%s0 + $0xe0] sm:$0xff]
  %v63 = vld [vmem:[%s0 + $0xe8] sm:$0xff]
  %v64 = vld [vmem:[%s0 + $0xf0] sm:$0xff]
  %v65 = vld [vmem:[%s0 + $0xf8] sm:$0xff]
  %v66 = vld [vmem:[%s1] sm:$0xff]
  %v67 = vld [vmem:[%s1 + $0x8] sm:$0xff]
  %v68 = vld [vmem:[%s1 + $0x10] sm:$0xff]
  %v69 = vld [vmem:[%s1 + $0x18] sm:$0xff]
  %v70 = vld [vmem:[%s1 + $0x20] sm:$0xff]
  %v71 = vld [vmem:[%s1 + $0x28] sm:$0xff]
  %v72 = vld [vmem:[%s1 + $0x30] sm:$0xff]
  %v73 = vld [vmem:[%s1 + $0x38] sm:$0xff]
  %v74 = vld [vmem:[%s1 + $0x40] sm:$0xff]
  %v75 = vld [vmem:[%s1 + $0x48] sm:$0xff]
  %v76 = vld [vmem:[%s1 + $0x50] sm:$0xff]
  %v77 = vld [vmem:[%s1 + $0x58] sm:$0xff]
  %v78 = vld [vmem:[%s1 + $0x60] sm:$0xff]
  %v79 = vld [vmem:[%s1 + $0x68] sm:$0xff]
  %v80 = vld [vmem:[%s1 + $0x70] sm:$0xff]
  %v81 = vld [vmem:[%s1 + $0x78] sm:$0xff]
  %v82 = vld [vmem:[%s1 + $0x80] sm:$0xff]
  %v83 = vld [vmem:[%s1 + $0x88] sm:$0xff]
  %v84 = vld [vmem:[%s1 + $0x90] sm:$0xff]
  %v85 = vld [vmem:[%s1 + $0x98] sm:$0xff]
  %v86 = vld [vmem:[%s1 + $0xa0] sm:$0xff]
  %v87 = vld [vmem:[%s1 + $0xa8] sm:$0xff]
  %v88 = vld [vmem:[%s1 + $0xb0] sm:$0xff]
  %v89 = vld [vmem:[%s1 + $0xb8] sm:$0xff]
  %v90 = vld [vmem:[%s1 + $0xc0] sm:$0xff]
  %v91 = vld [vmem:[%s1 + $0xc8] sm:$0xff]
  %v92 = vld [vmem:[%s1 + $0xd0] sm:$0xff]
  %v93 = vld [vmem:[%s1 + $0xd8] sm:$0xff]
  %v94 = vld [vmem:[%s1 + $0xe0] sm:$0xff]
  %v95 = vld [vmem:[%s1 + $0xe8] sm:$0xff]
  %v96 = vld [vmem:[%s1 + $0xf0] sm:$0xff]
  %v97 = vld [vmem:[%s1 + $0xf8] sm:$0xff]
  %v98 = vld [vmem:[%s1 + $0x100] sm:$0xff]
  %v99 = vld [vmem:[%s1 + $0x108] sm:$0xff]
  %v100 = vld [vmem:[%s1 + $0x110] sm:$0xff]
  %v101 = vld [vmem:[%s1 + $0x118] sm:$0xff]
  %v102 = vld [vmem:[%s1 + $0x120] sm:$0xff]
  %v103 = vld [vmem:[%s1 + $0x128] sm:$0xff]
  %v104 = vld [vmem:[%s1 + $0x130] sm:$0xff]
  %v105 = vld [vmem:[%s1 + $0x138] sm:$0xff]
  %v106 = vld [vmem:[%s1 + $0x140] sm:$0xff]
  %v107 = vld [vmem:[%s1 + $0x148] sm:$0xff]
  %v108 = vld [vmem:[%s1 + $0x150] sm:$0xff]
  %v109 = vld [vmem:[%s1 + $0x158] sm:$0xff]
  %v110 = vld [vmem:[%s1 + $0x160] sm:$0xff]
  %v111 = vld [vmem:[%s1 + $0x168] sm:$0xff]
  %v112 = vld [vmem:[%s1 + $0x170] sm:$0xff]
  %v113 = vld [vmem:[%s1 + $0x178] sm:$0xff]
  %v114 = vld [vmem:[%s1 + $0x180] sm:$0xff]
  %v115 = vld [vmem:[%s1 + $0x188] sm:$0xff]
  %v116 = vld [vmem:[%s1 + $0x190] sm:$0xff]
  %v117 = vld [vmem:[%s1 + $0x198] sm:$0xff]
  %v118 = vld [vmem:[%s1 + $0x1a0] sm:$0xff]
  %v119 = vld [vmem:[%s1 + $0x1a8] sm:$0xff]
  %v120 = vld [vmem:[%s1 + $0x1b0] sm:$0xff]
  %v121 = vld [vmem:[%s1 + $0x1b8] sm:$0xff]
  %v122 = vld [vmem:[%s1 + $0x1c0] sm:$0xff]
  %v123 = vld [vmem:[%s1 + $0x1c8] sm:$0xff]
  %v124 = vld [vmem:[%s1 + $0x1d0] sm:$0xff]
  %v125 = vld [vmem:[%s1 + $0x1d8] sm:$0xff]
  %v126 = vld [vmem:[%s1 + $0x1e0] sm:$0xff]
  %v127 = vld [vmem:[%s1 + $0x1e8] sm:$0xff]
  %v128 = vld [vmem:[%s1 + $0x1f0] sm:$0xff]
  %v129 = vld [vmem:[%s1 + $0x1f8] sm:$0xff]
  %v130 = vld [vmem:[%s2] sm:$0xf]
  %v132 = vlaneseq
  %v133 = vshrl.u32 %v132, 7
  %v134 = vsub.s32 0, %v133
  %v135 = vrot.slane %v130, %v134
  %v136 = vlaneseq
  %v137 = vshrl.u32 %v136, 7
  %v138 = vsub.s32 1, %v137
  %v139 = vrot.slane %v130, %v138
  %v140 = vlaneseq
  %v141 = vshrl.u32 %v140, 7
  %v142 = vsub.s32 2, %v141
  %v143 = vrot.slane %v130, %v142
  %v144 = vlaneseq
  %v145 = vshrl.u32 %v144, 7
  %v146 = vsub.s32 3, %v145
  %v147 = vrot.slane %v130, %v146
  %v184 = vunpack.c.l.b16 %v34
  %v185 = vunpack.c.h.b16 %v34
  %v186 = vunpack.c.l.b16 %v35
  %v187 = vunpack.c.h.b16 %v35
  %v188 = vunpack.c.l.b16 %v36
  %v189 = vunpack.c.h.b16 %v36
  %v190 = vunpack.c.l.b16 %v37
  %v191 = vunpack.c.h.b16 %v37
  %v192 = vunpack.c.l.b16 %v38
  %v193 = vunpack.c.h.b16 %v38
  %v194 = vunpack.c.l.b16 %v39
  %v195 = vunpack.c.h.b16 %v39
  %v196 = vunpack.c.l.b16 %v40
  %v197 = vunpack.c.h.b16 %v40
  %v198 = vunpack.c.l.b16 %v41
  %v199 = vunpack.c.h.b16 %v41
  %v200 = vunpack.c.l.b16 %v42
  %v201 = vunpack.c.h.b16 %v42
  %v202 = vunpack.c.l.b16 %v43
  %v203 = vunpack.c.h.b16 %v43
  %v204 = vunpack.c.l.b16 %v44
  %v205 = vunpack.c.h.b16 %v44
  %v206 = vunpack.c.l.b16 %v45
  %v207 = vunpack.c.h.b16 %v45
  %v208 = vunpack.c.l.b16 %v46
  %v209 = vunpack.c.h.b16 %v46
  %v210 = vunpack.c.l.b16 %v47
  %v211 = vunpack.c.h.b16 %v47
  %v212 = vunpack.c.l.b16 %v48
  %v213 = vunpack.c.h.b16 %v48
  %v214 = vunpack.c.l.b16 %v49
  %v215 = vunpack.c.h.b16 %v49
  %v216 = vunpack.c.l.b16 %v50
  %v217 = vunpack.c.h.b16 %v50
  %v218 = vunpack.c.l.b16 %v51
  %v219 = vunpack.c.h.b16 %v51
  %v220 = vunpack.c.l.b16 %v52
  %v221 = vunpack.c.h.b16 %v52
  %v222 = vunpack.c.l.b16 %v53
  %v223 = vunpack.c.h.b16 %v53
  %v224 = vunpack.c.l.b16 %v54
  %v225 = vunpack.c.h.b16 %v54
  %v226 = vunpack.c.l.b16 %v55
  %v227 = vunpack.c.h.b16 %v55
  %v228 = vunpack.c.l.b16 %v56
  %v229 = vunpack.c.h.b16 %v56
  %v230 = vunpack.c.l.b16 %v57
  %v231 = vunpack.c.h.b16 %v57
  %v232 = vunpack.c.l.b16 %v58
  %v233 = vunpack.c.h.b16 %v58
  %v234 = vunpack.c.l.b16 %v59
  %v235 = vunpack.c.h.b16 %v59
  %v236 = vunpack.c.l.b16 %v60
  %v237 = vunpack.c.h.b16 %v60
  %v238 = vunpack.c.l.b16 %v61
  %v239 = vunpack.c.h.b16 %v61
  %v240 = vunpack.c.l.b16 %v62
  %v241 = vunpack.c.h.b16 %v62
  %v242 = vunpack.c.l.b16 %v63
  %v243 = vunpack.c.h.b16 %v63
  %v244 = vunpack.c.l.b16 %v64
  %v245 = vunpack.c.h.b16 %v64
  %v246 = vunpack.c.l.b16 %v65
  %v247 = vunpack.c.h.b16 %v65
  %v248 = vpack.c.b16 %v186, %v184
  %v249 = vpack.c.b16 %v187, %v185
  %v250 = vpack.c.b16 %v190, %v188
  %v251 = vpack.c.b16 %v191, %v189
  %v252 = vpack.c.b16 %v194, %v192
  %v253 = vpack.c.b16 %v195, %v193
  %v254 = vpack.c.b16 %v198, %v196
  %v255 = vpack.c.b16 %v199, %v197
  %v256 = vpack.c.b16 %v202, %v200
  %v257 = vpack.c.b16 %v203, %v201
  %v258 = vpack.c.b16 %v206, %v204
  %v259 = vpack.c.b16 %v207, %v205
  %v260 = vpack.c.b16 %v210, %v208
  %v261 = vpack.c.b16 %v211, %v209
  %v262 = vpack.c.b16 %v214, %v212
  %v263 = vpack.c.b16 %v215, %v213
  %v264 = vpack.c.b16 %v218, %v216
  %v265 = vpack.c.b16 %v219, %v217
  %v266 = vpack.c.b16 %v222, %v220
  %v267 = vpack.c.b16 %v223, %v221
  %v268 = vpack.c.b16 %v226, %v224
  %v269 = vpack.c.b16 %v227, %v225
  %v270 = vpack.c.b16 %v230, %v228
  %v271 = vpack.c.b16 %v231, %v229
  %v272 = vpack.c.b16 %v234, %v232
  %v273 = vpack.c.b16 %v235, %v233
  %v274 = vpack.c.b16 %v238, %v236
  %v275 = vpack.c.b16 %v239, %v237
  %v276 = vpack.c.b16 %v242, %v240
  %v277 = vpack.c.b16 %v243, %v241
  %v278 = vpack.c.b16 %v246, %v244
  %v279 = vpack.c.b16 %v247, %v245
  %v376 = vunpack.c.l.b16 %v66
  %v377 = vunpack.c.h.b16 %v66
  %v378 = vunpack.c.l.b16 %v67
  %v379 = vunpack.c.h.b16 %v67
  %v380 = vunpack.c.l.b16 %v68
  %v381 = vunpack.c.h.b16 %v68
  %v382 = vunpack.c.l.b16 %v69
  %v383 = vunpack.c.h.b16 %v69
  %v384 = vunpack.c.l.b16 %v70
  %v385 = vunpack.c.h.b16 %v70
  %v386 = vunpack.c.l.b16 %v71
  %v387 = vunpack.c.h.b16 %v71
  %v388 = vunpack.c.l.b16 %v72
  %v389 = vunpack.c.h.b16 %v72
  %v390 = vunpack.c.l.b16 %v73
  %v391 = vunpack.c.h.b16 %v73
  %v392 = vunpack.c.l.b16 %v74
  %v393 = vunpack.c.h.b16 %v74
  %v394 = vunpack.c.l.b16 %v75
  %v395 = vunpack.c.h.b16 %v75
  %v396 = vunpack.c.l.b16 %v76
  %v397 = vunpack.c.h.b16 %v76
  %v398 = vunpack.c.l.b16 %v77
  %v399 = vunpack.c.h.b16 %v77
  %v400 = vunpack.c.l.b16 %v78
  %v401 = vunpack.c.h.b16 %v78
  %v402 = vunpack.c.l.b16 %v79
  %v403 = vunpack.c.h.b16 %v79
  %v404 = vunpack.c.l.b16 %v80
  %v405 = vunpack.c.h.b16 %v80
  %v406 = vunpack.c.l.b16 %v81
  %v407 = vunpack.c.h.b16 %v81
  %v408 = vunpack.c.l.b16 %v82
  %v409 = vunpack.c.h.b16 %v82
  %v410 = vunpack.c.l.b16 %v83
  %v411 = vunpack.c.h.b16 %v83
  %v412 = vunpack.c.l.b16 %v84
  %v413 = vunpack.c.h.b16 %v84
  %v414 = vunpack.c.l.b16 %v85
  %v415 = vunpack.c.h.b16 %v85
  %v416 = vunpack.c.l.b16 %v86
  %v417 = vunpack.c.h.b16 %v86
  %v418 = vunpack.c.l.b16 %v87
  %v419 = vunpack.c.h.b16 %v87
  %v420 = vunpack.c.l.b16 %v88
  %v421 = vunpack.c.h.b16 %v88
  %v422 = vunpack.c.l.b16 %v89
  %v423 = vunpack.c.h.b16 %v89
  %v424 = vunpack.c.l.b16 %v90
  %v425 = vunpack.c.h.b16 %v90
  %v426 = vunpack.c.l.b16 %v91
  %v427 = vunpack.c.h.b16 %v91
  %v428 = vunpack.c.l.b16 %v92
  %v429 = vunpack.c.h.b16 %v92
  %v430 = vunpack.c.l.b16 %v93
  %v431 = vunpack.c.h.b16 %v93
  %v432 = vunpack.c.l.b16 %v94
  %v433 = vunpack.c.h.b16 %v94
  %v434 = vunpack.c.l.b16 %v95
  %v435 = vunpack.c.h.b16 %v95
  %v436 = vunpack.c.l.b16 %v96
  %v437 = vunpack.c.h.b16 %v96
  %v438 = vunpack.c.l.b16 %v97
  %v439 = vunpack.c.h.b16 %v97
  %v440 = vunpack.c.l.b16 %v98
  %v441 = vunpack.c.h.b16 %v98
  %v442 = vunpack.c.l.b16 %v99
  %v443 = vunpack.c.h.b16 %v99
  %v444 = vunpack.c.l.b16 %v100
  %v445 = vunpack.c.h.b16 %v100
  %v446 = vunpack.c.l.b16 %v101
  %v447 = vunpack.c.h.b16 %v101
  %v448 = vunpack.c.l.b16 %v102
  %v449 = vunpack.c.h.b16 %v102
  %v450 = vunpack.c.l.b16 %v103
  %v451 = vunpack.c.h.b16 %v103
  %v452 = vunpack.c.l.b16 %v104
  %v453 = vunpack.c.h.b16 %v104
  %v454 = vunpack.c.l.b16 %v105
  %v455 = vunpack.c.h.b16 %v105
  %v456 = vunpack.c.l.b16 %v106
  %v457 = vunpack.c.h.b16 %v106
  %v458 = vunpack.c.l.b16 %v107
  %v459 = vunpack.c.h.b16 %v107
  %v460 = vunpack.c.l.b16 %v108
  %v461 = vunpack.c.h.b16 %v108
  %v462 = vunpack.c.l.b16 %v109
  %v463 = vunpack.c.h.b16 %v109
  %v464 = vunpack.c.l.b16 %v110
  %v465 = vunpack.c.h.b16 %v110
  %v466 = vunpack.c.l.b16 %v111
  %v467 = vunpack.c.h.b16 %v111
  %v468 = vunpack.c.l.b16 %v112
  %v469 = vunpack.c.h.b16 %v112
  %v470 = vunpack.c.l.b16 %v113
  %v471 = vunpack.c.h.b16 %v113
  %v472 = vunpack.c.l.b16 %v114
  %v473 = vunpack.c.h.b16 %v114
  %v474 = vunpack.c.l.b16 %v115
  %v475 = vunpack.c.h.b16 %v115
  %v476 = vunpack.c.l.b16 %v116
  %v477 = vunpack.c.h.b16 %v116
  %v478 = vunpack.c.l.b16 %v117
  %v479 = vunpack.c.h.b16 %v117
  %v480 = vunpack.c.l.b16 %v118
  %v481 = vunpack.c.h.b16 %v118
  %v482 = vunpack.c.l.b16 %v119
  %v483 = vunpack.c.h.b16 %v119
  %v484 = vunpack.c.l.b16 %v120
  %v485 = vunpack.c.h.b16 %v120
  %v486 = vunpack.c.l.b16 %v121
  %v487 = vunpack.c.h.b16 %v121
  %v488 = vunpack.c.l.b16 %v122
  %v489 = vunpack.c.h.b16 %v122
  %v490 = vunpack.c.l.b16 %v123
  %v491 = vunpack.c.h.b16 %v123
  %v492 = vunpack.c.l.b16 %v124
  %v493 = vunpack.c.h.b16 %v124
  %v494 = vunpack.c.l.b16 %v125
  %v495 = vunpack.c.h.b16 %v125
  %v496 = vunpack.c.l.b16 %v126
  %v497 = vunpack.c.h.b16 %v126
  %v498 = vunpack.c.l.b16 %v127
  %v499 = vunpack.c.h.b16 %v127
  %v500 = vunpack.c.l.b16 %v128
  %v501 = vunpack.c.h.b16 %v128
  %v502 = vunpack.c.l.b16 %v129
  %v503 = vunpack.c.h.b16 %v129
  %v504 = vpack.c.b16 %v380, %v376
  %v505 = vpack.c.b16 %v381, %v377
  %v506 = vpack.c.b16 %v382, %v378
  %v507 = vpack.c.b16 %v383, %v379
  %v508 = vpack.c.b16 %v388, %v384
  %v509 = vpack.c.b16 %v389, %v385
  %v510 = vpack.c.b16 %v390, %v386
  %v511 = vpack.c.b16 %v391, %v387
  %v512 = vpack.c.b16 %v396, %v392
  %v513 = vpack.c.b16 %v397, %v393
  %v514 = vpack.c.b16 %v398, %v394
  %v515 = vpack.c.b16 %v399, %v395
  %v516 = vpack.c.b16 %v404, %v400
  %v517 = vpack.c.b16 %v405, %v401
  %v518 = vpack.c.b16 %v406, %v402
  %v519 = vpack.c.b16 %v407, %v403
  %v520 = vpack.c.b16 %v412, %v408
  %v521 = vpack.c.b16 %v413, %v409
  %v522 = vpack.c.b16 %v414, %v410
  %v523 = vpack.c.b16 %v415, %v411
  %v524 = vpack.c.b16 %v420, %v416
  %v525 = vpack.c.b16 %v421, %v417
  %v526 = vpack.c.b16 %v422, %v418
  %v527 = vpack.c.b16 %v423, %v419
  %v528 = vpack.c.b16 %v428, %v424
  %v529 = vpack.c.b16 %v429, %v425
  %v530 = vpack.c.b16 %v430, %v426
  %v531 = vpack.c.b16 %v431, %v427
  %v532 = vpack.c.b16 %v436, %v432
  %v533 = vpack.c.b16 %v437, %v433
  %v534 = vpack.c.b16 %v438, %v434
  %v535 = vpack.c.b16 %v439, %v435
  %v536 = vpack.c.b16 %v444, %v440
  %v537 = vpack.c.b16 %v445, %v441
  %v538 = vpack.c.b16 %v446, %v442
  %v539 = vpack.c.b16 %v447, %v443
  %v540 = vpack.c.b16 %v452, %v448
  %v541 = vpack.c.b16 %v453, %v449
  %v542 = vpack.c.b16 %v454, %v450
  %v543 = vpack.c.b16 %v455, %v451
  %v544 = vpack.c.b16 %v460, %v456
  %v545 = vpack.c.b16 %v461, %v457
  %v546 = vpack.c.b16 %v462, %v458
  %v547 = vpack.c.b16 %v463, %v459
  %v548 = vpack.c.b16 %v468, %v464
  %v549 = vpack.c.b16 %v469, %v465
  %v550 = vpack.c.b16 %v470, %v466
  %v551 = vpack.c.b16 %v471, %v467
  %v552 = vpack.c.b16 %v476, %v472
  %v553 = vpack.c.b16 %v477, %v473
  %v554 = vpack.c.b16 %v478, %v474
  %v555 = vpack.c.b16 %v479, %v475
  %v556 = vpack.c.b16 %v484, %v480
  %v557 = vpack.c.b16 %v485, %v481
  %v558 = vpack.c.b16 %v486, %v482
  %v559 = vpack.c.b16 %v487, %v483
  %v560 = vpack.c.b16 %v492, %v488
  %v561 = vpack.c.b16 %v493, %v489
  %v562 = vpack.c.b16 %v494, %v490
  %v563 = vpack.c.b16 %v495, %v491
  %v564 = vpack.c.b16 %v500, %v496
  %v565 = vpack.c.b16 %v501, %v497
  %v566 = vpack.c.b16 %v502, %v498
  %v567 = vpack.c.b16 %v503, %v499
  %632 = vmatprep.subr.bf16.mxu0 %v533
  %633 = vmatpush1.bf16.msra.mxu0 %v532
  %634 = vmatprep.subr.bf16.mxu0 %v529
  %635 = vmatpush1.bf16.msra.mxu0 %v528
  %636 = vmatprep.subr.bf16.mxu0 %v525
  %637 = vmatpush1.bf16.msra.mxu0 %v524
  %638 = vmatprep.subr.bf16.mxu0 %v521
  %639 = vmatpush1.bf16.msra.mxu0 %v520
  %640 = vmatprep.subr.bf16.mxu0 %v517
  %641 = vmatpush1.bf16.msra.mxu0 %v516
  %642 = vmatprep.subr.bf16.mxu0 %v513
  %643 = vmatpush1.bf16.msra.mxu0 %v512
  %644 = vmatprep.subr.bf16.mxu0 %v509
  %645 = vmatpush1.bf16.msra.mxu0 %v508
  %646 = vmatprep.subr.bf16.mxu0 %v505
  %647 = vmatpush1.bf16.msra.mxu0 %v504
  %648 = vmatprep.subr.bf16.mxu0 %v565
  %649 = vmatpush2.bf16.msra.mxu0 %v564
  %650 = vmatprep.subr.bf16.mxu0 %v561
  %651 = vmatpush2.bf16.msra.mxu0 %v560
  %652 = vmatprep.subr.bf16.mxu0 %v557
  %653 = vmatpush2.bf16.msra.mxu0 %v556
  %654 = vmatprep.subr.bf16.mxu0 %v553
  %655 = vmatpush2.bf16.msra.mxu0 %v552
  %656 = vmatprep.subr.bf16.mxu0 %v549
  %657 = vmatpush2.bf16.msra.mxu0 %v548
  %658 = vmatprep.subr.bf16.mxu0 %v545
  %659 = vmatpush2.bf16.msra.mxu0 %v544
  %660 = vmatprep.subr.bf16.mxu0 %v541
  %661 = vmatpush2.bf16.msra.mxu0 %v540
  %662 = vmatprep.subr.bf16.mxu0 %v537
  %663 = vmatpush2.bf16.msra.mxu0 %v536
  %664 = vmatprep.mubr.bf16.mxu0 %v249
  %665 = vmatmul.mubr.bf16.gmra.mxu0 %v248
  %v666 = vpop.f32.mrf.mxu0
  %v667 = vadd.f32 %v135, %v666
  %v668 = vpop.f32.mrf.mxu0
  %v669 = vadd.f32 %v139, %v668
  %v670 = vpop.f32.mrf.mxu0
  %v671 = vadd.f32 %v135, %v670
  %v672 = vpop.f32.mrf.mxu0
  %v673 = vadd.f32 %v139, %v672
  %674 = vmatprep.mubr.bf16.mxu0 %v251
  %675 = vmatmul.mubr.bf16.gmra.mxu0 %v250
  %v676 = vpop.f32.mrf.mxu0
  %v677 = vadd.f32 %v135, %v676
  %v678 = vpop.f32.mrf.mxu0
  %v679 = vadd.f32 %v139, %v678
  %v680 = vpop.f32.mrf.mxu0
  %v681 = vadd.f32 %v135, %v680
  %v682 = vpop.f32.mrf.mxu0
  %v683 = vadd.f32 %v139, %v682
  %684 = vmatprep.mubr.bf16.mxu0 %v253
  %685 = vmatmul.mubr.bf16.gmra.mxu0 %v252
  %v686 = vpop.f32.mrf.mxu0
  %v687 = vadd.f32 %v135, %v686
  %v688 = vpop.f32.mrf.mxu0
  %v689 = vadd.f32 %v139, %v688
  %v690 = vpop.f32.mrf.mxu0
  %v691 = vadd.f32 %v135, %v690
  %v692 = vpop.f32.mrf.mxu0
  %v693 = vadd.f32 %v139, %v692
  %694 = vmatprep.mubr.bf16.mxu0 %v255
  %695 = vmatmul.mubr.bf16.gmra.mxu0 %v254
  %v696 = vpop.f32.mrf.mxu0
  %v697 = vadd.f32 %v135, %v696
  %v698 = vpop.f32.mrf.mxu0
  %v699 = vadd.f32 %v139, %v698
  %v700 = vpop.f32.mrf.mxu0
  %v701 = vadd.f32 %v135, %v700
  %v702 = vpop.f32.mrf.mxu0
  %v703 = vadd.f32 %v139, %v702
  %704 = vmatprep.mubr.bf16.mxu0 %v257
  %705 = vmatmul.mubr.bf16.gmra.mxu0 %v256
  %v706 = vpop.f32.mrf.mxu0
  %v707 = vadd.f32 %v135, %v706
  %v708 = vpop.f32.mrf.mxu0
  %v709 = vadd.f32 %v139, %v708
  %v710 = vpop.f32.mrf.mxu0
  %v711 = vadd.f32 %v135, %v710
  %v712 = vpop.f32.mrf.mxu0
  %v713 = vadd.f32 %v139, %v712
  %714 = vmatprep.mubr.bf16.mxu0 %v259
  %715 = vmatmul.mubr.bf16.gmra.mxu0 %v258
  %v716 = vpop.f32.mrf.mxu0
  %v717 = vadd.f32 %v135, %v716
  %v718 = vpop.f32.mrf.mxu0
  %v719 = vadd.f32 %v139, %v718
  %v720 = vpop.f32.mrf.mxu0
  %v721 = vadd.f32 %v135, %v720
  %v722 = vpop.f32.mrf.mxu0
  %v723 = vadd.f32 %v139, %v722
  %724 = vmatprep.mubr.bf16.mxu0 %v261
  %725 = vmatmul.mubr.bf16.gmra.mxu0 %v260
  %v726 = vpop.f32.mrf.mxu0
  %v727 = vadd.f32 %v135, %v726
  %v728 = vpop.f32.mrf.mxu0
  %v729 = vadd.f32 %v139, %v728
  %v730 = vpop.f32.mrf.mxu0
  %v731 = vadd.f32 %v135, %v730
  %v732 = vpop.f32.mrf.mxu0
  %v733 = vadd.f32 %v139, %v732
  %734 = vmatprep.mubr.bf16.mxu0 %v263
  %735 = vmatmul.mubr.bf16.gmra.mxu0 %v262
  %v736 = vpop.f32.mrf.mxu0
  %v737 = vadd.f32 %v135, %v736
  %v738 = vpop.f32.mrf.mxu0
  %v739 = vadd.f32 %v139, %v738
  %v740 = vpop.f32.mrf.mxu0
  %v741 = vadd.f32 %v135, %v740
  %v742 = vpop.f32.mrf.mxu0
  %v743 = vadd.f32 %v139, %v742
  %744 = vmatprep.mubr.bf16.mxu0 %v265
  %745 = vmatmul.mubr.bf16.gmra.mxu0 %v264
  %v746 = vpop.f32.mrf.mxu0
  %v747 = vadd.f32 %v135, %v746
  %v748 = vpop.f32.mrf.mxu0
  %v749 = vadd.f32 %v139, %v748
  %v750 = vpop.f32.mrf.mxu0
  %v751 = vadd.f32 %v135, %v750
  %v752 = vpop.f32.mrf.mxu0
  %v753 = vadd.f32 %v139, %v752
  %754 = vmatprep.mubr.bf16.mxu0 %v267
  %755 = vmatmul.mubr.bf16.gmra.mxu0 %v266
  %v756 = vpop.f32.mrf.mxu0
  %v757 = vadd.f32 %v135, %v756
  %v758 = vpop.f32.mrf.mxu0
  %v759 = vadd.f32 %v139, %v758
  %v760 = vpop.f32.mrf.mxu0
  %v761 = vadd.f32 %v135, %v760
  %v762 = vpop.f32.mrf.mxu0
  %v763 = vadd.f32 %v139, %v762
  %764 = vmatprep.mubr.bf16.mxu0 %v269
  %765 = vmatmul.mubr.bf16.gmra.mxu0 %v268
  %v766 = vpop.f32.mrf.mxu0
  %v767 = vadd.f32 %v135, %v766
  %v768 = vpop.f32.mrf.mxu0
  %v769 = vadd.f32 %v139, %v768
  %v770 = vpop.f32.mrf.mxu0
  %v771 = vadd.f32 %v135, %v770
  %v772 = vpop.f32.mrf.mxu0
  %v773 = vadd.f32 %v139, %v772
  %774 = vmatprep.mubr.bf16.mxu0 %v271
  %775 = vmatmul.mubr.bf16.gmra.mxu0 %v270
  %v776 = vpop.f32.mrf.mxu0
  %v777 = vadd.f32 %v135, %v776
  %v778 = vpop.f32.mrf.mxu0
  %v779 = vadd.f32 %v139, %v778
  %v780 = vpop.f32.mrf.mxu0
  %v781 = vadd.f32 %v135, %v780
  %v782 = vpop.f32.mrf.mxu0
  %v783 = vadd.f32 %v139, %v782
  %784 = vmatprep.mubr.bf16.mxu0 %v273
  %785 = vmatmul.mubr.bf16.gmra.mxu0 %v272
  %v786 = vpop.f32.mrf.mxu0
  %v787 = vadd.f32 %v135, %v786
  %v788 = vpop.f32.mrf.mxu0
  %v789 = vadd.f32 %v139, %v788
  %v790 = vpop.f32.mrf.mxu0
  %v791 = vadd.f32 %v135, %v790
  %v792 = vpop.f32.mrf.mxu0
  %v793 = vadd.f32 %v139, %v792
  %794 = vmatprep.mubr.bf16.mxu0 %v275
  %795 = vmatmul.mubr.bf16.gmra.mxu0 %v274
  %v796 = vpop.f32.mrf.mxu0
  %v797 = vadd.f32 %v135, %v796
  %v798 = vpop.f32.mrf.mxu0
  %v799 = vadd.f32 %v139, %v798
  %v800 = vpop.f32.mrf.mxu0
  %v801 = vadd.f32 %v135, %v800
  %v802 = vpop.f32.mrf.mxu0
  %v803 = vadd.f32 %v139, %v802
  %804 = vmatprep.mubr.bf16.mxu0 %v277
  %805 = vmatmul.mubr.bf16.gmra.mxu0 %v276
  %v806 = vpop.f32.mrf.mxu0
  %v807 = vadd.f32 %v135, %v806
  %v808 = vpop.f32.mrf.mxu0
  %v809 = vadd.f32 %v139, %v808
  %v810 = vpop.f32.mrf.mxu0
  %v811 = vadd.f32 %v135, %v810
  %v812 = vpop.f32.mrf.mxu0
  %v813 = vadd.f32 %v139, %v812
  %814 = vmatprep.mubr.bf16.mxu0 %v279
  %815 = vmatmul.mubr.bf16.gmra.mxu0 %v278
  %v816 = vpop.f32.mrf.mxu0
  %v817 = vadd.f32 %v135, %v816
  %v818 = vpop.f32.mrf.mxu0
  %v819 = vadd.f32 %v139, %v818
  %v820 = vpop.f32.mrf.mxu0
  %v821 = vadd.f32 %v135, %v820
  %v822 = vpop.f32.mrf.mxu0
  %v823 = vadd.f32 %v139, %v822
  %824 = vdwg.mxu0
  %825 = vmatprep.subr.bf16.mxu0 %v535
  %826 = vmatpush1.bf16.msra.mxu0 %v534
  %827 = vmatprep.subr.bf16.mxu0 %v531
  %828 = vmatpush1.bf16.msra.mxu0 %v530
  %829 = vmatprep.subr.bf16.mxu0 %v527
  %830 = vmatpush1.bf16.msra.mxu0 %v526
  %831 = vmatprep.subr.bf16.mxu0 %v523
  %832 = vmatpush1.bf16.msra.mxu0 %v522
  %833 = vmatprep.subr.bf16.mxu0 %v519
  %834 = vmatpush1.bf16.msra.mxu0 %v518
  %835 = vmatprep.subr.bf16.mxu0 %v515
  %836 = vmatpush1.bf16.msra.mxu0 %v514
  %837 = vmatprep.subr.bf16.mxu0 %v511
  %838 = vmatpush1.bf16.msra.mxu0 %v510
  %839 = vmatprep.subr.bf16.mxu0 %v507
  %840 = vmatpush1.bf16.msra.mxu0 %v506
  %841 = vmatprep.subr.bf16.mxu0 %v567
  %842 = vmatpush2.bf16.msra.mxu0 %v566
  %843 = vmatprep.subr.bf16.mxu0 %v563
  %844 = vmatpush2.bf16.msra.mxu0 %v562
  %845 = vmatprep.subr.bf16.mxu0 %v559
  %846 = vmatpush2.bf16.msra.mxu0 %v558
  %847 = vmatprep.subr.bf16.mxu0 %v555
  %848 = vmatpush2.bf16.msra.mxu0 %v554
  %849 = vmatprep.subr.bf16.mxu0 %v551
  %850 = vmatpush2.bf16.msra.mxu0 %v550
  %851 = vmatprep.subr.bf16.mxu0 %v547
  %852 = vmatpush2.bf16.msra.mxu0 %v546
  %853 = vmatprep.subr.bf16.mxu0 %v543
  %854 = vmatpush2.bf16.msra.mxu0 %v542
  %855 = vmatprep.subr.bf16.mxu0 %v539
  %856 = vmatpush2.bf16.msra.mxu0 %v538
  %857 = vmatprep.mubr.bf16.mxu0 %v249
  %858 = vmatmul.mubr.bf16.gmra.mxu0 %v248
  %v859 = vpop.f32.mrf.mxu0
  %v860 = vadd.f32 %v143, %v859
  %v861 = vpop.f32.mrf.mxu0
  %v862 = vadd.f32 %v147, %v861
  %v863 = vpop.f32.mrf.mxu0
  %v864 = vadd.f32 %v143, %v863
  %v865 = vpop.f32.mrf.mxu0
  %v866 = vadd.f32 %v147, %v865
  %867 = vmatprep.mubr.bf16.mxu0 %v251
  %868 = vmatmul.mubr.bf16.gmra.mxu0 %v250
  %v869 = vpop.f32.mrf.mxu0
  %v870 = vadd.f32 %v143, %v869
  %v871 = vpop.f32.mrf.mxu0
  %v872 = vadd.f32 %v147, %v871
  %v873 = vpop.f32.mrf.mxu0
  %v874 = vadd.f32 %v143, %v873
  %v875 = vpop.f32.mrf.mxu0
  %v876 = vadd.f32 %v147, %v875
  %877 = vmatprep.mubr.bf16.mxu0 %v253
  %878 = vmatmul.mubr.bf16.gmra.mxu0 %v252
  %v879 = vpop.f32.mrf.mxu0
  %v880 = vadd.f32 %v143, %v879
  %v881 = vpop.f32.mrf.mxu0
  %v882 = vadd.f32 %v147, %v881
  %v883 = vpop.f32.mrf.mxu0
  %v884 = vadd.f32 %v143, %v883
  %v885 = vpop.f32.mrf.mxu0
  %v886 = vadd.f32 %v147, %v885
  %887 = vmatprep.mubr.bf16.mxu0 %v255
  %888 = vmatmul.mubr.bf16.gmra.mxu0 %v254
  %v889 = vpop.f32.mrf.mxu0
  %v890 = vadd.f32 %v143, %v889
  %v891 = vpop.f32.mrf.mxu0
  %v892 = vadd.f32 %v147, %v891
  %v893 = vpop.f32.mrf.mxu0
  %v894 = vadd.f32 %v143, %v893
  %v895 = vpop.f32.mrf.mxu0
  %v896 = vadd.f32 %v147, %v895
  %897 = vmatprep.mubr.bf16.mxu0 %v257
  %898 = vmatmul.mubr.bf16.gmra.mxu0 %v256
  %v899 = vpop.f32.mrf.mxu0
  %v900 = vadd.f32 %v143, %v899
  %v901 = vpop.f32.mrf.mxu0
  %v902 = vadd.f32 %v147, %v901
  %v903 = vpop.f32.mrf.mxu0
  %v904 = vadd.f32 %v143, %v903
  %v905 = vpop.f32.mrf.mxu0
  %v906 = vadd.f32 %v147, %v905
  %907 = vmatprep.mubr.bf16.mxu0 %v259
  %908 = vmatmul.mubr.bf16.gmra.mxu0 %v258
  %v909 = vpop.f32.mrf.mxu0
  %v910 = vadd.f32 %v143, %v909
  %v911 = vpop.f32.mrf.mxu0
  %v912 = vadd.f32 %v147, %v911
  %v913 = vpop.f32.mrf.mxu0
  %v914 = vadd.f32 %v143, %v913
  %v915 = vpop.f32.mrf.mxu0
  %v916 = vadd.f32 %v147, %v915
  %917 = vmatprep.mubr.bf16.mxu0 %v261
  %918 = vmatmul.mubr.bf16.gmra.mxu0 %v260
  %v919 = vpop.f32.mrf.mxu0
  %v920 = vadd.f32 %v143, %v919
  %v921 = vpop.f32.mrf.mxu0
  %v922 = vadd.f32 %v147, %v921
  %v923 = vpop.f32.mrf.mxu0
  %v924 = vadd.f32 %v143, %v923
  %v925 = vpop.f32.mrf.mxu0
  %v926 = vadd.f32 %v147, %v925
  %927 = vmatprep.mubr.bf16.mxu0 %v263
  %928 = vmatmul.mubr.bf16.gmra.mxu0 %v262
  %v929 = vpop.f32.mrf.mxu0
  %v930 = vadd.f32 %v143, %v929
  %v931 = vpop.f32.mrf.mxu0
  %v932 = vadd.f32 %v147, %v931
  %v933 = vpop.f32.mrf.mxu0
  %v934 = vadd.f32 %v143, %v933
  %v935 = vpop.f32.mrf.mxu0
  %v936 = vadd.f32 %v147, %v935
  %937 = vmatprep.mubr.bf16.mxu0 %v265
  %938 = vmatmul.mubr.bf16.gmra.mxu0 %v264
  %v939 = vpop.f32.mrf.mxu0
  %v940 = vadd.f32 %v143, %v939
  %v941 = vpop.f32.mrf.mxu0
  %v942 = vadd.f32 %v147, %v941
  %v943 = vpop.f32.mrf.mxu0
  %v944 = vadd.f32 %v143, %v943
  %v945 = vpop.f32.mrf.mxu0
  %v946 = vadd.f32 %v147, %v945
  %947 = vmatprep.mubr.bf16.mxu0 %v267
  %948 = vmatmul.mubr.bf16.gmra.mxu0 %v266
  %v949 = vpop.f32.mrf.mxu0
  %v950 = vadd.f32 %v143, %v949
  %v951 = vpop.f32.mrf.mxu0
  %v952 = vadd.f32 %v147, %v951
  %v953 = vpop.f32.mrf.mxu0
  %v954 = vadd.f32 %v143, %v953
  %v955 = vpop.f32.mrf.mxu0
  %v956 = vadd.f32 %v147, %v955
  %957 = vmatprep.mubr.bf16.mxu0 %v269
  %958 = vmatmul.mubr.bf16.gmra.mxu0 %v268
  %v959 = vpop.f32.mrf.mxu0
  %v960 = vadd.f32 %v143, %v959
  %v961 = vpop.f32.mrf.mxu0
  %v962 = vadd.f32 %v147, %v961
  %v963 = vpop.f32.mrf.mxu0
  %v964 = vadd.f32 %v143, %v963
  %v965 = vpop.f32.mrf.mxu0
  %v966 = vadd.f32 %v147, %v965
  %967 = vmatprep.mubr.bf16.mxu0 %v271
  %968 = vmatmul.mubr.bf16.gmra.mxu0 %v270
  %v969 = vpop.f32.mrf.mxu0
  %v970 = vadd.f32 %v143, %v969
  %v971 = vpop.f32.mrf.mxu0
  %v972 = vadd.f32 %v147, %v971
  %v973 = vpop.f32.mrf.mxu0
  %v974 = vadd.f32 %v143, %v973
  %v975 = vpop.f32.mrf.mxu0
  %v976 = vadd.f32 %v147, %v975
  %977 = vmatprep.mubr.bf16.mxu0 %v273
  %978 = vmatmul.mubr.bf16.gmra.mxu0 %v272
  %v979 = vpop.f32.mrf.mxu0
  %v980 = vadd.f32 %v143, %v979
  %v981 = vpop.f32.mrf.mxu0
  %v982 = vadd.f32 %v147, %v981
  %v983 = vpop.f32.mrf.mxu0
  %v984 = vadd.f32 %v143, %v983
  %v985 = vpop.f32.mrf.mxu0
  %v986 = vadd.f32 %v147, %v985
  %987 = vmatprep.mubr.bf16.mxu0 %v275
  %988 = vmatmul.mubr.bf16.gmra.mxu0 %v274
  %v989 = vpop.f32.mrf.mxu0
  %v990 = vadd.f32 %v143, %v989
  %v991 = vpop.f32.mrf.mxu0
  %v992 = vadd.f32 %v147, %v991
  %v993 = vpop.f32.mrf.mxu0
  %v994 = vadd.f32 %v143, %v993
  %v995 = vpop.f32.mrf.mxu0
  %v996 = vadd.f32 %v147, %v995
  %997 = vmatprep.mubr.bf16.mxu0 %v277
  %998 = vmatmul.mubr.bf16.gmra.mxu0 %v276
  %v999 = vpop.f32.mrf.mxu0
  %v1000 = vadd.f32 %v143, %v999
  %v1001 = vpop.f32.mrf.mxu0
  %v1002 = vadd.f32 %v147, %v1001
  %v1003 = vpop.f32.mrf.mxu0
  %v1004 = vadd.f32 %v143, %v1003
  %v1005 = vpop.f32.mrf.mxu0
  %v1006 = vadd.f32 %v147, %v1005
  %1007 = vmatprep.mubr.bf16.mxu0 %v279
  %1008 = vmatmul.mubr.bf16.gmra.mxu0 %v278
  %v1009 = vpop.f32.mrf.mxu0
  %v1010 = vadd.f32 %v143, %v1009
  %v1011 = vpop.f32.mrf.mxu0
  %v1012 = vadd.f32 %v147, %v1011
  %v1013 = vpop.f32.mrf.mxu0
  %v1014 = vadd.f32 %v143, %v1013
  %v1015 = vpop.f32.mrf.mxu0
  %v1016 = vadd.f32 %v147, %v1015
  %1017 = vdwg.mxu0
  %v1018 = vmax.f32 %v667, 0.0
  %v1019 = vmax.f32 %v669, 0.0
  %v1020 = vmax.f32 %v860, 0.0
  %v1021 = vmax.f32 %v862, 0.0
  %v1022 = vmax.f32 %v671, 0.0
  %v1023 = vmax.f32 %v673, 0.0
  %v1024 = vmax.f32 %v864, 0.0
  %v1025 = vmax.f32 %v866, 0.0
  %v1026 = vmax.f32 %v677, 0.0
  %v1027 = vmax.f32 %v679, 0.0
  %v1028 = vmax.f32 %v870, 0.0
  %v1029 = vmax.f32 %v872, 0.0
  %v1030 = vmax.f32 %v681, 0.0
  %v1031 = vmax.f32 %v683, 0.0
  %v1032 = vmax.f32 %v874, 0.0
  %v1033 = vmax.f32 %v876, 0.0
  %v1034 = vmax.f32 %v687, 0.0
  %v1035 = vmax.f32 %v689, 0.0
  %v1036 = vmax.f32 %v880, 0.0
  %v1037 = vmax.f32 %v882, 0.0
  %v1038 = vmax.f32 %v691, 0.0
  %v1039 = vmax.f32 %v693, 0.0
  %v1040 = vmax.f32 %v884, 0.0
  %v1041 = vmax.f32 %v886, 0.0
  %v1042 = vmax.f32 %v697, 0.0
  %v1043 = vmax.f32 %v699, 0.0
  %v1044 = vmax.f32 %v890, 0.0
  %v1045 = vmax.f32 %v892, 0.0
  %v1046 = vmax.f32 %v701, 0.0
  %v1047 = vmax.f32 %v703, 0.0
  %v1048 = vmax.f32 %v894, 0.0
  %v1049 = vmax.f32 %v896, 0.0
  %v1050 = vmax.f32 %v707, 0.0
  %v1051 = vmax.f32 %v709, 0.0
  %v1052 = vmax.f32 %v900, 0.0
  %v1053 = vmax.f32 %v902, 0.0
  %v1054 = vmax.f32 %v711, 0.0
  %v1055 = vmax.f32 %v713, 0.0
  %v1056 = vmax.f32 %v904, 0.0
  %v1057 = vmax.f32 %v906, 0.0
  %v1058 = vmax.f32 %v717, 0.0
  %v1059 = vmax.f32 %v719, 0.0
  %v1060 = vmax.f32 %v910, 0.0
  %v1061 = vmax.f32 %v912, 0.0
  %v1062 = vmax.f32 %v721, 0.0
  %v1063 = vmax.f32 %v723, 0.0
  %v1064 = vmax.f32 %v914, 0.0
  %v1065 = vmax.f32 %v916, 0.0
  %v1066 = vmax.f32 %v727, 0.0
  %v1067 = vmax.f32 %v729, 0.0
  %v1068 = vmax.f32 %v920, 0.0
  %v1069 = vmax.f32 %v922, 0.0
  %v1070 = vmax.f32 %v731, 0.0
  %v1071 = vmax.f32 %v733, 0.0
  %v1072 = vmax.f32 %v924, 0.0
  %v1073 = vmax.f32 %v926, 0.0
  %v1074 = vmax.f32 %v737, 0.0
  %v1075 = vmax.f32 %v739, 0.0
  %v1076 = vmax.f32 %v930, 0.0
  %v1077 = vmax.f32 %v932, 0.0
  %v1078 = vmax.f32 %v741, 0.0
  %v1079 = vmax.f32 %v743, 0.0
  %v1080 = vmax.f32 %v934, 0.0
  %v1081 = vmax.f32 %v936, 0.0
  %v1082 = vmax.f32 %v747, 0.0
  %v1083 = vmax.f32 %v749, 0.0
  %v1084 = vmax.f32 %v940, 0.0
  %v1085 = vmax.f32 %v942, 0.0
  %v1086 = vmax.f32 %v751, 0.0
  %v1087 = vmax.f32 %v753, 0.0
  %v1088 = vmax.f32 %v944, 0.0
  %v1089 = vmax.f32 %v946, 0.0
  %v1090 = vmax.f32 %v757, 0.0
  %v1091 = vmax.f32 %v759, 0.0
  %v1092 = vmax.f32 %v950, 0.0
  %v1093 = vmax.f32 %v952, 0.0
  %v1094 = vmax.f32 %v761, 0.0
  %v1095 = vmax.f32 %v763, 0.0
  %v1096 = vmax.f32 %v954, 0.0
  %v1097 = vmax.f32 %v956, 0.0
  %v1098 = vmax.f32 %v767, 0.0
  %v1099 = vmax.f32 %v769, 0.0
  %v1100 = vmax.f32 %v960, 0.0
  %v1101 = vmax.f32 %v962, 0.0
  %v1102 = vmax.f32 %v771, 0.0
  %v1103 = vmax.f32 %v773, 0.0
  %v1104 = vmax.f32 %v964, 0.0
  %v1105 = vmax.f32 %v966, 0.0
  %v1106 = vmax.f32 %v777, 0.0
  %v1107 = vmax.f32 %v779, 0.0
  %v1108 = vmax.f32 %v970, 0.0
  %v1109 = vmax.f32 %v972, 0.0
  %v1110 = vmax.f32 %v781, 0.0
  %v1111 = vmax.f32 %v783, 0.0
  %v1112 = vmax.f32 %v974, 0.0
  %v1113 = vmax.f32 %v976, 0.0
  %v1114 = vmax.f32 %v787, 0.0
  %v1115 = vmax.f32 %v789, 0.0
  %v1116 = vmax.f32 %v980, 0.0
  %v1117 = vmax.f32 %v982, 0.0
  %v1118 = vmax.f32 %v791, 0.0
  %v1119 = vmax.f32 %v793, 0.0
  %v1120 = vmax.f32 %v984, 0.0
  %v1121 = vmax.f32 %v986, 0.0
  %v1122 = vmax.f32 %v797, 0.0
  %v1123 = vmax.f32 %v799, 0.0
  %v1124 = vmax.f32 %v990, 0.0
  %v1125 = vmax.f32 %v992, 0.0
  %v1126 = vmax.f32 %v801, 0.0
  %v1127 = vmax.f32 %v803, 0.0
  %v1128 = vmax.f32 %v994, 0.0
  %v1129 = vmax.f32 %v996, 0.0
  %v1130 = vmax.f32 %v807, 0.0
  %v1131 = vmax.f32 %v809, 0.0
  %v1132 = vmax.f32 %v1000, 0.0
  %v1133 = vmax.f32 %v1002, 0.0
  %v1134 = vmax.f32 %v811, 0.0
  %v1135 = vmax.f32 %v813, 0.0
  %v1136 = vmax.f32 %v1004, 0.0
  %v1137 = vmax.f32 %v1006, 0.0
  %v1138 = vmax.f32 %v817, 0.0
  %v1139 = vmax.f32 %v819, 0.0
  %v1140 = vmax.f32 %v1010, 0.0
  %v1141 = vmax.f32 %v1012, 0.0
  %v1142 = vmax.f32 %v821, 0.0
  %v1143 = vmax.f32 %v823, 0.0
  %v1144 = vmax.f32 %v1014, 0.0
  %v1145 = vmax.f32 %v1016, 0.0
  %v1146 = vld [vmem:[%s3] ss:$8 sm:$0xf]
  %v1148 = vlaneseq
  %v1149 = vshrl.u32 %v1148, 7
  %v1150 = vsub.s32 0, %v1149
  %v1151 = vrot.slane %v1146, %v1150
  %v1152 = vlaneseq
  %v1153 = vshrl.u32 %v1152, 7
  %v1154 = vsub.s32 1, %v1153
  %v1155 = vrot.slane %v1146, %v1154
  %v1156 = vlaneseq
  %v1157 = vshrl.u32 %v1156, 7
  %v1158 = vsub.s32 2, %v1157
  %v1159 = vrot.slane %v1146, %v1158
  %v1160 = vlaneseq
  %v1161 = vshrl.u32 %v1160, 7
  %v1162 = vsub.s32 3, %v1161
  %v1163 = vrot.slane %v1146, %v1162
  %v1168 = vmul.f32 %v1018, %v1151
  %v1169 = vmul.f32 %v1019, %v1155
  %v1170 = vmul.f32 %v1020, %v1159
  %v1171 = vmul.f32 %v1021, %v1163
  %v1172 = vmul.f32 %v1022, %v1151
  %v1173 = vmul.f32 %v1023, %v1155
  %v1174 = vmul.f32 %v1024, %v1159
  %v1175 = vmul.f32 %v1025, %v1163
  %v1176 = vmul.f32 %v1026, %v1151
  %v1177 = vmul.f32 %v1027, %v1155
  %v1178 = vmul.f32 %v1028, %v1159
  %v1179 = vmul.f32 %v1029, %v1163
  %v1180 = vmul.f32 %v1030, %v1151
  %v1181 = vmul.f32 %v1031, %v1155
  %v1182 = vmul.f32 %v1032, %v1159
  %v1183 = vmul.f32 %v1033, %v1163
  %v1184 = vmul.f32 %v1034, %v1151
  %v1185 = vmul.f32 %v1035, %v1155
  %v1186 = vmul.f32 %v1036, %v1159
  %v1187 = vmul.f32 %v1037, %v1163
  %v1188 = vmul.f32 %v1038, %v1151
  %v1189 = vmul.f32 %v1039, %v1155
  %v1190 = vmul.f32 %v1040, %v1159
  %v1191 = vmul.f32 %v1041, %v1163
  %v1192 = vmul.f32 %v1042, %v1151
  %v1193 = vmul.f32 %v1043, %v1155
  %v1194 = vmul.f32 %v1044, %v1159
  %v1195 = vmul.f32 %v1045, %v1163
  %v1196 = vmul.f32 %v1046, %v1151
  %v1197 = vmul.f32 %v1047, %v1155
  %v1198 = vmul.f32 %v1048, %v1159
  %v1199 = vmul.f32 %v1049, %v1163
  %v1200 = vmul.f32 %v1050, %v1151
  %v1201 = vmul.f32 %v1051, %v1155
  %v1202 = vmul.f32 %v1052, %v1159
  %v1203 = vmul.f32 %v1053, %v1163
  %v1204 = vmul.f32 %v1054, %v1151
  %v1205 = vmul.f32 %v1055, %v1155
  %v1206 = vmul.f32 %v1056, %v1159
  %v1207 = vmul.f32 %v1057, %v1163
  %v1208 = vmul.f32 %v1058, %v1151
  %v1209 = vmul.f32 %v1059, %v1155
  %v1210 = vmul.f32 %v1060, %v1159
  %v1211 = vmul.f32 %v1061, %v1163
  %v1212 = vmul.f32 %v1062, %v1151
  %v1213 = vmul.f32 %v1063, %v1155
  %v1214 = vmul.f32 %v1064, %v1159
  %v1215 = vmul.f32 %v1065, %v1163
  %v1216 = vmul.f32 %v1066, %v1151
  %v1217 = vmul.f32 %v1067, %v1155
  %v1218 = vmul.f32 %v1068, %v1159
  %v1219 = vmul.f32 %v1069, %v1163
  %v1220 = vmul.f32 %v1070, %v1151
  %v1221 = vmul.f32 %v1071, %v1155
  %v1222 = vmul.f32 %v1072, %v1159
  %v1223 = vmul.f32 %v1073, %v1163
  %v1224 = vmul.f32 %v1074, %v1151
  %v1225 = vmul.f32 %v1075, %v1155
  %v1226 = vmul.f32 %v1076, %v1159
  %v1227 = vmul.f32 %v1077, %v1163
  %v1228 = vmul.f32 %v1078, %v1151
  %v1229 = vmul.f32 %v1079, %v1155
  %v1230 = vmul.f32 %v1080, %v1159
  %v1231 = vmul.f32 %v1081, %v1163
  %v1232 = vmul.f32 %v1082, %v1151
  %v1233 = vmul.f32 %v1083, %v1155
  %v1234 = vmul.f32 %v1084, %v1159
  %v1235 = vmul.f32 %v1085, %v1163
  %v1236 = vmul.f32 %v1086, %v1151
  %v1237 = vmul.f32 %v1087, %v1155
  %v1238 = vmul.f32 %v1088, %v1159
  %v1239 = vmul.f32 %v1089, %v1163
  %v1240 = vmul.f32 %v1090, %v1151
  %v1241 = vmul.f32 %v1091, %v1155
  %v1242 = vmul.f32 %v1092, %v1159
  %v1243 = vmul.f32 %v1093, %v1163
  %v1244 = vmul.f32 %v1094, %v1151
  %v1245 = vmul.f32 %v1095, %v1155
  %v1246 = vmul.f32 %v1096, %v1159
  %v1247 = vmul.f32 %v1097, %v1163
  %v1248 = vmul.f32 %v1098, %v1151
  %v1249 = vmul.f32 %v1099, %v1155
  %v1250 = vmul.f32 %v1100, %v1159
  %v1251 = vmul.f32 %v1101, %v1163
  %v1252 = vmul.f32 %v1102, %v1151
  %v1253 = vmul.f32 %v1103, %v1155
  %v1254 = vmul.f32 %v1104, %v1159
  %v1255 = vmul.f32 %v1105, %v1163
  %v1256 = vmul.f32 %v1106, %v1151
  %v1257 = vmul.f32 %v1107, %v1155
  %v1258 = vmul.f32 %v1108, %v1159
  %v1259 = vmul.f32 %v1109, %v1163
  %v1260 = vmul.f32 %v1110, %v1151
  %v1261 = vmul.f32 %v1111, %v1155
  %v1262 = vmul.f32 %v1112, %v1159
  %v1263 = vmul.f32 %v1113, %v1163
  %v1264 = vmul.f32 %v1114, %v1151
  %v1265 = vmul.f32 %v1115, %v1155
  %v1266 = vmul.f32 %v1116, %v1159
  %v1267 = vmul.f32 %v1117, %v1163
  %v1268 = vmul.f32 %v1118, %v1151
  %v1269 = vmul.f32 %v1119, %v1155
  %v1270 = vmul.f32 %v1120, %v1159
  %v1271 = vmul.f32 %v1121, %v1163
  %v1272 = vmul.f32 %v1122, %v1151
  %v1273 = vmul.f32 %v1123, %v1155
  %v1274 = vmul.f32 %v1124, %v1159
  %v1275 = vmul.f32 %v1125, %v1163
  %v1276 = vmul.f32 %v1126, %v1151
  %v1277 = vmul.f32 %v1127, %v1155
  %v1278 = vmul.f32 %v1128, %v1159
  %v1279 = vmul.f32 %v1129, %v1163
  %v1280 = vmul.f32 %v1130, %v1151
  %v1281 = vmul.f32 %v1131, %v1155
  %v1282 = vmul.f32 %v1132, %v1159
  %v1283 = vmul.f32 %v1133, %v1163
  %v1284 = vmul.f32 %v1134, %v1151
  %v1285 = vmul.f32 %v1135, %v1155
  %v1286 = vmul.f32 %v1136, %v1159
  %v1287 = vmul.f32 %v1137, %v1163
  %v1288 = vmul.f32 %v1138, %v1151
  %v1289 = vmul.f32 %v1139, %v1155
  %v1290 = vmul.f32 %v1140, %v1159
  %v1291 = vmul.f32 %v1141, %v1163
  %v1292 = vmul.f32 %v1142, %v1151
  %v1293 = vmul.f32 %v1143, %v1155
  %v1294 = vmul.f32 %v1144, %v1159
  %v1295 = vmul.f32 %v1145, %v1163
  %v1296 = vadd.f32 %v1168, %v1169
  %v1297 = vadd.f32 %v1296, %v1170
  %v1298 = vadd.f32 %v1297, %v1171
  %1299 = vadd.xlane.f32.xlu0 %v1298
  %v1300 = vpop.xlane.xlu0 %1299
  %v1301 = vadd.f32 %v1172, %v1173
  %v1302 = vadd.f32 %v1301, %v1174
  %v1303 = vadd.f32 %v1302, %v1175
  %1304 = vadd.xlane.f32.xlu0 %v1303
  %v1305 = vpop.xlane.xlu0 %1304
  %v1306 = vadd.f32 %v1176, %v1177
  %v1307 = vadd.f32 %v1306, %v1178
  %v1308 = vadd.f32 %v1307, %v1179
  %1309 = vadd.xlane.f32.xlu0 %v1308
  %v1310 = vpop.xlane.xlu0 %1309
  %v1311 = vadd.f32 %v1180, %v1181
  %v1312 = vadd.f32 %v1311, %v1182
  %v1313 = vadd.f32 %v1312, %v1183
  %1314 = vadd.xlane.f32.xlu0 %v1313
  %v1315 = vpop.xlane.xlu0 %1314
  %v1316 = vadd.f32 %v1184, %v1185
  %v1317 = vadd.f32 %v1316, %v1186
  %v1318 = vadd.f32 %v1317, %v1187
  %1319 = vadd.xlane.f32.xlu0 %v1318
  %v1320 = vpop.xlane.xlu0 %1319
  %v1321 = vadd.f32 %v1188, %v1189
  %v1322 = vadd.f32 %v1321, %v1190
  %v1323 = vadd.f32 %v1322, %v1191
  %1324 = vadd.xlane.f32.xlu0 %v1323
  %v1325 = vpop.xlane.xlu0 %1324
  %v1326 = vadd.f32 %v1192, %v1193
  %v1327 = vadd.f32 %v1326, %v1194
  %v1328 = vadd.f32 %v1327, %v1195
  %1329 = vadd.xlane.f32.xlu0 %v1328
  %v1330 = vpop.xlane.xlu0 %1329
  %v1331 = vadd.f32 %v1196, %v1197
  %v1332 = vadd.f32 %v1331, %v1198
  %v1333 = vadd.f32 %v1332, %v1199
  %1334 = vadd.xlane.f32.xlu0 %v1333
  %v1335 = vpop.xlane.xlu0 %1334
  %v1336 = vadd.f32 %v1200, %v1201
  %v1337 = vadd.f32 %v1336, %v1202
  %v1338 = vadd.f32 %v1337, %v1203
  %1339 = vadd.xlane.f32.xlu0 %v1338
  %v1340 = vpop.xlane.xlu0 %1339
  %v1341 = vadd.f32 %v1204, %v1205
  %v1342 = vadd.f32 %v1341, %v1206
  %v1343 = vadd.f32 %v1342, %v1207
  %1344 = vadd.xlane.f32.xlu0 %v1343
  %v1345 = vpop.xlane.xlu0 %1344
  %v1346 = vadd.f32 %v1208, %v1209
  %v1347 = vadd.f32 %v1346, %v1210
  %v1348 = vadd.f32 %v1347, %v1211
  %1349 = vadd.xlane.f32.xlu0 %v1348
  %v1350 = vpop.xlane.xlu0 %1349
  %v1351 = vadd.f32 %v1212, %v1213
  %v1352 = vadd.f32 %v1351, %v1214
  %v1353 = vadd.f32 %v1352, %v1215
  %1354 = vadd.xlane.f32.xlu0 %v1353
  %v1355 = vpop.xlane.xlu0 %1354
  %v1356 = vadd.f32 %v1216, %v1217
  %v1357 = vadd.f32 %v1356, %v1218
  %v1358 = vadd.f32 %v1357, %v1219
  %1359 = vadd.xlane.f32.xlu0 %v1358
  %v1360 = vpop.xlane.xlu0 %1359
  %v1361 = vadd.f32 %v1220, %v1221
  %v1362 = vadd.f32 %v1361, %v1222
  %v1363 = vadd.f32 %v1362, %v1223
  %1364 = vadd.xlane.f32.xlu0 %v1363
  %v1365 = vpop.xlane.xlu0 %1364
  %v1366 = vadd.f32 %v1224, %v1225
  %v1367 = vadd.f32 %v1366, %v1226
  %v1368 = vadd.f32 %v1367, %v1227
  %1369 = vadd.xlane.f32.xlu0 %v1368
  %v1370 = vpop.xlane.xlu0 %1369
  %v1371 = vadd.f32 %v1228, %v1229
  %v1372 = vadd.f32 %v1371, %v1230
  %v1373 = vadd.f32 %v1372, %v1231
  %1374 = vadd.xlane.f32.xlu0 %v1373
  %v1375 = vpop.xlane.xlu0 %1374
  %v1376 = vadd.f32 %v1232, %v1233
  %v1377 = vadd.f32 %v1376, %v1234
  %v1378 = vadd.f32 %v1377, %v1235
  %1379 = vadd.xlane.f32.xlu0 %v1378
  %v1380 = vpop.xlane.xlu0 %1379
  %v1381 = vadd.f32 %v1236, %v1237
  %v1382 = vadd.f32 %v1381, %v1238
  %v1383 = vadd.f32 %v1382, %v1239
  %1384 = vadd.xlane.f32.xlu0 %v1383
  %v1385 = vpop.xlane.xlu0 %1384
  %v1386 = vadd.f32 %v1240, %v1241
  %v1387 = vadd.f32 %v1386, %v1242
  %v1388 = vadd.f32 %v1387, %v1243
  %1389 = vadd.xlane.f32.xlu0 %v1388
  %v1390 = vpop.xlane.xlu0 %1389
  %v1391 = vadd.f32 %v1244, %v1245
  %v1392 = vadd.f32 %v1391, %v1246
  %v1393 = vadd.f32 %v1392, %v1247
  %1394 = vadd.xlane.f32.xlu0 %v1393
  %v1395 = vpop.xlane.xlu0 %1394
  %v1396 = vadd.f32 %v1248, %v1249
  %v1397 = vadd.f32 %v1396, %v1250
  %v1398 = vadd.f32 %v1397, %v1251
  %1399 = vadd.xlane.f32.xlu0 %v1398
  %v1400 = vpop.xlane.xlu0 %1399
  %v1401 = vadd.f32 %v1252, %v1253
  %v1402 = vadd.f32 %v1401, %v1254
  %v1403 = vadd.f32 %v1402, %v1255
  %1404 = vadd.xlane.f32.xlu0 %v1403
  %v1405 = vpop.xlane.xlu0 %1404
  %v1406 = vadd.f32 %v1256, %v1257
  %v1407 = vadd.f32 %v1406, %v1258
  %v1408 = vadd.f32 %v1407, %v1259
  %1409 = vadd.xlane.f32.xlu0 %v1408
  %v1410 = vpop.xlane.xlu0 %1409
  %v1411 = vadd.f32 %v1260, %v1261
  %v1412 = vadd.f32 %v1411, %v1262
  %v1413 = vadd.f32 %v1412, %v1263
  %1414 = vadd.xlane.f32.xlu0 %v1413
  %v1415 = vpop.xlane.xlu0 %1414
  %v1416 = vadd.f32 %v1264, %v1265
  %v1417 = vadd.f32 %v1416, %v1266
  %v1418 = vadd.f32 %v1417, %v1267
  %1419 = vadd.xlane.f32.xlu0 %v1418
  %v1420 = vpop.xlane.xlu0 %1419
  %v1421 = vadd.f32 %v1268, %v1269
  %v1422 = vadd.f32 %v1421, %v1270
  %v1423 = vadd.f32 %v1422, %v1271
  %1424 = vadd.xlane.f32.xlu0 %v1423
  %v1425 = vpop.xlane.xlu0 %1424
  %v1426 = vadd.f32 %v1272, %v1273
  %v1427 = vadd.f32 %v1426, %v1274
  %v1428 = vadd.f32 %v1427, %v1275
  %1429 = vadd.xlane.f32.xlu0 %v1428
  %v1430 = vpop.xlane.xlu0 %1429
  %v1431 = vadd.f32 %v1276, %v1277
  %v1432 = vadd.f32 %v1431, %v1278
  %v1433 = vadd.f32 %v1432, %v1279
  %1434 = vadd.xlane.f32.xlu0 %v1433
  %v1435 = vpop.xlane.xlu0 %1434
  %v1436 = vadd.f32 %v1280, %v1281
  %v1437 = vadd.f32 %v1436, %v1282
  %v1438 = vadd.f32 %v1437, %v1283
  %1439 = vadd.xlane.f32.xlu0 %v1438
  %v1440 = vpop.xlane.xlu0 %1439
  %v1441 = vadd.f32 %v1284, %v1285
  %v1442 = vadd.f32 %v1441, %v1286
  %v1443 = vadd.f32 %v1442, %v1287
  %1444 = vadd.xlane.f32.xlu0 %v1443
  %v1445 = vpop.xlane.xlu0 %1444
  %v1446 = vadd.f32 %v1288, %v1289
  %v1447 = vadd.f32 %v1446, %v1290
  %v1448 = vadd.f32 %v1447, %v1291
  %1449 = vadd.xlane.f32.xlu0 %v1448
  %v1450 = vpop.xlane.xlu0 %1449
  %v1451 = vadd.f32 %v1292, %v1293
  %v1452 = vadd.f32 %v1451, %v1294
  %v1453 = vadd.f32 %v1452, %v1295
  %1454 = vadd.xlane.f32.xlu0 %v1453
  %v1455 = vpop.xlane.xlu0 %1454
  %v1456 = vld [vmem:[%s4] sm:$0x1]
  %v1457 = vlaneseq
  %v1458 = vshrl.u32 %v1457, 7
  %v1459 = vsub.s32 0, %v1458
  %v1460 = vrot.slane %v1456, %v1459
  %v1461 = vadd.f32 %v1300, %v1460
  %v1462 = vadd.f32 %v1305, %v1460
  %v1463 = vadd.f32 %v1310, %v1460
  %v1464 = vadd.f32 %v1315, %v1460
  %v1465 = vadd.f32 %v1320, %v1460
  %v1466 = vadd.f32 %v1325, %v1460
  %v1467 = vadd.f32 %v1330, %v1460
  %v1468 = vadd.f32 %v1335, %v1460
  %v1469 = vadd.f32 %v1340, %v1460
  %v1470 = vadd.f32 %v1345, %v1460
  %v1471 = vadd.f32 %v1350, %v1460
  %v1472 = vadd.f32 %v1355, %v1460
  %v1473 = vadd.f32 %v1360, %v1460
  %v1474 = vadd.f32 %v1365, %v1460
  %v1475 = vadd.f32 %v1370, %v1460
  %v1476 = vadd.f32 %v1375, %v1460
  %v1477 = vadd.f32 %v1380, %v1460
  %v1478 = vadd.f32 %v1385, %v1460
  %v1479 = vadd.f32 %v1390, %v1460
  %v1480 = vadd.f32 %v1395, %v1460
  %v1481 = vadd.f32 %v1400, %v1460
  %v1482 = vadd.f32 %v1405, %v1460
  %v1483 = vadd.f32 %v1410, %v1460
  %v1484 = vadd.f32 %v1415, %v1460
  %v1485 = vadd.f32 %v1420, %v1460
  %v1486 = vadd.f32 %v1425, %v1460
  %v1487 = vadd.f32 %v1430, %v1460
  %v1488 = vadd.f32 %v1435, %v1460
  %v1489 = vadd.f32 %v1440, %v1460
  %v1490 = vadd.f32 %v1445, %v1460
  %v1491 = vadd.f32 %v1450, %v1460
  %v1492 = vadd.f32 %v1455, %v1460
  %vm1493 = vcmask 7168
  %1494 = vst.msk [vmem:[%s10] sm:$0xff] %vm1493, %v1461
  %1495 = vst.msk [vmem:[%s10 + $0x8] sm:$0xff] %vm1493, %v1462
  %1496 = vst.msk [vmem:[%s10 + $0x10] sm:$0xff] %vm1493, %v1463
  %1497 = vst.msk [vmem:[%s10 + $0x18] sm:$0xff] %vm1493, %v1464
  %1498 = vst.msk [vmem:[%s10 + $0x20] sm:$0xff] %vm1493, %v1465
  %1499 = vst.msk [vmem:[%s10 + $0x28] sm:$0xff] %vm1493, %v1466
  %1500 = vst.msk [vmem:[%s10 + $0x30] sm:$0xff] %vm1493, %v1467
  %1501 = vst.msk [vmem:[%s10 + $0x38] sm:$0xff] %vm1493, %v1468
  %1502 = vst.msk [vmem:[%s10 + $0x40] sm:$0xff] %vm1493, %v1469
  %1503 = vst.msk [vmem:[%s10 + $0x48] sm:$0xff] %vm1493, %v1470
  %1504 = vst.msk [vmem:[%s10 + $0x50] sm:$0xff] %vm1493, %v1471
  %1505 = vst.msk [vmem:[%s10 + $0x58] sm:$0xff] %vm1493, %v1472
  %1506 = vst.msk [vmem:[%s10 + $0x60] sm:$0xff] %vm1493, %v1473
  %1507 = vst.msk [vmem:[%s10 + $0x68] sm:$0xff] %vm1493, %v1474
  %1508 = vst.msk [vmem:[%s10 + $0x70] sm:$0xff] %vm1493, %v1475
  %1509 = vst.msk [vmem:[%s10 + $0x78] sm:$0xff] %vm1493, %v1476
  %1510 = vst.msk [vmem:[%s10 + $0x80] sm:$0xff] %vm1493, %v1477
  %1511 = vst.msk [vmem:[%s10 + $0x88] sm:$0xff] %vm1493, %v1478
  %1512 = vst.msk [vmem:[%s10 + $0x90] sm:$0xff] %vm1493, %v1479
  %1513 = vst.msk [vmem:[%s10 + $0x98] sm:$0xff] %vm1493, %v1480
  %1514 = vst.msk [vmem:[%s10 + $0xa0] sm:$0xff] %vm1493, %v1481
  %1515 = vst.msk [vmem:[%s10 + $0xa8] sm:$0xff] %vm1493, %v1482
  %1516 = vst.msk [vmem:[%s10 + $0xb0] sm:$0xff] %vm1493, %v1483
  %1517 = vst.msk [vmem:[%s10 + $0xb8] sm:$0xff] %vm1493, %v1484
  %1518 = vst.msk [vmem:[%s10 + $0xc0] sm:$0xff] %vm1493, %v1485
  %1519 = vst.msk [vmem:[%s10 + $0xc8] sm:$0xff] %vm1493, %v1486
  %1520 = vst.msk [vmem:[%s10 + $0xd0] sm:$0xff] %vm1493, %v1487
  %1521 = vst.msk [vmem:[%s10 + $0xd8] sm:$0xff] %vm1493, %v1488
  %1522 = vst.msk [vmem:[%s10 + $0xe0] sm:$0xff] %vm1493, %v1489
  %1523 = vst.msk [vmem:[%s10 + $0xe8] sm:$0xff] %vm1493, %v1490
  %1524 = vst.msk [vmem:[%s10 + $0xf0] sm:$0xff] %vm1493, %v1491
  %1525 = vst.msk [vmem:[%s10 + $0xf8] sm:$0xff] %vm1493, %v1492
  %v1526 = vld [vmem:[%s5] ss:$8 sm:$0xf]
  %1528 = vset.pattern.permute.xlu0 0
  %1529 = vperm.xlu0 %1528, %v1461
  %v1530 = vpop.permute.xlu0 %1529
  %1533 = vset.pattern.permute.xlu0 0
  %1534 = vperm.xlu0 %1533, %v1462
  %v1535 = vpop.permute.xlu0 %1534
  %1538 = vset.pattern.permute.xlu0 0
  %1539 = vperm.xlu0 %1538, %v1463
  %v1540 = vpop.permute.xlu0 %1539
  %1543 = vset.pattern.permute.xlu0 0
  %1544 = vperm.xlu0 %1543, %v1464
  %v1545 = vpop.permute.xlu0 %1544
  %1548 = vset.pattern.permute.xlu0 0
  %1549 = vperm.xlu0 %1548, %v1465
  %v1550 = vpop.permute.xlu0 %1549
  %1553 = vset.pattern.permute.xlu0 0
  %1554 = vperm.xlu0 %1553, %v1466
  %v1555 = vpop.permute.xlu0 %1554
  %1558 = vset.pattern.permute.xlu0 0
  %1559 = vperm.xlu0 %1558, %v1467
  %v1560 = vpop.permute.xlu0 %1559
  %1563 = vset.pattern.permute.xlu0 0
  %1564 = vperm.xlu0 %1563, %v1468
  %v1565 = vpop.permute.xlu0 %1564
  %1568 = vset.pattern.permute.xlu0 0
  %1569 = vperm.xlu0 %1568, %v1469
  %v1570 = vpop.permute.xlu0 %1569
  %1573 = vset.pattern.permute.xlu0 0
  %1574 = vperm.xlu0 %1573, %v1470
  %v1575 = vpop.permute.xlu0 %1574
  %1578 = vset.pattern.permute.xlu0 0
  %1579 = vperm.xlu0 %1578, %v1471
  %v1580 = vpop.permute.xlu0 %1579
  %1583 = vset.pattern.permute.xlu0 0
  %1584 = vperm.xlu0 %1583, %v1472
  %v1585 = vpop.permute.xlu0 %1584
  %1588 = vset.pattern.permute.xlu0 0
  %1589 = vperm.xlu0 %1588, %v1473
  %v1590 = vpop.permute.xlu0 %1589
  %1593 = vset.pattern.permute.xlu0 0
  %1594 = vperm.xlu0 %1593, %v1474
  %v1595 = vpop.permute.xlu0 %1594
  %1598 = vset.pattern.permute.xlu0 0
  %1599 = vperm.xlu0 %1598, %v1475
  %v1600 = vpop.permute.xlu0 %1599
  %1603 = vset.pattern.permute.xlu0 0
  %1604 = vperm.xlu0 %1603, %v1476
  %v1605 = vpop.permute.xlu0 %1604
  %1608 = vset.pattern.permute.xlu0 0
  %1609 = vperm.xlu0 %1608, %v1477
  %v1610 = vpop.permute.xlu0 %1609
  %1613 = vset.pattern.permute.xlu0 0
  %1614 = vperm.xlu0 %1613, %v1478
  %v1615 = vpop.permute.xlu0 %1614
  %1618 = vset.pattern.permute.xlu0 0
  %1619 = vperm.xlu0 %1618, %v1479
  %v1620 = vpop.permute.xlu0 %1619
  %1623 = vset.pattern.permute.xlu0 0
  %1624 = vperm.xlu0 %1623, %v1480
  %v1625 = vpop.permute.xlu0 %1624
  %1628 = vset.pattern.permute.xlu0 0
  %1629 = vperm.xlu0 %1628, %v1481
  %v1630 = vpop.permute.xlu0 %1629
  %1633 = vset.pattern.permute.xlu0 0
  %1634 = vperm.xlu0 %1633, %v1482
  %v1635 = vpop.permute.xlu0 %1634
  %1638 = vset.pattern.permute.xlu0 0
  %1639 = vperm.xlu0 %1638, %v1483
  %v1640 = vpop.permute.xlu0 %1639
  %1643 = vset.pattern.permute.xlu0 0
  %1644 = vperm.xlu0 %1643, %v1484
  %v1645 = vpop.permute.xlu0 %1644
  %1648 = vset.pattern.permute.xlu0 0
  %1649 = vperm.xlu0 %1648, %v1485
  %v1650 = vpop.permute.xlu0 %1649
  %1653 = vset.pattern.permute.xlu0 0
  %1654 = vperm.xlu0 %1653, %v1486
  %v1655 = vpop.permute.xlu0 %1654
  %1658 = vset.pattern.permute.xlu0 0
  %1659 = vperm.xlu0 %1658, %v1487
  %v1660 = vpop.permute.xlu0 %1659
  %1663 = vset.pattern.permute.xlu0 0
  %1664 = vperm.xlu0 %1663, %v1488
  %v1665 = vpop.permute.xlu0 %1664
  %1668 = vset.pattern.permute.xlu0 0
  %1669 = vperm.xlu0 %1668, %v1489
  %v1670 = vpop.permute.xlu0 %1669
  %1673 = vset.pattern.permute.xlu0 0
  %1674 = vperm.xlu0 %1673, %v1490
  %v1675 = vpop.permute.xlu0 %1674
  %1678 = vset.pattern.permute.xlu0 0
  %1679 = vperm.xlu0 %1678, %v1491
  %v1680 = vpop.permute.xlu0 %1679
  %1683 = vset.pattern.permute.xlu0 0
  %1684 = vperm.xlu0 %1683, %v1492
  %v1685 = vpop.permute.xlu0 %1684
  %v1688 = vlaneseq
  %v1689 = vshrl.u32 %v1688, 7
  %v1690 = vsub.s32 0, %v1689
  %v1691 = vrot.slane %v1526, %v1690
  %v1692 = vlaneseq
  %v1693 = vshrl.u32 %v1692, 7
  %v1694 = vsub.s32 1, %v1693
  %v1695 = vrot.slane %v1526, %v1694
  %v1696 = vlaneseq
  %v1697 = vshrl.u32 %v1696, 7
  %v1698 = vsub.s32 2, %v1697
  %v1699 = vrot.slane %v1526, %v1698
  %v1700 = vlaneseq
  %v1701 = vshrl.u32 %v1700, 7
  %v1702 = vsub.s32 3, %v1701
  %v1703 = vrot.slane %v1526, %v1702
  %v1708 = vmul.f32 %v1530, %v1691
  %v1709 = vmul.f32 %v1530, %v1695
  %v1710 = vmul.f32 %v1530, %v1699
  %v1711 = vmul.f32 %v1530, %v1703
  %v1712 = vmul.f32 %v1535, %v1691
  %v1713 = vmul.f32 %v1535, %v1695
  %v1714 = vmul.f32 %v1535, %v1699
  %v1715 = vmul.f32 %v1535, %v1703
  %v1716 = vmul.f32 %v1540, %v1691
  %v1717 = vmul.f32 %v1540, %v1695
  %v1718 = vmul.f32 %v1540, %v1699
  %v1719 = vmul.f32 %v1540, %v1703
  %v1720 = vmul.f32 %v1545, %v1691
  %v1721 = vmul.f32 %v1545, %v1695
  %v1722 = vmul.f32 %v1545, %v1699
  %v1723 = vmul.f32 %v1545, %v1703
  %v1724 = vmul.f32 %v1550, %v1691
  %v1725 = vmul.f32 %v1550, %v1695
  %v1726 = vmul.f32 %v1550, %v1699
  %v1727 = vmul.f32 %v1550, %v1703
  %v1728 = vmul.f32 %v1555, %v1691
  %v1729 = vmul.f32 %v1555, %v1695
  %v1730 = vmul.f32 %v1555, %v1699
  %v1731 = vmul.f32 %v1555, %v1703
  %v1732 = vmul.f32 %v1560, %v1691
  %v1733 = vmul.f32 %v1560, %v1695
  %v1734 = vmul.f32 %v1560, %v1699
  %v1735 = vmul.f32 %v1560, %v1703
  %v1736 = vmul.f32 %v1565, %v1691
  %v1737 = vmul.f32 %v1565, %v1695
  %v1738 = vmul.f32 %v1565, %v1699
  %v1739 = vmul.f32 %v1565, %v1703
  %v1740 = vmul.f32 %v1570, %v1691
  %v1741 = vmul.f32 %v1570, %v1695
  %v1742 = vmul.f32 %v1570, %v1699
  %v1743 = vmul.f32 %v1570, %v1703
  %v1744 = vmul.f32 %v1575, %v1691
  %v1745 = vmul.f32 %v1575, %v1695
  %v1746 = vmul.f32 %v1575, %v1699
  %v1747 = vmul.f32 %v1575, %v1703
  %v1748 = vmul.f32 %v1580, %v1691
  %v1749 = vmul.f32 %v1580, %v1695
  %v1750 = vmul.f32 %v1580, %v1699
  %v1751 = vmul.f32 %v1580, %v1703
  %v1752 = vmul.f32 %v1585, %v1691
  %v1753 = vmul.f32 %v1585, %v1695
  %v1754 = vmul.f32 %v1585, %v1699
  %v1755 = vmul.f32 %v1585, %v1703
  %v1756 = vmul.f32 %v1590, %v1691
  %v1757 = vmul.f32 %v1590, %v1695
  %v1758 = vmul.f32 %v1590, %v1699
  %v1759 = vmul.f32 %v1590, %v1703
  %v1760 = vmul.f32 %v1595, %v1691
  %v1761 = vmul.f32 %v1595, %v1695
  %v1762 = vmul.f32 %v1595, %v1699
  %v1763 = vmul.f32 %v1595, %v1703
  %v1764 = vmul.f32 %v1600, %v1691
  %v1765 = vmul.f32 %v1600, %v1695
  %v1766 = vmul.f32 %v1600, %v1699
  %v1767 = vmul.f32 %v1600, %v1703
  %v1768 = vmul.f32 %v1605, %v1691
  %v1769 = vmul.f32 %v1605, %v1695
  %v1770 = vmul.f32 %v1605, %v1699
  %v1771 = vmul.f32 %v1605, %v1703
  %v1772 = vmul.f32 %v1610, %v1691
  %v1773 = vmul.f32 %v1610, %v1695
  %v1774 = vmul.f32 %v1610, %v1699
  %v1775 = vmul.f32 %v1610, %v1703
  %v1776 = vmul.f32 %v1615, %v1691
  %v1777 = vmul.f32 %v1615, %v1695
  %v1778 = vmul.f32 %v1615, %v1699
  %v1779 = vmul.f32 %v1615, %v1703
  %v1780 = vmul.f32 %v1620, %v1691
  %v1781 = vmul.f32 %v1620, %v1695
  %v1782 = vmul.f32 %v1620, %v1699
  %v1783 = vmul.f32 %v1620, %v1703
  %v1784 = vmul.f32 %v1625, %v1691
  %v1785 = vmul.f32 %v1625, %v1695
  %v1786 = vmul.f32 %v1625, %v1699
  %v1787 = vmul.f32 %v1625, %v1703
  %v1788 = vmul.f32 %v1630, %v1691
  %v1789 = vmul.f32 %v1630, %v1695
  %v1790 = vmul.f32 %v1630, %v1699
  %v1791 = vmul.f32 %v1630, %v1703
  %v1792 = vmul.f32 %v1635, %v1691
  %v1793 = vmul.f32 %v1635, %v1695
  %v1794 = vmul.f32 %v1635, %v1699
  %v1795 = vmul.f32 %v1635, %v1703
  %v1796 = vmul.f32 %v1640, %v1691
  %v1797 = vmul.f32 %v1640, %v1695
  %v1798 = vmul.f32 %v1640, %v1699
  %v1799 = vmul.f32 %v1640, %v1703
  %v1800 = vmul.f32 %v1645, %v1691
  %v1801 = vmul.f32 %v1645, %v1695
  %v1802 = vmul.f32 %v1645, %v1699
  %v1803 = vmul.f32 %v1645, %v1703
  %v1804 = vmul.f32 %v1650, %v1691
  %v1805 = vmul.f32 %v1650, %v1695
  %v1806 = vmul.f32 %v1650, %v1699
  %v1807 = vmul.f32 %v1650, %v1703
  %v1808 = vmul.f32 %v1655, %v1691
  %v1809 = vmul.f32 %v1655, %v1695
  %v1810 = vmul.f32 %v1655, %v1699
  %v1811 = vmul.f32 %v1655, %v1703
  %v1812 = vmul.f32 %v1660, %v1691
  %v1813 = vmul.f32 %v1660, %v1695
  %v1814 = vmul.f32 %v1660, %v1699
  %v1815 = vmul.f32 %v1660, %v1703
  %v1816 = vmul.f32 %v1665, %v1691
  %v1817 = vmul.f32 %v1665, %v1695
  %v1818 = vmul.f32 %v1665, %v1699
  %v1819 = vmul.f32 %v1665, %v1703
  %v1820 = vmul.f32 %v1670, %v1691
  %v1821 = vmul.f32 %v1670, %v1695
  %v1822 = vmul.f32 %v1670, %v1699
  %v1823 = vmul.f32 %v1670, %v1703
  %v1824 = vmul.f32 %v1675, %v1691
  %v1825 = vmul.f32 %v1675, %v1695
  %v1826 = vmul.f32 %v1675, %v1699
  %v1827 = vmul.f32 %v1675, %v1703
  %v1828 = vmul.f32 %v1680, %v1691
  %v1829 = vmul.f32 %v1680, %v1695
  %v1830 = vmul.f32 %v1680, %v1699
  %v1831 = vmul.f32 %v1680, %v1703
  %v1832 = vmul.f32 %v1685, %v1691
  %v1833 = vmul.f32 %v1685, %v1695
  %v1834 = vmul.f32 %v1685, %v1699
  %v1835 = vmul.f32 %v1685, %v1703
  %v1836 = vadd.f32 %v1708, 0.0
  %v1837 = vadd.f32 %v1709, 0.0
  %v1838 = vadd.f32 %v1710, 0.0
  %v1839 = vadd.f32 %v1711, 0.0
  %v1840 = vadd.f32 %v1712, 0.0
  %v1841 = vadd.f32 %v1713, 0.0
  %v1842 = vadd.f32 %v1714, 0.0
  %v1843 = vadd.f32 %v1715, 0.0
  %v1844 = vadd.f32 %v1716, 0.0
  %v1845 = vadd.f32 %v1717, 0.0
  %v1846 = vadd.f32 %v1718, 0.0
  %v1847 = vadd.f32 %v1719, 0.0
  %v1848 = vadd.f32 %v1720, 0.0
  %v1849 = vadd.f32 %v1721, 0.0
  %v1850 = vadd.f32 %v1722, 0.0
  %v1851 = vadd.f32 %v1723, 0.0
  %v1852 = vadd.f32 %v1724, 0.0
  %v1853 = vadd.f32 %v1725, 0.0
  %v1854 = vadd.f32 %v1726, 0.0
  %v1855 = vadd.f32 %v1727, 0.0
  %v1856 = vadd.f32 %v1728, 0.0
  %v1857 = vadd.f32 %v1729, 0.0
  %v1858 = vadd.f32 %v1730, 0.0
  %v1859 = vadd.f32 %v1731, 0.0
  %v1860 = vadd.f32 %v1732, 0.0
  %v1861 = vadd.f32 %v1733, 0.0
  %v1862 = vadd.f32 %v1734, 0.0
  %v1863 = vadd.f32 %v1735, 0.0
  %v1864 = vadd.f32 %v1736, 0.0
  %v1865 = vadd.f32 %v1737, 0.0
  %v1866 = vadd.f32 %v1738, 0.0
  %v1867 = vadd.f32 %v1739, 0.0
  %v1868 = vadd.f32 %v1740, 0.0
  %v1869 = vadd.f32 %v1741, 0.0
  %v1870 = vadd.f32 %v1742, 0.0
  %v1871 = vadd.f32 %v1743, 0.0
  %v1872 = vadd.f32 %v1744, 0.0
  %v1873 = vadd.f32 %v1745, 0.0
  %v1874 = vadd.f32 %v1746, 0.0
  %v1875 = vadd.f32 %v1747, 0.0
  %v1876 = vadd.f32 %v1748, 0.0
  %v1877 = vadd.f32 %v1749, 0.0
  %v1878 = vadd.f32 %v1750, 0.0
  %v1879 = vadd.f32 %v1751, 0.0
  %v1880 = vadd.f32 %v1752, 0.0
  %v1881 = vadd.f32 %v1753, 0.0
  %v1882 = vadd.f32 %v1754, 0.0
  %v1883 = vadd.f32 %v1755, 0.0
  %v1884 = vadd.f32 %v1756, 0.0
  %v1885 = vadd.f32 %v1757, 0.0
  %v1886 = vadd.f32 %v1758, 0.0
  %v1887 = vadd.f32 %v1759, 0.0
  %v1888 = vadd.f32 %v1760, 0.0
  %v1889 = vadd.f32 %v1761, 0.0
  %v1890 = vadd.f32 %v1762, 0.0
  %v1891 = vadd.f32 %v1763, 0.0
  %v1892 = vadd.f32 %v1764, 0.0
  %v1893 = vadd.f32 %v1765, 0.0
  %v1894 = vadd.f32 %v1766, 0.0
  %v1895 = vadd.f32 %v1767, 0.0
  %v1896 = vadd.f32 %v1768, 0.0
  %v1897 = vadd.f32 %v1769, 0.0
  %v1898 = vadd.f32 %v1770, 0.0
  %v1899 = vadd.f32 %v1771, 0.0
  %v1900 = vadd.f32 %v1772, 0.0
  %v1901 = vadd.f32 %v1773, 0.0
  %v1902 = vadd.f32 %v1774, 0.0
  %v1903 = vadd.f32 %v1775, 0.0
  %v1904 = vadd.f32 %v1776, 0.0
  %v1905 = vadd.f32 %v1777, 0.0
  %v1906 = vadd.f32 %v1778, 0.0
  %v1907 = vadd.f32 %v1779, 0.0
  %v1908 = vadd.f32 %v1780, 0.0
  %v1909 = vadd.f32 %v1781, 0.0
  %v1910 = vadd.f32 %v1782, 0.0
  %v1911 = vadd.f32 %v1783, 0.0
  %v1912 = vadd.f32 %v1784, 0.0
  %v1913 = vadd.f32 %v1785, 0.0
  %v1914 = vadd.f32 %v1786, 0.0
  %v1915 = vadd.f32 %v1787, 0.0
  %v1916 = vadd.f32 %v1788, 0.0
  %v1917 = vadd.f32 %v1789, 0.0
  %v1918 = vadd.f32 %v1790, 0.0
  %v1919 = vadd.f32 %v1791, 0.0
  %v1920 = vadd.f32 %v1792, 0.0
  %v1921 = vadd.f32 %v1793, 0.0
  %v1922 = vadd.f32 %v1794, 0.0
  %v1923 = vadd.f32 %v1795, 0.0
  %v1924 = vadd.f32 %v1796, 0.0
  %v1925 = vadd.f32 %v1797, 0.0
  %v1926 = vadd.f32 %v1798, 0.0
  %v1927 = vadd.f32 %v1799, 0.0
  %v1928 = vadd.f32 %v1800, 0.0
  %v1929 = vadd.f32 %v1801, 0.0
  %v1930 = vadd.f32 %v1802, 0.0
  %v1931 = vadd.f32 %v1803, 0.0
  %v1932 = vadd.f32 %v1804, 0.0
  %v1933 = vadd.f32 %v1805, 0.0
  %v1934 = vadd.f32 %v1806, 0.0
  %v1935 = vadd.f32 %v1807, 0.0
  %v1936 = vadd.f32 %v1808, 0.0
  %v1937 = vadd.f32 %v1809, 0.0
  %v1938 = vadd.f32 %v1810, 0.0
  %v1939 = vadd.f32 %v1811, 0.0
  %v1940 = vadd.f32 %v1812, 0.0
  %v1941 = vadd.f32 %v1813, 0.0
  %v1942 = vadd.f32 %v1814, 0.0
  %v1943 = vadd.f32 %v1815, 0.0
  %v1944 = vadd.f32 %v1816, 0.0
  %v1945 = vadd.f32 %v1817, 0.0
  %v1946 = vadd.f32 %v1818, 0.0
  %v1947 = vadd.f32 %v1819, 0.0
  %v1948 = vadd.f32 %v1820, 0.0
  %v1949 = vadd.f32 %v1821, 0.0
  %v1950 = vadd.f32 %v1822, 0.0
  %v1951 = vadd.f32 %v1823, 0.0
  %v1952 = vadd.f32 %v1824, 0.0
  %v1953 = vadd.f32 %v1825, 0.0
  %v1954 = vadd.f32 %v1826, 0.0
  %v1955 = vadd.f32 %v1827, 0.0
  %v1956 = vadd.f32 %v1828, 0.0
  %v1957 = vadd.f32 %v1829, 0.0
  %v1958 = vadd.f32 %v1830, 0.0
  %v1959 = vadd.f32 %v1831, 0.0
  %v1960 = vadd.f32 %v1832, 0.0
  %v1961 = vadd.f32 %v1833, 0.0
  %v1962 = vadd.f32 %v1834, 0.0
  %v1963 = vadd.f32 %v1835, 0.0
  %s1964 = scalar_lea.vmem %s3, 1
  %v1965 = vld [vmem:[%s1964] ss:$8 sm:$0xf]
  %v1967 = vlaneseq
  %v1968 = vshrl.u32 %v1967, 7
  %v1969 = vsub.s32 0, %v1968
  %v1970 = vrot.slane %v1965, %v1969
  %v1971 = vlaneseq
  %v1972 = vshrl.u32 %v1971, 7
  %v1973 = vsub.s32 1, %v1972
  %v1974 = vrot.slane %v1965, %v1973
  %v1975 = vlaneseq
  %v1976 = vshrl.u32 %v1975, 7
  %v1977 = vsub.s32 2, %v1976
  %v1978 = vrot.slane %v1965, %v1977
  %v1979 = vlaneseq
  %v1980 = vshrl.u32 %v1979, 7
  %v1981 = vsub.s32 3, %v1980
  %v1982 = vrot.slane %v1965, %v1981
  %v1987 = vmul.f32 %v1018, %v1970
  %v1988 = vmul.f32 %v1019, %v1974
  %v1989 = vmul.f32 %v1020, %v1978
  %v1990 = vmul.f32 %v1021, %v1982
  %v1991 = vmul.f32 %v1022, %v1970
  %v1992 = vmul.f32 %v1023, %v1974
  %v1993 = vmul.f32 %v1024, %v1978
  %v1994 = vmul.f32 %v1025, %v1982
  %v1995 = vmul.f32 %v1026, %v1970
  %v1996 = vmul.f32 %v1027, %v1974
  %v1997 = vmul.f32 %v1028, %v1978
  %v1998 = vmul.f32 %v1029, %v1982
  %v1999 = vmul.f32 %v1030, %v1970
  %v2000 = vmul.f32 %v1031, %v1974
  %v2001 = vmul.f32 %v1032, %v1978
  %v2002 = vmul.f32 %v1033, %v1982
  %v2003 = vmul.f32 %v1034, %v1970
  %v2004 = vmul.f32 %v1035, %v1974
  %v2005 = vmul.f32 %v1036, %v1978
  %v2006 = vmul.f32 %v1037, %v1982
  %v2007 = vmul.f32 %v1038, %v1970
  %v2008 = vmul.f32 %v1039, %v1974
  %v2009 = vmul.f32 %v1040, %v1978
  %v2010 = vmul.f32 %v1041, %v1982
  %v2011 = vmul.f32 %v1042, %v1970
  %v2012 = vmul.f32 %v1043, %v1974
  %v2013 = vmul.f32 %v1044, %v1978
  %v2014 = vmul.f32 %v1045, %v1982
  %v2015 = vmul.f32 %v1046, %v1970
  %v2016 = vmul.f32 %v1047, %v1974
  %v2017 = vmul.f32 %v1048, %v1978
  %v2018 = vmul.f32 %v1049, %v1982
  %v2019 = vmul.f32 %v1050, %v1970
  %v2020 = vmul.f32 %v1051, %v1974
  %v2021 = vmul.f32 %v1052, %v1978
  %v2022 = vmul.f32 %v1053, %v1982
  %v2023 = vmul.f32 %v1054, %v1970
  %v2024 = vmul.f32 %v1055, %v1974
  %v2025 = vmul.f32 %v1056, %v1978
  %v2026 = vmul.f32 %v1057, %v1982
  %v2027 = vmul.f32 %v1058, %v1970
  %v2028 = vmul.f32 %v1059, %v1974
  %v2029 = vmul.f32 %v1060, %v1978
  %v2030 = vmul.f32 %v1061, %v1982
  %v2031 = vmul.f32 %v1062, %v1970
  %v2032 = vmul.f32 %v1063, %v1974
  %v2033 = vmul.f32 %v1064, %v1978
  %v2034 = vmul.f32 %v1065, %v1982
  %v2035 = vmul.f32 %v1066, %v1970
  %v2036 = vmul.f32 %v1067, %v1974
  %v2037 = vmul.f32 %v1068, %v1978
  %v2038 = vmul.f32 %v1069, %v1982
  %v2039 = vmul.f32 %v1070, %v1970
  %v2040 = vmul.f32 %v1071, %v1974
  %v2041 = vmul.f32 %v1072, %v1978
  %v2042 = vmul.f32 %v1073, %v1982
  %v2043 = vmul.f32 %v1074, %v1970
  %v2044 = vmul.f32 %v1075, %v1974
  %v2045 = vmul.f32 %v1076, %v1978
  %v2046 = vmul.f32 %v1077, %v1982
  %v2047 = vmul.f32 %v1078, %v1970
  %v2048 = vmul.f32 %v1079, %v1974
  %v2049 = vmul.f32 %v1080, %v1978
  %v2050 = vmul.f32 %v1081, %v1982
  %v2051 = vmul.f32 %v1082, %v1970
  %v2052 = vmul.f32 %v1083, %v1974
  %v2053 = vmul.f32 %v1084, %v1978
  %v2054 = vmul.f32 %v1085, %v1982
  %v2055 = vmul.f32 %v1086, %v1970
  %v2056 = vmul.f32 %v1087, %v1974
  %v2057 = vmul.f32 %v1088, %v1978
  %v2058 = vmul.f32 %v1089, %v1982
  %v2059 = vmul.f32 %v1090, %v1970
  %v2060 = vmul.f32 %v1091, %v1974
  %v2061 = vmul.f32 %v1092, %v1978
  %v2062 = vmul.f32 %v1093, %v1982
  %v2063 = vmul.f32 %v1094, %v1970
  %v2064 = vmul.f32 %v1095, %v1974
  %v2065 = vmul.f32 %v1096, %v1978
  %v2066 = vmul.f32 %v1097, %v1982
  %v2067 = vmul.f32 %v1098, %v1970
  %v2068 = vmul.f32 %v1099, %v1974
  %v2069 = vmul.f32 %v1100, %v1978
  %v2070 = vmul.f32 %v1101, %v1982
  %v2071 = vmul.f32 %v1102, %v1970
  %v2072 = vmul.f32 %v1103, %v1974
  %v2073 = vmul.f32 %v1104, %v1978
  %v2074 = vmul.f32 %v1105, %v1982
  %v2075 = vmul.f32 %v1106, %v1970
  %v2076 = vmul.f32 %v1107, %v1974
  %v2077 = vmul.f32 %v1108, %v1978
  %v2078 = vmul.f32 %v1109, %v1982
  %v2079 = vmul.f32 %v1110, %v1970
  %v2080 = vmul.f32 %v1111, %v1974
  %v2081 = vmul.f32 %v1112, %v1978
  %v2082 = vmul.f32 %v1113, %v1982
  %v2083 = vmul.f32 %v1114, %v1970
  %v2084 = vmul.f32 %v1115, %v1974
  %v2085 = vmul.f32 %v1116, %v1978
  %v2086 = vmul.f32 %v1117, %v1982
  %v2087 = vmul.f32 %v1118, %v1970
  %v2088 = vmul.f32 %v1119, %v1974
  %v2089 = vmul.f32 %v1120, %v1978
  %v2090 = vmul.f32 %v1121, %v1982
  %v2091 = vmul.f32 %v1122, %v1970
  %v2092 = vmul.f32 %v1123, %v1974
  %v2093 = vmul.f32 %v1124, %v1978
  %v2094 = vmul.f32 %v1125, %v1982
  %v2095 = vmul.f32 %v1126, %v1970
  %v2096 = vmul.f32 %v1127, %v1974
  %v2097 = vmul.f32 %v1128, %v1978
  %v2098 = vmul.f32 %v1129, %v1982
  %v2099 = vmul.f32 %v1130, %v1970
  %v2100 = vmul.f32 %v1131, %v1974
  %v2101 = vmul.f32 %v1132, %v1978
  %v2102 = vmul.f32 %v1133, %v1982
  %v2103 = vmul.f32 %v1134, %v1970
  %v2104 = vmul.f32 %v1135, %v1974
  %v2105 = vmul.f32 %v1136, %v1978
  %v2106 = vmul.f32 %v1137, %v1982
  %v2107 = vmul.f32 %v1138, %v1970
  %v2108 = vmul.f32 %v1139, %v1974
  %v2109 = vmul.f32 %v1140, %v1978
  %v2110 = vmul.f32 %v1141, %v1982
  %v2111 = vmul.f32 %v1142, %v1970
  %v2112 = vmul.f32 %v1143, %v1974
  %v2113 = vmul.f32 %v1144, %v1978
  %v2114 = vmul.f32 %v1145, %v1982
  %v2115 = vadd.f32 %v1987, %v1988
  %v2116 = vadd.f32 %v2115, %v1989
  %v2117 = vadd.f32 %v2116, %v1990
  %2118 = vadd.xlane.f32.xlu0 %v2117
  %v2119 = vpop.xlane.xlu0 %2118
  %v2120 = vadd.f32 %v1991, %v1992
  %v2121 = vadd.f32 %v2120, %v1993
  %v2122 = vadd.f32 %v2121, %v1994
  %2123 = vadd.xlane.f32.xlu0 %v2122
  %v2124 = vpop.xlane.xlu0 %2123
  %v2125 = vadd.f32 %v1995, %v1996
  %v2126 = vadd.f32 %v2125, %v1997
  %v2127 = vadd.f32 %v2126, %v1998
  %2128 = vadd.xlane.f32.xlu0 %v2127
  %v2129 = vpop.xlane.xlu0 %2128
  %v2130 = vadd.f32 %v1999, %v2000
  %v2131 = vadd.f32 %v2130, %v2001
  %v2132 = vadd.f32 %v2131, %v2002
  %2133 = vadd.xlane.f32.xlu0 %v2132
  %v2134 = vpop.xlane.xlu0 %2133
  %v2135 = vadd.f32 %v2003, %v2004
  %v2136 = vadd.f32 %v2135, %v2005
  %v2137 = vadd.f32 %v2136, %v2006
  %2138 = vadd.xlane.f32.xlu0 %v2137
  %v2139 = vpop.xlane.xlu0 %2138
  %v2140 = vadd.f32 %v2007, %v2008
  %v2141 = vadd.f32 %v2140, %v2009
  %v2142 = vadd.f32 %v2141, %v2010
  %2143 = vadd.xlane.f32.xlu0 %v2142
  %v2144 = vpop.xlane.xlu0 %2143
  %v2145 = vadd.f32 %v2011, %v2012
  %v2146 = vadd.f32 %v2145, %v2013
  %v2147 = vadd.f32 %v2146, %v2014
  %2148 = vadd.xlane.f32.xlu0 %v2147
  %v2149 = vpop.xlane.xlu0 %2148
  %v2150 = vadd.f32 %v2015, %v2016
  %v2151 = vadd.f32 %v2150, %v2017
  %v2152 = vadd.f32 %v2151, %v2018
  %2153 = vadd.xlane.f32.xlu0 %v2152
  %v2154 = vpop.xlane.xlu0 %2153
  %v2155 = vadd.f32 %v2019, %v2020
  %v2156 = vadd.f32 %v2155, %v2021
  %v2157 = vadd.f32 %v2156, %v2022
  %2158 = vadd.xlane.f32.xlu0 %v2157
  %v2159 = vpop.xlane.xlu0 %2158
  %v2160 = vadd.f32 %v2023, %v2024
  %v2161 = vadd.f32 %v2160, %v2025
  %v2162 = vadd.f32 %v2161, %v2026
  %2163 = vadd.xlane.f32.xlu0 %v2162
  %v2164 = vpop.xlane.xlu0 %2163
  %v2165 = vadd.f32 %v2027, %v2028
  %v2166 = vadd.f32 %v2165, %v2029
  %v2167 = vadd.f32 %v2166, %v2030
  %2168 = vadd.xlane.f32.xlu0 %v2167
  %v2169 = vpop.xlane.xlu0 %2168
  %v2170 = vadd.f32 %v2031, %v2032
  %v2171 = vadd.f32 %v2170, %v2033
  %v2172 = vadd.f32 %v2171, %v2034
  %2173 = vadd.xlane.f32.xlu0 %v2172
  %v2174 = vpop.xlane.xlu0 %2173
  %v2175 = vadd.f32 %v2035, %v2036
  %v2176 = vadd.f32 %v2175, %v2037
  %v2177 = vadd.f32 %v2176, %v2038
  %2178 = vadd.xlane.f32.xlu0 %v2177
  %v2179 = vpop.xlane.xlu0 %2178
  %v2180 = vadd.f32 %v2039, %v2040
  %v2181 = vadd.f32 %v2180, %v2041
  %v2182 = vadd.f32 %v2181, %v2042
  %2183 = vadd.xlane.f32.xlu0 %v2182
  %v2184 = vpop.xlane.xlu0 %2183
  %v2185 = vadd.f32 %v2043, %v2044
  %v2186 = vadd.f32 %v2185, %v2045
  %v2187 = vadd.f32 %v2186, %v2046
  %2188 = vadd.xlane.f32.xlu0 %v2187
  %v2189 = vpop.xlane.xlu0 %2188
  %v2190 = vadd.f32 %v2047, %v2048
  %v2191 = vadd.f32 %v2190, %v2049
  %v2192 = vadd.f32 %v2191, %v2050
  %2193 = vadd.xlane.f32.xlu0 %v2192
  %v2194 = vpop.xlane.xlu0 %2193
  %v2195 = vadd.f32 %v2051, %v2052
  %v2196 = vadd.f32 %v2195, %v2053
  %v2197 = vadd.f32 %v2196, %v2054
  %2198 = vadd.xlane.f32.xlu0 %v2197
  %v2199 = vpop.xlane.xlu0 %2198
  %v2200 = vadd.f32 %v2055, %v2056
  %v2201 = vadd.f32 %v2200, %v2057
  %v2202 = vadd.f32 %v2201, %v2058
  %2203 = vadd.xlane.f32.xlu0 %v2202
  %v2204 = vpop.xlane.xlu0 %2203
  %v2205 = vadd.f32 %v2059, %v2060
  %v2206 = vadd.f32 %v2205, %v2061
  %v2207 = vadd.f32 %v2206, %v2062
  %2208 = vadd.xlane.f32.xlu0 %v2207
  %v2209 = vpop.xlane.xlu0 %2208
  %v2210 = vadd.f32 %v2063, %v2064
  %v2211 = vadd.f32 %v2210, %v2065
  %v2212 = vadd.f32 %v2211, %v2066
  %2213 = vadd.xlane.f32.xlu0 %v2212
  %v2214 = vpop.xlane.xlu0 %2213
  %v2215 = vadd.f32 %v2067, %v2068
  %v2216 = vadd.f32 %v2215, %v2069
  %v2217 = vadd.f32 %v2216, %v2070
  %2218 = vadd.xlane.f32.xlu0 %v2217
  %v2219 = vpop.xlane.xlu0 %2218
  %v2220 = vadd.f32 %v2071, %v2072
  %v2221 = vadd.f32 %v2220, %v2073
  %v2222 = vadd.f32 %v2221, %v2074
  %2223 = vadd.xlane.f32.xlu0 %v2222
  %v2224 = vpop.xlane.xlu0 %2223
  %v2225 = vadd.f32 %v2075, %v2076
  %v2226 = vadd.f32 %v2225, %v2077
  %v2227 = vadd.f32 %v2226, %v2078
  %2228 = vadd.xlane.f32.xlu0 %v2227
  %v2229 = vpop.xlane.xlu0 %2228
  %v2230 = vadd.f32 %v2079, %v2080
  %v2231 = vadd.f32 %v2230, %v2081
  %v2232 = vadd.f32 %v2231, %v2082
  %2233 = vadd.xlane.f32.xlu0 %v2232
  %v2234 = vpop.xlane.xlu0 %2233
  %v2235 = vadd.f32 %v2083, %v2084
  %v2236 = vadd.f32 %v2235, %v2085
  %v2237 = vadd.f32 %v2236, %v2086
  %2238 = vadd.xlane.f32.xlu0 %v2237
  %v2239 = vpop.xlane.xlu0 %2238
  %v2240 = vadd.f32 %v2087, %v2088
  %v2241 = vadd.f32 %v2240, %v2089
  %v2242 = vadd.f32 %v2241, %v2090
  %2243 = vadd.xlane.f32.xlu0 %v2242
  %v2244 = vpop.xlane.xlu0 %2243
  %v2245 = vadd.f32 %v2091, %v2092
  %v2246 = vadd.f32 %v2245, %v2093
  %v2247 = vadd.f32 %v2246, %v2094
  %2248 = vadd.xlane.f32.xlu0 %v2247
  %v2249 = vpop.xlane.xlu0 %2248
  %v2250 = vadd.f32 %v2095, %v2096
  %v2251 = vadd.f32 %v2250, %v2097
  %v2252 = vadd.f32 %v2251, %v2098
  %2253 = vadd.xlane.f32.xlu0 %v2252
  %v2254 = vpop.xlane.xlu0 %2253
  %v2255 = vadd.f32 %v2099, %v2100
  %v2256 = vadd.f32 %v2255, %v2101
  %v2257 = vadd.f32 %v2256, %v2102
  %2258 = vadd.xlane.f32.xlu0 %v2257
  %v2259 = vpop.xlane.xlu0 %2258
  %v2260 = vadd.f32 %v2103, %v2104
  %v2261 = vadd.f32 %v2260, %v2105
  %v2262 = vadd.f32 %v2261, %v2106
  %2263 = vadd.xlane.f32.xlu0 %v2262
  %v2264 = vpop.xlane.xlu0 %2263
  %v2265 = vadd.f32 %v2107, %v2108
  %v2266 = vadd.f32 %v2265, %v2109
  %v2267 = vadd.f32 %v2266, %v2110
  %2268 = vadd.xlane.f32.xlu0 %v2267
  %v2269 = vpop.xlane.xlu0 %2268
  %v2270 = vadd.f32 %v2111, %v2112
  %v2271 = vadd.f32 %v2270, %v2113
  %v2272 = vadd.f32 %v2271, %v2114
  %2273 = vadd.xlane.f32.xlu0 %v2272
  %v2274 = vpop.xlane.xlu0 %2273
  %v2275 = vld [vmem:[%s4 + $0x1] sm:$0x1]
  %v2276 = vlaneseq
  %v2277 = vshrl.u32 %v2276, 7
  %v2278 = vsub.s32 0, %v2277
  %v2279 = vrot.slane %v2275, %v2278
  %v2280 = vadd.f32 %v2119, %v2279
  %v2281 = vadd.f32 %v2124, %v2279
  %v2282 = vadd.f32 %v2129, %v2279
  %v2283 = vadd.f32 %v2134, %v2279
  %v2284 = vadd.f32 %v2139, %v2279
  %v2285 = vadd.f32 %v2144, %v2279
  %v2286 = vadd.f32 %v2149, %v2279
  %v2287 = vadd.f32 %v2154, %v2279
  %v2288 = vadd.f32 %v2159, %v2279
  %v2289 = vadd.f32 %v2164, %v2279
  %v2290 = vadd.f32 %v2169, %v2279
  %v2291 = vadd.f32 %v2174, %v2279
  %v2292 = vadd.f32 %v2179, %v2279
  %v2293 = vadd.f32 %v2184, %v2279
  %v2294 = vadd.f32 %v2189, %v2279
  %v2295 = vadd.f32 %v2194, %v2279
  %v2296 = vadd.f32 %v2199, %v2279
  %v2297 = vadd.f32 %v2204, %v2279
  %v2298 = vadd.f32 %v2209, %v2279
  %v2299 = vadd.f32 %v2214, %v2279
  %v2300 = vadd.f32 %v2219, %v2279
  %v2301 = vadd.f32 %v2224, %v2279
  %v2302 = vadd.f32 %v2229, %v2279
  %v2303 = vadd.f32 %v2234, %v2279
  %v2304 = vadd.f32 %v2239, %v2279
  %v2305 = vadd.f32 %v2244, %v2279
  %v2306 = vadd.f32 %v2249, %v2279
  %v2307 = vadd.f32 %v2254, %v2279
  %v2308 = vadd.f32 %v2259, %v2279
  %v2309 = vadd.f32 %v2264, %v2279
  %v2310 = vadd.f32 %v2269, %v2279
  %v2311 = vadd.f32 %v2274, %v2279
  %2344 = vrot.lane.b32.xlu0 %v2280, 1
  %v2345 = vpop.permute.xlu0 %2344
  %2346 = vrot.lane.b32.xlu0 %v2281, 1
  %v2347 = vpop.permute.xlu0 %2346
  %2348 = vrot.lane.b32.xlu0 %v2282, 1
  %v2349 = vpop.permute.xlu0 %2348
  %2350 = vrot.lane.b32.xlu0 %v2283, 1
  %v2351 = vpop.permute.xlu0 %2350
  %2352 = vrot.lane.b32.xlu0 %v2284, 1
  %v2353 = vpop.permute.xlu0 %2352
  %2354 = vrot.lane.b32.xlu0 %v2285, 1
  %v2355 = vpop.permute.xlu0 %2354
  %2356 = vrot.lane.b32.xlu0 %v2286, 1
  %v2357 = vpop.permute.xlu0 %2356
  %2358 = vrot.lane.b32.xlu0 %v2287, 1
  %v2359 = vpop.permute.xlu0 %2358
  %2360 = vrot.lane.b32.xlu0 %v2288, 1
  %v2361 = vpop.permute.xlu0 %2360
  %2362 = vrot.lane.b32.xlu0 %v2289, 1
  %v2363 = vpop.permute.xlu0 %2362
  %2364 = vrot.lane.b32.xlu0 %v2290, 1
  %v2365 = vpop.permute.xlu0 %2364
  %2366 = vrot.lane.b32.xlu0 %v2291, 1
  %v2367 = vpop.permute.xlu0 %2366
  %2368 = vrot.lane.b32.xlu0 %v2292, 1
  %v2369 = vpop.permute.xlu0 %2368
  %2370 = vrot.lane.b32.xlu0 %v2293, 1
  %v2371 = vpop.permute.xlu0 %2370
  %2372 = vrot.lane.b32.xlu0 %v2294, 1
  %v2373 = vpop.permute.xlu0 %2372
  %2374 = vrot.lane.b32.xlu0 %v2295, 1
  %v2375 = vpop.permute.xlu0 %2374
  %2376 = vrot.lane.b32.xlu0 %v2296, 1
  %v2377 = vpop.permute.xlu0 %2376
  %2378 = vrot.lane.b32.xlu0 %v2297, 1
  %v2379 = vpop.permute.xlu0 %2378
  %2380 = vrot.lane.b32.xlu0 %v2298, 1
  %v2381 = vpop.permute.xlu0 %2380
  %2382 = vrot.lane.b32.xlu0 %v2299, 1
  %v2383 = vpop.permute.xlu0 %2382
  %2384 = vrot.lane.b32.xlu0 %v2300, 1
  %v2385 = vpop.permute.xlu0 %2384
  %2386 = vrot.lane.b32.xlu0 %v2301, 1
  %v2387 = vpop.permute.xlu0 %2386
  %2388 = vrot.lane.b32.xlu0 %v2302, 1
  %v2389 = vpop.permute.xlu0 %2388
  %2390 = vrot.lane.b32.xlu0 %v2303, 1
  %v2391 = vpop.permute.xlu0 %2390
  %2392 = vrot.lane.b32.xlu0 %v2304, 1
  %v2393 = vpop.permute.xlu0 %2392
  %2394 = vrot.lane.b32.xlu0 %v2305, 1
  %v2395 = vpop.permute.xlu0 %2394
  %2396 = vrot.lane.b32.xlu0 %v2306, 1
  %v2397 = vpop.permute.xlu0 %2396
  %2398 = vrot.lane.b32.xlu0 %v2307, 1
  %v2399 = vpop.permute.xlu0 %2398
  %2400 = vrot.lane.b32.xlu0 %v2308, 1
  %v2401 = vpop.permute.xlu0 %2400
  %2402 = vrot.lane.b32.xlu0 %v2309, 1
  %v2403 = vpop.permute.xlu0 %2402
  %2404 = vrot.lane.b32.xlu0 %v2310, 1
  %v2405 = vpop.permute.xlu0 %2404
  %2406 = vrot.lane.b32.xlu0 %v2311, 1
  %v2407 = vpop.permute.xlu0 %2406
  %vm2440 = vcmask 15368
  %2441 = vst.msk [vmem:[%s10] sm:$0xff] %vm2440, %v2345
  %2442 = vst.msk [vmem:[%s10 + $0x8] sm:$0xff] %vm2440, %v2347
  %2443 = vst.msk [vmem:[%s10 + $0x10] sm:$0xff] %vm2440, %v2349
  %2444 = vst.msk [vmem:[%s10 + $0x18] sm:$0xff] %vm2440, %v2351
  %2445 = vst.msk [vmem:[%s10 + $0x20] sm:$0xff] %vm2440, %v2353
  %2446 = vst.msk [vmem:[%s10 + $0x28] sm:$0xff] %vm2440, %v2355
  %2447 = vst.msk [vmem:[%s10 + $0x30] sm:$0xff] %vm2440, %v2357
  %2448 = vst.msk [vmem:[%s10 + $0x38] sm:$0xff] %vm2440, %v2359
  %2449 = vst.msk [vmem:[%s10 + $0x40] sm:$0xff] %vm2440, %v2361
  %2450 = vst.msk [vmem:[%s10 + $0x48] sm:$0xff] %vm2440, %v2363
  %2451 = vst.msk [vmem:[%s10 + $0x50] sm:$0xff] %vm2440, %v2365
  %2452 = vst.msk [vmem:[%s10 + $0x58] sm:$0xff] %vm2440, %v2367
  %2453 = vst.msk [vmem:[%s10 + $0x60] sm:$0xff] %vm2440, %v2369
  %2454 = vst.msk [vmem:[%s10 + $0x68] sm:$0xff] %vm2440, %v2371
  %2455 = vst.msk [vmem:[%s10 + $0x70] sm:$0xff] %vm2440, %v2373
  %2456 = vst.msk [vmem:[%s10 + $0x78] sm:$0xff] %vm2440, %v2375
  %2457 = vst.msk [vmem:[%s10 + $0x80] sm:$0xff] %vm2440, %v2377
  %2458 = vst.msk [vmem:[%s10 + $0x88] sm:$0xff] %vm2440, %v2379
  %2459 = vst.msk [vmem:[%s10 + $0x90] sm:$0xff] %vm2440, %v2381
  %2460 = vst.msk [vmem:[%s10 + $0x98] sm:$0xff] %vm2440, %v2383
  %2461 = vst.msk [vmem:[%s10 + $0xa0] sm:$0xff] %vm2440, %v2385
  %2462 = vst.msk [vmem:[%s10 + $0xa8] sm:$0xff] %vm2440, %v2387
  %2463 = vst.msk [vmem:[%s10 + $0xb0] sm:$0xff] %vm2440, %v2389
  %2464 = vst.msk [vmem:[%s10 + $0xb8] sm:$0xff] %vm2440, %v2391
  %2465 = vst.msk [vmem:[%s10 + $0xc0] sm:$0xff] %vm2440, %v2393
  %2466 = vst.msk [vmem:[%s10 + $0xc8] sm:$0xff] %vm2440, %v2395
  %2467 = vst.msk [vmem:[%s10 + $0xd0] sm:$0xff] %vm2440, %v2397
  %2468 = vst.msk [vmem:[%s10 + $0xd8] sm:$0xff] %vm2440, %v2399
  %2469 = vst.msk [vmem:[%s10 + $0xe0] sm:$0xff] %vm2440, %v2401
  %2470 = vst.msk [vmem:[%s10 + $0xe8] sm:$0xff] %vm2440, %v2403
  %2471 = vst.msk [vmem:[%s10 + $0xf0] sm:$0xff] %vm2440, %v2405
  %2472 = vst.msk [vmem:[%s10 + $0xf8] sm:$0xff] %vm2440, %v2407
  %s2473 = scalar_lea.vmem %s5, 1
  %v2474 = vld [vmem:[%s2473] ss:$8 sm:$0xf]
  %2475 = vset.pattern.permute.xlu0 0
  %2476 = vperm.xlu0 %2475, %v2280
  %v2477 = vpop.permute.xlu0 %2476
  %2479 = vset.pattern.permute.xlu0 0
  %2480 = vperm.xlu0 %2479, %v2281
  %v2481 = vpop.permute.xlu0 %2480
  %2483 = vset.pattern.permute.xlu0 0
  %2484 = vperm.xlu0 %2483, %v2282
  %v2485 = vpop.permute.xlu0 %2484
  %2487 = vset.pattern.permute.xlu0 0
  %2488 = vperm.xlu0 %2487, %v2283
  %v2489 = vpop.permute.xlu0 %2488
  %2491 = vset.pattern.permute.xlu0 0
  %2492 = vperm.xlu0 %2491, %v2284
  %v2493 = vpop.permute.xlu0 %2492
  %2495 = vset.pattern.permute.xlu0 0
  %2496 = vperm.xlu0 %2495, %v2285
  %v2497 = vpop.permute.xlu0 %2496
  %2499 = vset.pattern.permute.xlu0 0
  %2500 = vperm.xlu0 %2499, %v2286
  %v2501 = vpop.permute.xlu0 %2500
  %2503 = vset.pattern.permute.xlu0 0
  %2504 = vperm.xlu0 %2503, %v2287
  %v2505 = vpop.permute.xlu0 %2504
  %2507 = vset.pattern.permute.xlu0 0
  %2508 = vperm.xlu0 %2507, %v2288
  %v2509 = vpop.permute.xlu0 %2508
  %2511 = vset.pattern.permute.xlu0 0
  %2512 = vperm.xlu0 %2511, %v2289
  %v2513 = vpop.permute.xlu0 %2512
  %2515 = vset.pattern.permute.xlu0 0
  %2516 = vperm.xlu0 %2515, %v2290
  %v2517 = vpop.permute.xlu0 %2516
  %2519 = vset.pattern.permute.xlu0 0
  %2520 = vperm.xlu0 %2519, %v2291
  %v2521 = vpop.permute.xlu0 %2520
  %2523 = vset.pattern.permute.xlu0 0
  %2524 = vperm.xlu0 %2523, %v2292
  %v2525 = vpop.permute.xlu0 %2524
  %2527 = vset.pattern.permute.xlu0 0
  %2528 = vperm.xlu0 %2527, %v2293
  %v2529 = vpop.permute.xlu0 %2528
  %2531 = vset.pattern.permute.xlu0 0
  %2532 = vperm.xlu0 %2531, %v2294
  %v2533 = vpop.permute.xlu0 %2532
  %2535 = vset.pattern.permute.xlu0 0
  %2536 = vperm.xlu0 %2535, %v2295
  %v2537 = vpop.permute.xlu0 %2536
  %2539 = vset.pattern.permute.xlu0 0
  %2540 = vperm.xlu0 %2539, %v2296
  %v2541 = vpop.permute.xlu0 %2540
  %2543 = vset.pattern.permute.xlu0 0
  %2544 = vperm.xlu0 %2543, %v2297
  %v2545 = vpop.permute.xlu0 %2544
  %2547 = vset.pattern.permute.xlu0 0
  %2548 = vperm.xlu0 %2547, %v2298
  %v2549 = vpop.permute.xlu0 %2548
  %2551 = vset.pattern.permute.xlu0 0
  %2552 = vperm.xlu0 %2551, %v2299
  %v2553 = vpop.permute.xlu0 %2552
  %2555 = vset.pattern.permute.xlu0 0
  %2556 = vperm.xlu0 %2555, %v2300
  %v2557 = vpop.permute.xlu0 %2556
  %2559 = vset.pattern.permute.xlu0 0
  %2560 = vperm.xlu0 %2559, %v2301
  %v2561 = vpop.permute.xlu0 %2560
  %2563 = vset.pattern.permute.xlu0 0
  %2564 = vperm.xlu0 %2563, %v2302
  %v2565 = vpop.permute.xlu0 %2564
  %2567 = vset.pattern.permute.xlu0 0
  %2568 = vperm.xlu0 %2567, %v2303
  %v2569 = vpop.permute.xlu0 %2568
  %2571 = vset.pattern.permute.xlu0 0
  %2572 = vperm.xlu0 %2571, %v2304
  %v2573 = vpop.permute.xlu0 %2572
  %2575 = vset.pattern.permute.xlu0 0
  %2576 = vperm.xlu0 %2575, %v2305
  %v2577 = vpop.permute.xlu0 %2576
  %2579 = vset.pattern.permute.xlu0 0
  %2580 = vperm.xlu0 %2579, %v2306
  %v2581 = vpop.permute.xlu0 %2580
  %2583 = vset.pattern.permute.xlu0 0
  %2584 = vperm.xlu0 %2583, %v2307
  %v2585 = vpop.permute.xlu0 %2584
  %2587 = vset.pattern.permute.xlu0 0
  %2588 = vperm.xlu0 %2587, %v2308
  %v2589 = vpop.permute.xlu0 %2588
  %2591 = vset.pattern.permute.xlu0 0
  %2592 = vperm.xlu0 %2591, %v2309
  %v2593 = vpop.permute.xlu0 %2592
  %2595 = vset.pattern.permute.xlu0 0
  %2596 = vperm.xlu0 %2595, %v2310
  %v2597 = vpop.permute.xlu0 %2596
  %2599 = vset.pattern.permute.xlu0 0
  %2600 = vperm.xlu0 %2599, %v2311
  %v2601 = vpop.permute.xlu0 %2600
  %v2604 = vlaneseq
  %v2605 = vshrl.u32 %v2604, 7
  %v2606 = vsub.s32 0, %v2605
  %v2607 = vrot.slane %v2474, %v2606
  %v2608 = vlaneseq
  %v2609 = vshrl.u32 %v2608, 7
  %v2610 = vsub.s32 1, %v2609
  %v2611 = vrot.slane %v2474, %v2610
  %v2612 = vlaneseq
  %v2613 = vshrl.u32 %v2612, 7
  %v2614 = vsub.s32 2, %v2613
  %v2615 = vrot.slane %v2474, %v2614
  %v2616 = vlaneseq
  %v2617 = vshrl.u32 %v2616, 7
  %v2618 = vsub.s32 3, %v2617
  %v2619 = vrot.slane %v2474, %v2618
  %v2624 = vmul.f32 %v2477, %v2607
  %v2625 = vmul.f32 %v2477, %v2611
  %v2626 = vmul.f32 %v2477, %v2615
  %v2627 = vmul.f32 %v2477, %v2619
  %v2628 = vmul.f32 %v2481, %v2607
  %v2629 = vmul.f32 %v2481, %v2611
  %v2630 = vmul.f32 %v2481, %v2615
  %v2631 = vmul.f32 %v2481, %v2619
  %v2632 = vmul.f32 %v2485, %v2607
  %v2633 = vmul.f32 %v2485, %v2611
  %v2634 = vmul.f32 %v2485, %v2615
  %v2635 = vmul.f32 %v2485, %v2619
  %v2636 = vmul.f32 %v2489, %v2607
  %v2637 = vmul.f32 %v2489, %v2611
  %v2638 = vmul.f32 %v2489, %v2615
  %v2639 = vmul.f32 %v2489, %v2619
  %v2640 = vmul.f32 %v2493, %v2607
  %v2641 = vmul.f32 %v2493, %v2611
  %v2642 = vmul.f32 %v2493, %v2615
  %v2643 = vmul.f32 %v2493, %v2619
  %v2644 = vmul.f32 %v2497, %v2607
  %v2645 = vmul.f32 %v2497, %v2611
  %v2646 = vmul.f32 %v2497, %v2615
  %v2647 = vmul.f32 %v2497, %v2619
  %v2648 = vmul.f32 %v2501, %v2607
  %v2649 = vmul.f32 %v2501, %v2611
  %v2650 = vmul.f32 %v2501, %v2615
  %v2651 = vmul.f32 %v2501, %v2619
  %v2652 = vmul.f32 %v2505, %v2607
  %v2653 = vmul.f32 %v2505, %v2611
  %v2654 = vmul.f32 %v2505, %v2615
  %v2655 = vmul.f32 %v2505, %v2619
  %v2656 = vmul.f32 %v2509, %v2607
  %v2657 = vmul.f32 %v2509, %v2611
  %v2658 = vmul.f32 %v2509, %v2615
  %v2659 = vmul.f32 %v2509, %v2619
  %v2660 = vmul.f32 %v2513, %v2607
  %v2661 = vmul.f32 %v2513, %v2611
  %v2662 = vmul.f32 %v2513, %v2615
  %v2663 = vmul.f32 %v2513, %v2619
  %v2664 = vmul.f32 %v2517, %v2607
  %v2665 = vmul.f32 %v2517, %v2611
  %v2666 = vmul.f32 %v2517, %v2615
  %v2667 = vmul.f32 %v2517, %v2619
  %v2668 = vmul.f32 %v2521, %v2607
  %v2669 = vmul.f32 %v2521, %v2611
  %v2670 = vmul.f32 %v2521, %v2615
  %v2671 = vmul.f32 %v2521, %v2619
  %v2672 = vmul.f32 %v2525, %v2607
  %v2673 = vmul.f32 %v2525, %v2611
  %v2674 = vmul.f32 %v2525, %v2615
  %v2675 = vmul.f32 %v2525, %v2619
  %v2676 = vmul.f32 %v2529, %v2607
  %v2677 = vmul.f32 %v2529, %v2611
  %v2678 = vmul.f32 %v2529, %v2615
  %v2679 = vmul.f32 %v2529, %v2619
  %v2680 = vmul.f32 %v2533, %v2607
  %v2681 = vmul.f32 %v2533, %v2611
  %v2682 = vmul.f32 %v2533, %v2615
  %v2683 = vmul.f32 %v2533, %v2619
  %v2684 = vmul.f32 %v2537, %v2607
  %v2685 = vmul.f32 %v2537, %v2611
  %v2686 = vmul.f32 %v2537, %v2615
  %v2687 = vmul.f32 %v2537, %v2619
  %v2688 = vmul.f32 %v2541, %v2607
  %v2689 = vmul.f32 %v2541, %v2611
  %v2690 = vmul.f32 %v2541, %v2615
  %v2691 = vmul.f32 %v2541, %v2619
  %v2692 = vmul.f32 %v2545, %v2607
  %v2693 = vmul.f32 %v2545, %v2611
  %v2694 = vmul.f32 %v2545, %v2615
  %v2695 = vmul.f32 %v2545, %v2619
  %v2696 = vmul.f32 %v2549, %v2607
  %v2697 = vmul.f32 %v2549, %v2611
  %v2698 = vmul.f32 %v2549, %v2615
  %v2699 = vmul.f32 %v2549, %v2619
  %v2700 = vmul.f32 %v2553, %v2607
  %v2701 = vmul.f32 %v2553, %v2611
  %v2702 = vmul.f32 %v2553, %v2615
  %v2703 = vmul.f32 %v2553, %v2619
  %v2704 = vmul.f32 %v2557, %v2607
  %v2705 = vmul.f32 %v2557, %v2611
  %v2706 = vmul.f32 %v2557, %v2615
  %v2707 = vmul.f32 %v2557, %v2619
  %v2708 = vmul.f32 %v2561, %v2607
  %v2709 = vmul.f32 %v2561, %v2611
  %v2710 = vmul.f32 %v2561, %v2615
  %v2711 = vmul.f32 %v2561, %v2619
  %v2712 = vmul.f32 %v2565, %v2607
  %v2713 = vmul.f32 %v2565, %v2611
  %v2714 = vmul.f32 %v2565, %v2615
  %v2715 = vmul.f32 %v2565, %v2619
  %v2716 = vmul.f32 %v2569, %v2607
  %v2717 = vmul.f32 %v2569, %v2611
  %v2718 = vmul.f32 %v2569, %v2615
  %v2719 = vmul.f32 %v2569, %v2619
  %v2720 = vmul.f32 %v2573, %v2607
  %v2721 = vmul.f32 %v2573, %v2611
  %v2722 = vmul.f32 %v2573, %v2615
  %v2723 = vmul.f32 %v2573, %v2619
  %v2724 = vmul.f32 %v2577, %v2607
  %v2725 = vmul.f32 %v2577, %v2611
  %v2726 = vmul.f32 %v2577, %v2615
  %v2727 = vmul.f32 %v2577, %v2619
  %v2728 = vmul.f32 %v2581, %v2607
  %v2729 = vmul.f32 %v2581, %v2611
  %v2730 = vmul.f32 %v2581, %v2615
  %v2731 = vmul.f32 %v2581, %v2619
  %v2732 = vmul.f32 %v2585, %v2607
  %v2733 = vmul.f32 %v2585, %v2611
  %v2734 = vmul.f32 %v2585, %v2615
  %v2735 = vmul.f32 %v2585, %v2619
  %v2736 = vmul.f32 %v2589, %v2607
  %v2737 = vmul.f32 %v2589, %v2611
  %v2738 = vmul.f32 %v2589, %v2615
  %v2739 = vmul.f32 %v2589, %v2619
  %v2740 = vmul.f32 %v2593, %v2607
  %v2741 = vmul.f32 %v2593, %v2611
  %v2742 = vmul.f32 %v2593, %v2615
  %v2743 = vmul.f32 %v2593, %v2619
  %v2744 = vmul.f32 %v2597, %v2607
  %v2745 = vmul.f32 %v2597, %v2611
  %v2746 = vmul.f32 %v2597, %v2615
  %v2747 = vmul.f32 %v2597, %v2619
  %v2748 = vmul.f32 %v2601, %v2607
  %v2749 = vmul.f32 %v2601, %v2611
  %v2750 = vmul.f32 %v2601, %v2615
  %v2751 = vmul.f32 %v2601, %v2619
  %v2752 = vadd.f32 %v1836, %v2624
  %v2753 = vadd.f32 %v1837, %v2625
  %v2754 = vadd.f32 %v1838, %v2626
  %v2755 = vadd.f32 %v1839, %v2627
  %v2756 = vadd.f32 %v1840, %v2628
  %v2757 = vadd.f32 %v1841, %v2629
  %v2758 = vadd.f32 %v1842, %v2630
  %v2759 = vadd.f32 %v1843, %v2631
  %v2760 = vadd.f32 %v1844, %v2632
  %v2761 = vadd.f32 %v1845, %v2633
  %v2762 = vadd.f32 %v1846, %v2634
  %v2763 = vadd.f32 %v1847, %v2635
  %v2764 = vadd.f32 %v1848, %v2636
  %v2765 = vadd.f32 %v1849, %v2637
  %v2766 = vadd.f32 %v1850, %v2638
  %v2767 = vadd.f32 %v1851, %v2639
  %v2768 = vadd.f32 %v1852, %v2640
  %v2769 = vadd.f32 %v1853, %v2641
  %v2770 = vadd.f32 %v1854, %v2642
  %v2771 = vadd.f32 %v1855, %v2643
  %v2772 = vadd.f32 %v1856, %v2644
  %v2773 = vadd.f32 %v1857, %v2645
  %v2774 = vadd.f32 %v1858, %v2646
  %v2775 = vadd.f32 %v1859, %v2647
  %v2776 = vadd.f32 %v1860, %v2648
  %v2777 = vadd.f32 %v1861, %v2649
  %v2778 = vadd.f32 %v1862, %v2650
  %v2779 = vadd.f32 %v1863, %v2651
  %v2780 = vadd.f32 %v1864, %v2652
  %v2781 = vadd.f32 %v1865, %v2653
  %v2782 = vadd.f32 %v1866, %v2654
  %v2783 = vadd.f32 %v1867, %v2655
  %v2784 = vadd.f32 %v1868, %v2656
  %v2785 = vadd.f32 %v1869, %v2657
  %v2786 = vadd.f32 %v1870, %v2658
  %v2787 = vadd.f32 %v1871, %v2659
  %v2788 = vadd.f32 %v1872, %v2660
  %v2789 = vadd.f32 %v1873, %v2661
  %v2790 = vadd.f32 %v1874, %v2662
  %v2791 = vadd.f32 %v1875, %v2663
  %v2792 = vadd.f32 %v1876, %v2664
  %v2793 = vadd.f32 %v1877, %v2665
  %v2794 = vadd.f32 %v1878, %v2666
  %v2795 = vadd.f32 %v1879, %v2667
  %v2796 = vadd.f32 %v1880, %v2668
  %v2797 = vadd.f32 %v1881, %v2669
  %v2798 = vadd.f32 %v1882, %v2670
  %v2799 = vadd.f32 %v1883, %v2671
  %v2800 = vadd.f32 %v1884, %v2672
  %v2801 = vadd.f32 %v1885, %v2673
  %v2802 = vadd.f32 %v1886, %v2674
  %v2803 = vadd.f32 %v1887, %v2675
  %v2804 = vadd.f32 %v1888, %v2676
  %v2805 = vadd.f32 %v1889, %v2677
  %v2806 = vadd.f32 %v1890, %v2678
  %v2807 = vadd.f32 %v1891, %v2679
  %v2808 = vadd.f32 %v1892, %v2680
  %v2809 = vadd.f32 %v1893, %v2681
  %v2810 = vadd.f32 %v1894, %v2682
  %v2811 = vadd.f32 %v1895, %v2683
  %v2812 = vadd.f32 %v1896, %v2684
  %v2813 = vadd.f32 %v1897, %v2685
  %v2814 = vadd.f32 %v1898, %v2686
  %v2815 = vadd.f32 %v1899, %v2687
  %v2816 = vadd.f32 %v1900, %v2688
  %v2817 = vadd.f32 %v1901, %v2689
  %v2818 = vadd.f32 %v1902, %v2690
  %v2819 = vadd.f32 %v1903, %v2691
  %v2820 = vadd.f32 %v1904, %v2692
  %v2821 = vadd.f32 %v1905, %v2693
  %v2822 = vadd.f32 %v1906, %v2694
  %v2823 = vadd.f32 %v1907, %v2695
  %v2824 = vadd.f32 %v1908, %v2696
  %v2825 = vadd.f32 %v1909, %v2697
  %v2826 = vadd.f32 %v1910, %v2698
  %v2827 = vadd.f32 %v1911, %v2699
  %v2828 = vadd.f32 %v1912, %v2700
  %v2829 = vadd.f32 %v1913, %v2701
  %v2830 = vadd.f32 %v1914, %v2702
  %v2831 = vadd.f32 %v1915, %v2703
  %v2832 = vadd.f32 %v1916, %v2704
  %v2833 = vadd.f32 %v1917, %v2705
  %v2834 = vadd.f32 %v1918, %v2706
  %v2835 = vadd.f32 %v1919, %v2707
  %v2836 = vadd.f32 %v1920, %v2708
  %v2837 = vadd.f32 %v1921, %v2709
  %v2838 = vadd.f32 %v1922, %v2710
  %v2839 = vadd.f32 %v1923, %v2711
  %v2840 = vadd.f32 %v1924, %v2712
  %v2841 = vadd.f32 %v1925, %v2713
  %v2842 = vadd.f32 %v1926, %v2714
  %v2843 = vadd.f32 %v1927, %v2715
  %v2844 = vadd.f32 %v1928, %v2716
  %v2845 = vadd.f32 %v1929, %v2717
  %v2846 = vadd.f32 %v1930, %v2718
  %v2847 = vadd.f32 %v1931, %v2719
  %v2848 = vadd.f32 %v1932, %v2720
  %v2849 = vadd.f32 %v1933, %v2721
  %v2850 = vadd.f32 %v1934, %v2722
  %v2851 = vadd.f32 %v1935, %v2723
  %v2852 = vadd.f32 %v1936, %v2724
  %v2853 = vadd.f32 %v1937, %v2725
  %v2854 = vadd.f32 %v1938, %v2726
  %v2855 = vadd.f32 %v1939, %v2727
  %v2856 = vadd.f32 %v1940, %v2728
  %v2857 = vadd.f32 %v1941, %v2729
  %v2858 = vadd.f32 %v1942, %v2730
  %v2859 = vadd.f32 %v1943, %v2731
  %v2860 = vadd.f32 %v1944, %v2732
  %v2861 = vadd.f32 %v1945, %v2733
  %v2862 = vadd.f32 %v1946, %v2734
  %v2863 = vadd.f32 %v1947, %v2735
  %v2864 = vadd.f32 %v1948, %v2736
  %v2865 = vadd.f32 %v1949, %v2737
  %v2866 = vadd.f32 %v1950, %v2738
  %v2867 = vadd.f32 %v1951, %v2739
  %v2868 = vadd.f32 %v1952, %v2740
  %v2869 = vadd.f32 %v1953, %v2741
  %v2870 = vadd.f32 %v1954, %v2742
  %v2871 = vadd.f32 %v1955, %v2743
  %v2872 = vadd.f32 %v1956, %v2744
  %v2873 = vadd.f32 %v1957, %v2745
  %v2874 = vadd.f32 %v1958, %v2746
  %v2875 = vadd.f32 %v1959, %v2747
  %v2876 = vadd.f32 %v1960, %v2748
  %v2877 = vadd.f32 %v1961, %v2749
  %v2878 = vadd.f32 %v1962, %v2750
  %v2879 = vadd.f32 %v1963, %v2751
  %v2880 = vld [vmem:[%s6] sm:$0xf]
  %v2882 = vlaneseq
  %v2883 = vshrl.u32 %v2882, 7
  %v2884 = vsub.s32 0, %v2883
  %v2885 = vrot.slane %v2880, %v2884
  %v2886 = vlaneseq
  %v2887 = vshrl.u32 %v2886, 7
  %v2888 = vsub.s32 1, %v2887
  %v2889 = vrot.slane %v2880, %v2888
  %v2890 = vlaneseq
  %v2891 = vshrl.u32 %v2890, 7
  %v2892 = vsub.s32 2, %v2891
  %v2893 = vrot.slane %v2880, %v2892
  %v2894 = vlaneseq
  %v2895 = vshrl.u32 %v2894, 7
  %v2896 = vsub.s32 3, %v2895
  %v2897 = vrot.slane %v2880, %v2896
  %v2902 = vadd.f32 %v2752, %v2885
  %v2903 = vadd.f32 %v2753, %v2889
  %v2904 = vadd.f32 %v2754, %v2893
  %v2905 = vadd.f32 %v2755, %v2897
  %v2906 = vadd.f32 %v2756, %v2885
  %v2907 = vadd.f32 %v2757, %v2889
  %v2908 = vadd.f32 %v2758, %v2893
  %v2909 = vadd.f32 %v2759, %v2897
  %v2910 = vadd.f32 %v2760, %v2885
  %v2911 = vadd.f32 %v2761, %v2889
  %v2912 = vadd.f32 %v2762, %v2893
  %v2913 = vadd.f32 %v2763, %v2897
  %v2914 = vadd.f32 %v2764, %v2885
  %v2915 = vadd.f32 %v2765, %v2889
  %v2916 = vadd.f32 %v2766, %v2893
  %v2917 = vadd.f32 %v2767, %v2897
  %v2918 = vadd.f32 %v2768, %v2885
  %v2919 = vadd.f32 %v2769, %v2889
  %v2920 = vadd.f32 %v2770, %v2893
  %v2921 = vadd.f32 %v2771, %v2897
  %v2922 = vadd.f32 %v2772, %v2885
  %v2923 = vadd.f32 %v2773, %v2889
  %v2924 = vadd.f32 %v2774, %v2893
  %v2925 = vadd.f32 %v2775, %v2897
  %v2926 = vadd.f32 %v2776, %v2885
  %v2927 = vadd.f32 %v2777, %v2889
  %v2928 = vadd.f32 %v2778, %v2893
  %v2929 = vadd.f32 %v2779, %v2897
  %v2930 = vadd.f32 %v2780, %v2885
  %v2931 = vadd.f32 %v2781, %v2889
  %v2932 = vadd.f32 %v2782, %v2893
  %v2933 = vadd.f32 %v2783, %v2897
  %v2934 = vadd.f32 %v2784, %v2885
  %v2935 = vadd.f32 %v2785, %v2889
  %v2936 = vadd.f32 %v2786, %v2893
  %v2937 = vadd.f32 %v2787, %v2897
  %v2938 = vadd.f32 %v2788, %v2885
  %v2939 = vadd.f32 %v2789, %v2889
  %v2940 = vadd.f32 %v2790, %v2893
  %v2941 = vadd.f32 %v2791, %v2897
  %v2942 = vadd.f32 %v2792, %v2885
  %v2943 = vadd.f32 %v2793, %v2889
  %v2944 = vadd.f32 %v2794, %v2893
  %v2945 = vadd.f32 %v2795, %v2897
  %v2946 = vadd.f32 %v2796, %v2885
  %v2947 = vadd.f32 %v2797, %v2889
  %v2948 = vadd.f32 %v2798, %v2893
  %v2949 = vadd.f32 %v2799, %v2897
  %v2950 = vadd.f32 %v2800, %v2885
  %v2951 = vadd.f32 %v2801, %v2889
  %v2952 = vadd.f32 %v2802, %v2893
  %v2953 = vadd.f32 %v2803, %v2897
  %v2954 = vadd.f32 %v2804, %v2885
  %v2955 = vadd.f32 %v2805, %v2889
  %v2956 = vadd.f32 %v2806, %v2893
  %v2957 = vadd.f32 %v2807, %v2897
  %v2958 = vadd.f32 %v2808, %v2885
  %v2959 = vadd.f32 %v2809, %v2889
  %v2960 = vadd.f32 %v2810, %v2893
  %v2961 = vadd.f32 %v2811, %v2897
  %v2962 = vadd.f32 %v2812, %v2885
  %v2963 = vadd.f32 %v2813, %v2889
  %v2964 = vadd.f32 %v2814, %v2893
  %v2965 = vadd.f32 %v2815, %v2897
  %v2966 = vadd.f32 %v2816, %v2885
  %v2967 = vadd.f32 %v2817, %v2889
  %v2968 = vadd.f32 %v2818, %v2893
  %v2969 = vadd.f32 %v2819, %v2897
  %v2970 = vadd.f32 %v2820, %v2885
  %v2971 = vadd.f32 %v2821, %v2889
  %v2972 = vadd.f32 %v2822, %v2893
  %v2973 = vadd.f32 %v2823, %v2897
  %v2974 = vadd.f32 %v2824, %v2885
  %v2975 = vadd.f32 %v2825, %v2889
  %v2976 = vadd.f32 %v2826, %v2893
  %v2977 = vadd.f32 %v2827, %v2897
  %v2978 = vadd.f32 %v2828, %v2885
  %v2979 = vadd.f32 %v2829, %v2889
  %v2980 = vadd.f32 %v2830, %v2893
  %v2981 = vadd.f32 %v2831, %v2897
  %v2982 = vadd.f32 %v2832, %v2885
  %v2983 = vadd.f32 %v2833, %v2889
  %v2984 = vadd.f32 %v2834, %v2893
  %v2985 = vadd.f32 %v2835, %v2897
  %v2986 = vadd.f32 %v2836, %v2885
  %v2987 = vadd.f32 %v2837, %v2889
  %v2988 = vadd.f32 %v2838, %v2893
  %v2989 = vadd.f32 %v2839, %v2897
  %v2990 = vadd.f32 %v2840, %v2885
  %v2991 = vadd.f32 %v2841, %v2889
  %v2992 = vadd.f32 %v2842, %v2893
  %v2993 = vadd.f32 %v2843, %v2897
  %v2994 = vadd.f32 %v2844, %v2885
  %v2995 = vadd.f32 %v2845, %v2889
  %v2996 = vadd.f32 %v2846, %v2893
  %v2997 = vadd.f32 %v2847, %v2897
  %v2998 = vadd.f32 %v2848, %v2885
  %v2999 = vadd.f32 %v2849, %v2889
  %v3000 = vadd.f32 %v2850, %v2893
  %v3001 = vadd.f32 %v2851, %v2897
  %v3002 = vadd.f32 %v2852, %v2885
  %v3003 = vadd.f32 %v2853, %v2889
  %v3004 = vadd.f32 %v2854, %v2893
  %v3005 = vadd.f32 %v2855, %v2897
  %v3006 = vadd.f32 %v2856, %v2885
  %v3007 = vadd.f32 %v2857, %v2889
  %v3008 = vadd.f32 %v2858, %v2893
  %v3009 = vadd.f32 %v2859, %v2897
  %v3010 = vadd.f32 %v2860, %v2885
  %v3011 = vadd.f32 %v2861, %v2889
  %v3012 = vadd.f32 %v2862, %v2893
  %v3013 = vadd.f32 %v2863, %v2897
  %v3014 = vadd.f32 %v2864, %v2885
  %v3015 = vadd.f32 %v2865, %v2889
  %v3016 = vadd.f32 %v2866, %v2893
  %v3017 = vadd.f32 %v2867, %v2897
  %v3018 = vadd.f32 %v2868, %v2885
  %v3019 = vadd.f32 %v2869, %v2889
  %v3020 = vadd.f32 %v2870, %v2893
  %v3021 = vadd.f32 %v2871, %v2897
  %v3022 = vadd.f32 %v2872, %v2885
  %v3023 = vadd.f32 %v2873, %v2889
  %v3024 = vadd.f32 %v2874, %v2893
  %v3025 = vadd.f32 %v2875, %v2897
  %v3026 = vadd.f32 %v2876, %v2885
  %v3027 = vadd.f32 %v2877, %v2889
  %v3028 = vadd.f32 %v2878, %v2893
  %v3029 = vadd.f32 %v2879, %v2897
  %v3030 = vmax.f32 %v2902, 0.0
  %v3031 = vmax.f32 %v2903, 0.0
  %v3032 = vmax.f32 %v2904, 0.0
  %v3033 = vmax.f32 %v2905, 0.0
  %v3034 = vmax.f32 %v2906, 0.0
  %v3035 = vmax.f32 %v2907, 0.0
  %v3036 = vmax.f32 %v2908, 0.0
  %v3037 = vmax.f32 %v2909, 0.0
  %v3038 = vmax.f32 %v2910, 0.0
  %v3039 = vmax.f32 %v2911, 0.0
  %v3040 = vmax.f32 %v2912, 0.0
  %v3041 = vmax.f32 %v2913, 0.0
  %v3042 = vmax.f32 %v2914, 0.0
  %v3043 = vmax.f32 %v2915, 0.0
  %v3044 = vmax.f32 %v2916, 0.0
  %v3045 = vmax.f32 %v2917, 0.0
  %v3046 = vmax.f32 %v2918, 0.0
  %v3047 = vmax.f32 %v2919, 0.0
  %v3048 = vmax.f32 %v2920, 0.0
  %v3049 = vmax.f32 %v2921, 0.0
  %v3050 = vmax.f32 %v2922, 0.0
  %v3051 = vmax.f32 %v2923, 0.0
  %v3052 = vmax.f32 %v2924, 0.0
  %v3053 = vmax.f32 %v2925, 0.0
  %v3054 = vmax.f32 %v2926, 0.0
  %v3055 = vmax.f32 %v2927, 0.0
  %v3056 = vmax.f32 %v2928, 0.0
  %v3057 = vmax.f32 %v2929, 0.0
  %v3058 = vmax.f32 %v2930, 0.0
  %v3059 = vmax.f32 %v2931, 0.0
  %v3060 = vmax.f32 %v2932, 0.0
  %v3061 = vmax.f32 %v2933, 0.0
  %v3062 = vmax.f32 %v2934, 0.0
  %v3063 = vmax.f32 %v2935, 0.0
  %v3064 = vmax.f32 %v2936, 0.0
  %v3065 = vmax.f32 %v2937, 0.0
  %v3066 = vmax.f32 %v2938, 0.0
  %v3067 = vmax.f32 %v2939, 0.0
  %v3068 = vmax.f32 %v2940, 0.0
  %v3069 = vmax.f32 %v2941, 0.0
  %v3070 = vmax.f32 %v2942, 0.0
  %v3071 = vmax.f32 %v2943, 0.0
  %v3072 = vmax.f32 %v2944, 0.0
  %v3073 = vmax.f32 %v2945, 0.0
  %v3074 = vmax.f32 %v2946, 0.0
  %v3075 = vmax.f32 %v2947, 0.0
  %v3076 = vmax.f32 %v2948, 0.0
  %v3077 = vmax.f32 %v2949, 0.0
  %v3078 = vmax.f32 %v2950, 0.0
  %v3079 = vmax.f32 %v2951, 0.0
  %v3080 = vmax.f32 %v2952, 0.0
  %v3081 = vmax.f32 %v2953, 0.0
  %v3082 = vmax.f32 %v2954, 0.0
  %v3083 = vmax.f32 %v2955, 0.0
  %v3084 = vmax.f32 %v2956, 0.0
  %v3085 = vmax.f32 %v2957, 0.0
  %v3086 = vmax.f32 %v2958, 0.0
  %v3087 = vmax.f32 %v2959, 0.0
  %v3088 = vmax.f32 %v2960, 0.0
  %v3089 = vmax.f32 %v2961, 0.0
  %v3090 = vmax.f32 %v2962, 0.0
  %v3091 = vmax.f32 %v2963, 0.0
  %v3092 = vmax.f32 %v2964, 0.0
  %v3093 = vmax.f32 %v2965, 0.0
  %v3094 = vmax.f32 %v2966, 0.0
  %v3095 = vmax.f32 %v2967, 0.0
  %v3096 = vmax.f32 %v2968, 0.0
  %v3097 = vmax.f32 %v2969, 0.0
  %v3098 = vmax.f32 %v2970, 0.0
  %v3099 = vmax.f32 %v2971, 0.0
  %v3100 = vmax.f32 %v2972, 0.0
  %v3101 = vmax.f32 %v2973, 0.0
  %v3102 = vmax.f32 %v2974, 0.0
  %v3103 = vmax.f32 %v2975, 0.0
  %v3104 = vmax.f32 %v2976, 0.0
  %v3105 = vmax.f32 %v2977, 0.0
  %v3106 = vmax.f32 %v2978, 0.0
  %v3107 = vmax.f32 %v2979, 0.0
  %v3108 = vmax.f32 %v2980, 0.0
  %v3109 = vmax.f32 %v2981, 0.0
  %v3110 = vmax.f32 %v2982, 0.0
  %v3111 = vmax.f32 %v2983, 0.0
  %v3112 = vmax.f32 %v2984, 0.0
  %v3113 = vmax.f32 %v2985, 0.0
  %v3114 = vmax.f32 %v2986, 0.0
  %v3115 = vmax.f32 %v2987, 0.0
  %v3116 = vmax.f32 %v2988, 0.0
  %v3117 = vmax.f32 %v2989, 0.0
  %v3118 = vmax.f32 %v2990, 0.0
  %v3119 = vmax.f32 %v2991, 0.0
  %v3120 = vmax.f32 %v2992, 0.0
  %v3121 = vmax.f32 %v2993, 0.0
  %v3122 = vmax.f32 %v2994, 0.0
  %v3123 = vmax.f32 %v2995, 0.0
  %v3124 = vmax.f32 %v2996, 0.0
  %v3125 = vmax.f32 %v2997, 0.0
  %v3126 = vmax.f32 %v2998, 0.0
  %v3127 = vmax.f32 %v2999, 0.0
  %v3128 = vmax.f32 %v3000, 0.0
  %v3129 = vmax.f32 %v3001, 0.0
  %v3130 = vmax.f32 %v3002, 0.0
  %v3131 = vmax.f32 %v3003, 0.0
  %v3132 = vmax.f32 %v3004, 0.0
  %v3133 = vmax.f32 %v3005, 0.0
  %v3134 = vmax.f32 %v3006, 0.0
  %v3135 = vmax.f32 %v3007, 0.0
  %v3136 = vmax.f32 %v3008, 0.0
  %v3137 = vmax.f32 %v3009, 0.0
  %v3138 = vmax.f32 %v3010, 0.0
  %v3139 = vmax.f32 %v3011, 0.0
  %v3140 = vmax.f32 %v3012, 0.0
  %v3141 = vmax.f32 %v3013, 0.0
  %v3142 = vmax.f32 %v3014, 0.0
  %v3143 = vmax.f32 %v3015, 0.0
  %v3144 = vmax.f32 %v3016, 0.0
  %v3145 = vmax.f32 %v3017, 0.0
  %v3146 = vmax.f32 %v3018, 0.0
  %v3147 = vmax.f32 %v3019, 0.0
  %v3148 = vmax.f32 %v3020, 0.0
  %v3149 = vmax.f32 %v3021, 0.0
  %v3150 = vmax.f32 %v3022, 0.0
  %v3151 = vmax.f32 %v3023, 0.0
  %v3152 = vmax.f32 %v3024, 0.0
  %v3153 = vmax.f32 %v3025, 0.0
  %v3154 = vmax.f32 %v3026, 0.0
  %v3155 = vmax.f32 %v3027, 0.0
  %v3156 = vmax.f32 %v3028, 0.0
  %v3157 = vmax.f32 %v3029, 0.0
  %v3158 = vpack.c.bf16 %v3034, %v3030
  %v3159 = vpack.c.bf16 %v3035, %v3031
  %v3160 = vpack.c.bf16 %v3036, %v3032
  %v3161 = vpack.c.bf16 %v3037, %v3033
  %v3162 = vpack.c.bf16 %v3042, %v3038
  %v3163 = vpack.c.bf16 %v3043, %v3039
  %v3164 = vpack.c.bf16 %v3044, %v3040
  %v3165 = vpack.c.bf16 %v3045, %v3041
  %v3166 = vpack.c.bf16 %v3050, %v3046
  %v3167 = vpack.c.bf16 %v3051, %v3047
  %v3168 = vpack.c.bf16 %v3052, %v3048
  %v3169 = vpack.c.bf16 %v3053, %v3049
  %v3170 = vpack.c.bf16 %v3058, %v3054
  %v3171 = vpack.c.bf16 %v3059, %v3055
  %v3172 = vpack.c.bf16 %v3060, %v3056
  %v3173 = vpack.c.bf16 %v3061, %v3057
  %v3174 = vpack.c.bf16 %v3066, %v3062
  %v3175 = vpack.c.bf16 %v3067, %v3063
  %v3176 = vpack.c.bf16 %v3068, %v3064
  %v3177 = vpack.c.bf16 %v3069, %v3065
  %v3178 = vpack.c.bf16 %v3074, %v3070
  %v3179 = vpack.c.bf16 %v3075, %v3071
  %v3180 = vpack.c.bf16 %v3076, %v3072
  %v3181 = vpack.c.bf16 %v3077, %v3073
  %v3182 = vpack.c.bf16 %v3082, %v3078
  %v3183 = vpack.c.bf16 %v3083, %v3079
  %v3184 = vpack.c.bf16 %v3084, %v3080
  %v3185 = vpack.c.bf16 %v3085, %v3081
  %v3186 = vpack.c.bf16 %v3090, %v3086
  %v3187 = vpack.c.bf16 %v3091, %v3087
  %v3188 = vpack.c.bf16 %v3092, %v3088
  %v3189 = vpack.c.bf16 %v3093, %v3089
  %v3190 = vpack.c.bf16 %v3098, %v3094
  %v3191 = vpack.c.bf16 %v3099, %v3095
  %v3192 = vpack.c.bf16 %v3100, %v3096
  %v3193 = vpack.c.bf16 %v3101, %v3097
  %v3194 = vpack.c.bf16 %v3106, %v3102
  %v3195 = vpack.c.bf16 %v3107, %v3103
  %v3196 = vpack.c.bf16 %v3108, %v3104
  %v3197 = vpack.c.bf16 %v3109, %v3105
  %v3198 = vpack.c.bf16 %v3114, %v3110
  %v3199 = vpack.c.bf16 %v3115, %v3111
  %v3200 = vpack.c.bf16 %v3116, %v3112
  %v3201 = vpack.c.bf16 %v3117, %v3113
  %v3202 = vpack.c.bf16 %v3122, %v3118
  %v3203 = vpack.c.bf16 %v3123, %v3119
  %v3204 = vpack.c.bf16 %v3124, %v3120
  %v3205 = vpack.c.bf16 %v3125, %v3121
  %v3206 = vpack.c.bf16 %v3130, %v3126
  %v3207 = vpack.c.bf16 %v3131, %v3127
  %v3208 = vpack.c.bf16 %v3132, %v3128
  %v3209 = vpack.c.bf16 %v3133, %v3129
  %v3210 = vpack.c.bf16 %v3138, %v3134
  %v3211 = vpack.c.bf16 %v3139, %v3135
  %v3212 = vpack.c.bf16 %v3140, %v3136
  %v3213 = vpack.c.bf16 %v3141, %v3137
  %v3214 = vpack.c.bf16 %v3146, %v3142
  %v3215 = vpack.c.bf16 %v3147, %v3143
  %v3216 = vpack.c.bf16 %v3148, %v3144
  %v3217 = vpack.c.bf16 %v3149, %v3145
  %v3218 = vpack.c.bf16 %v3154, %v3150
  %v3219 = vpack.c.bf16 %v3155, %v3151
  %v3220 = vpack.c.bf16 %v3156, %v3152
  %v3221 = vpack.c.bf16 %v3157, %v3153
  %v3222 = vld [vmem:[%s7] sm:$0xff]
  %v3223 = vld [vmem:[%s7 + $0x8] sm:$0xff]
  %v3224 = vld [vmem:[%s7 + $0x10] sm:$0xff]
  %v3225 = vld [vmem:[%s7 + $0x18] sm:$0xff]
  %v3226 = vld [vmem:[%s7 + $0x20] sm:$0xff]
  %v3227 = vld [vmem:[%s7 + $0x28] sm:$0xff]
  %v3228 = vld [vmem:[%s7 + $0x30] sm:$0xff]
  %v3229 = vld [vmem:[%s7 + $0x38] sm:$0xff]
  %v3230 = vld [vmem:[%s7 + $0x40] sm:$0xff]
  %v3231 = vld [vmem:[%s7 + $0x48] sm:$0xff]
  %v3232 = vld [vmem:[%s7 + $0x50] sm:$0xff]
  %v3233 = vld [vmem:[%s7 + $0x58] sm:$0xff]
  %v3234 = vld [vmem:[%s7 + $0x60] sm:$0xff]
  %v3235 = vld [vmem:[%s7 + $0x68] sm:$0xff]
  %v3236 = vld [vmem:[%s7 + $0x70] sm:$0xff]
  %v3237 = vld [vmem:[%s7 + $0x78] sm:$0xff]
  %v3238 = vld [vmem:[%s7 + $0x80] sm:$0xff]
  %v3239 = vld [vmem:[%s7 + $0x88] sm:$0xff]
  %v3240 = vld [vmem:[%s7 + $0x90] sm:$0xff]
  %v3241 = vld [vmem:[%s7 + $0x98] sm:$0xff]
  %v3242 = vld [vmem:[%s7 + $0xa0] sm:$0xff]
  %v3243 = vld [vmem:[%s7 + $0xa8] sm:$0xff]
  %v3244 = vld [vmem:[%s7 + $0xb0] sm:$0xff]
  %v3245 = vld [vmem:[%s7 + $0xb8] sm:$0xff]
  %v3246 = vld [vmem:[%s7 + $0xc0] sm:$0xff]
  %v3247 = vld [vmem:[%s7 + $0xc8] sm:$0xff]
  %v3248 = vld [vmem:[%s7 + $0xd0] sm:$0xff]
  %v3249 = vld [vmem:[%s7 + $0xd8] sm:$0xff]
  %v3250 = vld [vmem:[%s7 + $0xe0] sm:$0xff]
  %v3251 = vld [vmem:[%s7 + $0xe8] sm:$0xff]
  %v3252 = vld [vmem:[%s7 + $0xf0] sm:$0xff]
  %v3253 = vld [vmem:[%s7 + $0xf8] sm:$0xff]
  %v3254 = vld [vmem:[%s7 + $0x100] sm:$0xff]
  %v3255 = vld [vmem:[%s7 + $0x108] sm:$0xff]
  %v3256 = vld [vmem:[%s7 + $0x110] sm:$0xff]
  %v3257 = vld [vmem:[%s7 + $0x118] sm:$0xff]
  %v3258 = vld [vmem:[%s7 + $0x120] sm:$0xff]
  %v3259 = vld [vmem:[%s7 + $0x128] sm:$0xff]
  %v3260 = vld [vmem:[%s7 + $0x130] sm:$0xff]
  %v3261 = vld [vmem:[%s7 + $0x138] sm:$0xff]
  %v3262 = vld [vmem:[%s7 + $0x140] sm:$0xff]
  %v3263 = vld [vmem:[%s7 + $0x148] sm:$0xff]
  %v3264 = vld [vmem:[%s7 + $0x150] sm:$0xff]
  %v3265 = vld [vmem:[%s7 + $0x158] sm:$0xff]
  %v3266 = vld [vmem:[%s7 + $0x160] sm:$0xff]
  %v3267 = vld [vmem:[%s7 + $0x168] sm:$0xff]
  %v3268 = vld [vmem:[%s7 + $0x170] sm:$0xff]
  %v3269 = vld [vmem:[%s7 + $0x178] sm:$0xff]
  %v3270 = vld [vmem:[%s7 + $0x180] sm:$0xff]
  %v3271 = vld [vmem:[%s7 + $0x188] sm:$0xff]
  %v3272 = vld [vmem:[%s7 + $0x190] sm:$0xff]
  %v3273 = vld [vmem:[%s7 + $0x198] sm:$0xff]
  %v3274 = vld [vmem:[%s7 + $0x1a0] sm:$0xff]
  %v3275 = vld [vmem:[%s7 + $0x1a8] sm:$0xff]
  %v3276 = vld [vmem:[%s7 + $0x1b0] sm:$0xff]
  %v3277 = vld [vmem:[%s7 + $0x1b8] sm:$0xff]
  %v3278 = vld [vmem:[%s7 + $0x1c0] sm:$0xff]
  %v3279 = vld [vmem:[%s7 + $0x1c8] sm:$0xff]
  %v3280 = vld [vmem:[%s7 + $0x1d0] sm:$0xff]
  %v3281 = vld [vmem:[%s7 + $0x1d8] sm:$0xff]
  %v3282 = vld [vmem:[%s7 + $0x1e0] sm:$0xff]
  %v3283 = vld [vmem:[%s7 + $0x1e8] sm:$0xff]
  %v3284 = vld [vmem:[%s7 + $0x1f0] sm:$0xff]
  %v3285 = vld [vmem:[%s7 + $0x1f8] sm:$0xff]
  %v3286 = vld [vmem:[%s8] sm:$0x3]
  %v3288 = vlaneseq
  %v3289 = vshrl.u32 %v3288, 7
  %v3290 = vsub.s32 0, %v3289
  %v3291 = vrot.slane %v3286, %v3290
  %v3292 = vlaneseq
  %v3293 = vshrl.u32 %v3292, 7
  %v3294 = vsub.s32 1, %v3293
  %v3295 = vrot.slane %v3286, %v3294
  %v3362 = vunpack.c.l.b16 %v3222
  %v3363 = vunpack.c.h.b16 %v3222
  %v3364 = vunpack.c.l.b16 %v3223
  %v3365 = vunpack.c.h.b16 %v3223
  %v3366 = vunpack.c.l.b16 %v3224
  %v3367 = vunpack.c.h.b16 %v3224
  %v3368 = vunpack.c.l.b16 %v3225
  %v3369 = vunpack.c.h.b16 %v3225
  %v3370 = vunpack.c.l.b16 %v3226
  %v3371 = vunpack.c.h.b16 %v3226
  %v3372 = vunpack.c.l.b16 %v3227
  %v3373 = vunpack.c.h.b16 %v3227
  %v3374 = vunpack.c.l.b16 %v3228
  %v3375 = vunpack.c.h.b16 %v3228
  %v3376 = vunpack.c.l.b16 %v3229
  %v3377 = vunpack.c.h.b16 %v3229
  %v3378 = vunpack.c.l.b16 %v3230
  %v3379 = vunpack.c.h.b16 %v3230
  %v3380 = vunpack.c.l.b16 %v3231
  %v3381 = vunpack.c.h.b16 %v3231
  %v3382 = vunpack.c.l.b16 %v3232
  %v3383 = vunpack.c.h.b16 %v3232
  %v3384 = vunpack.c.l.b16 %v3233
  %v3385 = vunpack.c.h.b16 %v3233
  %v3386 = vunpack.c.l.b16 %v3234
  %v3387 = vunpack.c.h.b16 %v3234
  %v3388 = vunpack.c.l.b16 %v3235
  %v3389 = vunpack.c.h.b16 %v3235
  %v3390 = vunpack.c.l.b16 %v3236
  %v3391 = vunpack.c.h.b16 %v3236
  %v3392 = vunpack.c.l.b16 %v3237
  %v3393 = vunpack.c.h.b16 %v3237
  %v3394 = vunpack.c.l.b16 %v3238
  %v3395 = vunpack.c.h.b16 %v3238
  %v3396 = vunpack.c.l.b16 %v3239
  %v3397 = vunpack.c.h.b16 %v3239
  %v3398 = vunpack.c.l.b16 %v3240
  %v3399 = vunpack.c.h.b16 %v3240
  %v3400 = vunpack.c.l.b16 %v3241
  %v3401 = vunpack.c.h.b16 %v3241
  %v3402 = vunpack.c.l.b16 %v3242
  %v3403 = vunpack.c.h.b16 %v3242
  %v3404 = vunpack.c.l.b16 %v3243
  %v3405 = vunpack.c.h.b16 %v3243
  %v3406 = vunpack.c.l.b16 %v3244
  %v3407 = vunpack.c.h.b16 %v3244
  %v3408 = vunpack.c.l.b16 %v3245
  %v3409 = vunpack.c.h.b16 %v3245
  %v3410 = vunpack.c.l.b16 %v3246
  %v3411 = vunpack.c.h.b16 %v3246
  %v3412 = vunpack.c.l.b16 %v3247
  %v3413 = vunpack.c.h.b16 %v3247
  %v3414 = vunpack.c.l.b16 %v3248
  %v3415 = vunpack.c.h.b16 %v3248
  %v3416 = vunpack.c.l.b16 %v3249
  %v3417 = vunpack.c.h.b16 %v3249
  %v3418 = vunpack.c.l.b16 %v3250
  %v3419 = vunpack.c.h.b16 %v3250
  %v3420 = vunpack.c.l.b16 %v3251
  %v3421 = vunpack.c.h.b16 %v3251
  %v3422 = vunpack.c.l.b16 %v3252
  %v3423 = vunpack.c.h.b16 %v3252
  %v3424 = vunpack.c.l.b16 %v3253
  %v3425 = vunpack.c.h.b16 %v3253
  %v3426 = vunpack.c.l.b16 %v3254
  %v3427 = vunpack.c.h.b16 %v3254
  %v3428 = vunpack.c.l.b16 %v3255
  %v3429 = vunpack.c.h.b16 %v3255
  %v3430 = vunpack.c.l.b16 %v3256
  %v3431 = vunpack.c.h.b16 %v3256
  %v3432 = vunpack.c.l.b16 %v3257
  %v3433 = vunpack.c.h.b16 %v3257
  %v3434 = vunpack.c.l.b16 %v3258
  %v3435 = vunpack.c.h.b16 %v3258
  %v3436 = vunpack.c.l.b16 %v3259
  %v3437 = vunpack.c.h.b16 %v3259
  %v3438 = vunpack.c.l.b16 %v3260
  %v3439 = vunpack.c.h.b16 %v3260
  %v3440 = vunpack.c.l.b16 %v3261
  %v3441 = vunpack.c.h.b16 %v3261
  %v3442 = vunpack.c.l.b16 %v3262
  %v3443 = vunpack.c.h.b16 %v3262
  %v3444 = vunpack.c.l.b16 %v3263
  %v3445 = vunpack.c.h.b16 %v3263
  %v3446 = vunpack.c.l.b16 %v3264
  %v3447 = vunpack.c.h.b16 %v3264
  %v3448 = vunpack.c.l.b16 %v3265
  %v3449 = vunpack.c.h.b16 %v3265
  %v3450 = vunpack.c.l.b16 %v3266
  %v3451 = vunpack.c.h.b16 %v3266
  %v3452 = vunpack.c.l.b16 %v3267
  %v3453 = vunpack.c.h.b16 %v3267
  %v3454 = vunpack.c.l.b16 %v3268
  %v3455 = vunpack.c.h.b16 %v3268
  %v3456 = vunpack.c.l.b16 %v3269
  %v3457 = vunpack.c.h.b16 %v3269
  %v3458 = vunpack.c.l.b16 %v3270
  %v3459 = vunpack.c.h.b16 %v3270
  %v3460 = vunpack.c.l.b16 %v3271
  %v3461 = vunpack.c.h.b16 %v3271
  %v3462 = vunpack.c.l.b16 %v3272
  %v3463 = vunpack.c.h.b16 %v3272
  %v3464 = vunpack.c.l.b16 %v3273
  %v3465 = vunpack.c.h.b16 %v3273
  %v3466 = vunpack.c.l.b16 %v3274
  %v3467 = vunpack.c.h.b16 %v3274
  %v3468 = vunpack.c.l.b16 %v3275
  %v3469 = vunpack.c.h.b16 %v3275
  %v3470 = vunpack.c.l.b16 %v3276
  %v3471 = vunpack.c.h.b16 %v3276
  %v3472 = vunpack.c.l.b16 %v3277
  %v3473 = vunpack.c.h.b16 %v3277
  %v3474 = vunpack.c.l.b16 %v3278
  %v3475 = vunpack.c.h.b16 %v3278
  %v3476 = vunpack.c.l.b16 %v3279
  %v3477 = vunpack.c.h.b16 %v3279
  %v3478 = vunpack.c.l.b16 %v3280
  %v3479 = vunpack.c.h.b16 %v3280
  %v3480 = vunpack.c.l.b16 %v3281
  %v3481 = vunpack.c.h.b16 %v3281
  %v3482 = vunpack.c.l.b16 %v3282
  %v3483 = vunpack.c.h.b16 %v3282
  %v3484 = vunpack.c.l.b16 %v3283
  %v3485 = vunpack.c.h.b16 %v3283
  %v3486 = vunpack.c.l.b16 %v3284
  %v3487 = vunpack.c.h.b16 %v3284
  %v3488 = vunpack.c.l.b16 %v3285
  %v3489 = vunpack.c.h.b16 %v3285
  %v3490 = vpack.c.b16 %v3364, %v3362
  %v3491 = vpack.c.b16 %v3365, %v3363
  %v3492 = vpack.c.b16 %v3368, %v3366
  %v3493 = vpack.c.b16 %v3369, %v3367
  %v3494 = vpack.c.b16 %v3372, %v3370
  %v3495 = vpack.c.b16 %v3373, %v3371
  %v3496 = vpack.c.b16 %v3376, %v3374
  %v3497 = vpack.c.b16 %v3377, %v3375
  %v3498 = vpack.c.b16 %v3380, %v3378
  %v3499 = vpack.c.b16 %v3381, %v3379
  %v3500 = vpack.c.b16 %v3384, %v3382
  %v3501 = vpack.c.b16 %v3385, %v3383
  %v3502 = vpack.c.b16 %v3388, %v3386
  %v3503 = vpack.c.b16 %v3389, %v3387
  %v3504 = vpack.c.b16 %v3392, %v3390
  %v3505 = vpack.c.b16 %v3393, %v3391
  %v3506 = vpack.c.b16 %v3396, %v3394
  %v3507 = vpack.c.b16 %v3397, %v3395
  %v3508 = vpack.c.b16 %v3400, %v3398
  %v3509 = vpack.c.b16 %v3401, %v3399
  %v3510 = vpack.c.b16 %v3404, %v3402
  %v3511 = vpack.c.b16 %v3405, %v3403
  %v3512 = vpack.c.b16 %v3408, %v3406
  %v3513 = vpack.c.b16 %v3409, %v3407
  %v3514 = vpack.c.b16 %v3412, %v3410
  %v3515 = vpack.c.b16 %v3413, %v3411
  %v3516 = vpack.c.b16 %v3416, %v3414
  %v3517 = vpack.c.b16 %v3417, %v3415
  %v3518 = vpack.c.b16 %v3420, %v3418
  %v3519 = vpack.c.b16 %v3421, %v3419
  %v3520 = vpack.c.b16 %v3424, %v3422
  %v3521 = vpack.c.b16 %v3425, %v3423
  %v3522 = vpack.c.b16 %v3428, %v3426
  %v3523 = vpack.c.b16 %v3429, %v3427
  %v3524 = vpack.c.b16 %v3432, %v3430
  %v3525 = vpack.c.b16 %v3433, %v3431
  %v3526 = vpack.c.b16 %v3436, %v3434
  %v3527 = vpack.c.b16 %v3437, %v3435
  %v3528 = vpack.c.b16 %v3440, %v3438
  %v3529 = vpack.c.b16 %v3441, %v3439
  %v3530 = vpack.c.b16 %v3444, %v3442
  %v3531 = vpack.c.b16 %v3445, %v3443
  %v3532 = vpack.c.b16 %v3448, %v3446
  %v3533 = vpack.c.b16 %v3449, %v3447
  %v3534 = vpack.c.b16 %v3452, %v3450
  %v3535 = vpack.c.b16 %v3453, %v3451
  %v3536 = vpack.c.b16 %v3456, %v3454
  %v3537 = vpack.c.b16 %v3457, %v3455
  %v3538 = vpack.c.b16 %v3460, %v3458
  %v3539 = vpack.c.b16 %v3461, %v3459
  %v3540 = vpack.c.b16 %v3464, %v3462
  %v3541 = vpack.c.b16 %v3465, %v3463
  %v3542 = vpack.c.b16 %v3468, %v3466
  %v3543 = vpack.c.b16 %v3469, %v3467
  %v3544 = vpack.c.b16 %v3472, %v3470
  %v3545 = vpack.c.b16 %v3473, %v3471
  %v3546 = vpack.c.b16 %v3476, %v3474
  %v3547 = vpack.c.b16 %v3477, %v3475
  %v3548 = vpack.c.b16 %v3480, %v3478
  %v3549 = vpack.c.b16 %v3481, %v3479
  %v3550 = vpack.c.b16 %v3484, %v3482
  %v3551 = vpack.c.b16 %v3485, %v3483
  %v3552 = vpack.c.b16 %v3488, %v3486
  %v3553 = vpack.c.b16 %v3489, %v3487
  %3618 = vmatprep.subr.bf16.mxu0 %v3505
  %3619 = vmatpush1.bf16.msra.mxu0 %v3504
  %3620 = vmatprep.subr.bf16.mxu0 %v3503
  %3621 = vmatpush1.bf16.msra.mxu0 %v3502
  %3622 = vmatprep.subr.bf16.mxu0 %v3501
  %3623 = vmatpush1.bf16.msra.mxu0 %v3500
  %3624 = vmatprep.subr.bf16.mxu0 %v3499
  %3625 = vmatpush1.bf16.msra.mxu0 %v3498
  %3626 = vmatprep.subr.bf16.mxu0 %v3497
  %3627 = vmatpush1.bf16.msra.mxu0 %v3496
  %3628 = vmatprep.subr.bf16.mxu0 %v3495
  %3629 = vmatpush1.bf16.msra.mxu0 %v3494
  %3630 = vmatprep.subr.bf16.mxu0 %v3493
  %3631 = vmatpush1.bf16.msra.mxu0 %v3492
  %3632 = vmatprep.subr.bf16.mxu0 %v3491
  %3633 = vmatpush1.bf16.msra.mxu0 %v3490
  %3634 = vmatprep.subr.bf16.mxu0 %v3521
  %3635 = vmatpush2.bf16.msra.mxu0 %v3520
  %3636 = vmatprep.subr.bf16.mxu0 %v3519
  %3637 = vmatpush2.bf16.msra.mxu0 %v3518
  %3638 = vmatprep.subr.bf16.mxu0 %v3517
  %3639 = vmatpush2.bf16.msra.mxu0 %v3516
  %3640 = vmatprep.subr.bf16.mxu0 %v3515
  %3641 = vmatpush2.bf16.msra.mxu0 %v3514
  %3642 = vmatprep.subr.bf16.mxu0 %v3513
  %3643 = vmatpush2.bf16.msra.mxu0 %v3512
  %3644 = vmatprep.subr.bf16.mxu0 %v3511
  %3645 = vmatpush2.bf16.msra.mxu0 %v3510
  %3646 = vmatprep.subr.bf16.mxu0 %v3509
  %3647 = vmatpush2.bf16.msra.mxu0 %v3508
  %3648 = vmatprep.subr.bf16.mxu0 %v3507
  %3649 = vmatpush2.bf16.msra.mxu0 %v3506
  %3650 = vmatprep.mubr.bf16.mxu0 %v3159
  %3651 = vmatmul.mubr.bf16.gmra.mxu0 %v3158
  %v3652 = vpop.f32.mrf.mxu0
  %v3653 = vadd.f32 %v3291, %v3652
  %v3654 = vpop.f32.mrf.mxu0
  %v3655 = vadd.f32 %v3295, %v3654
  %v3656 = vpop.f32.mrf.mxu0
  %v3657 = vadd.f32 %v3291, %v3656
  %v3658 = vpop.f32.mrf.mxu0
  %v3659 = vadd.f32 %v3295, %v3658
  %3660 = vmatprep.mubr.bf16.mxu0 %v3163
  %3661 = vmatmul.mubr.bf16.gmra.mxu0 %v3162
  %v3662 = vpop.f32.mrf.mxu0
  %v3663 = vadd.f32 %v3291, %v3662
  %v3664 = vpop.f32.mrf.mxu0
  %v3665 = vadd.f32 %v3295, %v3664
  %v3666 = vpop.f32.mrf.mxu0
  %v3667 = vadd.f32 %v3291, %v3666
  %v3668 = vpop.f32.mrf.mxu0
  %v3669 = vadd.f32 %v3295, %v3668
  %3670 = vmatprep.mubr.bf16.mxu0 %v3167
  %3671 = vmatmul.mubr.bf16.gmra.mxu0 %v3166
  %v3672 = vpop.f32.mrf.mxu0
  %v3673 = vadd.f32 %v3291, %v3672
  %v3674 = vpop.f32.mrf.mxu0
  %v3675 = vadd.f32 %v3295, %v3674
  %v3676 = vpop.f32.mrf.mxu0
  %v3677 = vadd.f32 %v3291, %v3676
  %v3678 = vpop.f32.mrf.mxu0
  %v3679 = vadd.f32 %v3295, %v3678
  %3680 = vmatprep.mubr.bf16.mxu0 %v3171
  %3681 = vmatmul.mubr.bf16.gmra.mxu0 %v3170
  %v3682 = vpop.f32.mrf.mxu0
  %v3683 = vadd.f32 %v3291, %v3682
  %v3684 = vpop.f32.mrf.mxu0
  %v3685 = vadd.f32 %v3295, %v3684
  %v3686 = vpop.f32.mrf.mxu0
  %v3687 = vadd.f32 %v3291, %v3686
  %v3688 = vpop.f32.mrf.mxu0
  %v3689 = vadd.f32 %v3295, %v3688
  %3690 = vmatprep.mubr.bf16.mxu0 %v3175
  %3691 = vmatmul.mubr.bf16.gmra.mxu0 %v3174
  %v3692 = vpop.f32.mrf.mxu0
  %v3693 = vadd.f32 %v3291, %v3692
  %v3694 = vpop.f32.mrf.mxu0
  %v3695 = vadd.f32 %v3295, %v3694
  %v3696 = vpop.f32.mrf.mxu0
  %v3697 = vadd.f32 %v3291, %v3696
  %v3698 = vpop.f32.mrf.mxu0
  %v3699 = vadd.f32 %v3295, %v3698
  %3700 = vmatprep.mubr.bf16.mxu0 %v3179
  %3701 = vmatmul.mubr.bf16.gmra.mxu0 %v3178
  %v3702 = vpop.f32.mrf.mxu0
  %v3703 = vadd.f32 %v3291, %v3702
  %v3704 = vpop.f32.mrf.mxu0
  %v3705 = vadd.f32 %v3295, %v3704
  %v3706 = vpop.f32.mrf.mxu0
  %v3707 = vadd.f32 %v3291, %v3706
  %v3708 = vpop.f32.mrf.mxu0
  %v3709 = vadd.f32 %v3295, %v3708
  %3710 = vmatprep.mubr.bf16.mxu0 %v3183
  %3711 = vmatmul.mubr.bf16.gmra.mxu0 %v3182
  %v3712 = vpop.f32.mrf.mxu0
  %v3713 = vadd.f32 %v3291, %v3712
  %v3714 = vpop.f32.mrf.mxu0
  %v3715 = vadd.f32 %v3295, %v3714
  %v3716 = vpop.f32.mrf.mxu0
  %v3717 = vadd.f32 %v3291, %v3716
  %v3718 = vpop.f32.mrf.mxu0
  %v3719 = vadd.f32 %v3295, %v3718
  %3720 = vmatprep.mubr.bf16.mxu0 %v3187
  %3721 = vmatmul.mubr.bf16.gmra.mxu0 %v3186
  %v3722 = vpop.f32.mrf.mxu0
  %v3723 = vadd.f32 %v3291, %v3722
  %v3724 = vpop.f32.mrf.mxu0
  %v3725 = vadd.f32 %v3295, %v3724
  %v3726 = vpop.f32.mrf.mxu0
  %v3727 = vadd.f32 %v3291, %v3726
  %v3728 = vpop.f32.mrf.mxu0
  %v3729 = vadd.f32 %v3295, %v3728
  %3730 = vmatprep.mubr.bf16.mxu0 %v3191
  %3731 = vmatmul.mubr.bf16.gmra.mxu0 %v3190
  %v3732 = vpop.f32.mrf.mxu0
  %v3733 = vadd.f32 %v3291, %v3732
  %v3734 = vpop.f32.mrf.mxu0
  %v3735 = vadd.f32 %v3295, %v3734
  %v3736 = vpop.f32.mrf.mxu0
  %v3737 = vadd.f32 %v3291, %v3736
  %v3738 = vpop.f32.mrf.mxu0
  %v3739 = vadd.f32 %v3295, %v3738
  %3740 = vmatprep.mubr.bf16.mxu0 %v3195
  %3741 = vmatmul.mubr.bf16.gmra.mxu0 %v3194
  %v3742 = vpop.f32.mrf.mxu0
  %v3743 = vadd.f32 %v3291, %v3742
  %v3744 = vpop.f32.mrf.mxu0
  %v3745 = vadd.f32 %v3295, %v3744
  %v3746 = vpop.f32.mrf.mxu0
  %v3747 = vadd.f32 %v3291, %v3746
  %v3748 = vpop.f32.mrf.mxu0
  %v3749 = vadd.f32 %v3295, %v3748
  %3750 = vmatprep.mubr.bf16.mxu0 %v3199
  %3751 = vmatmul.mubr.bf16.gmra.mxu0 %v3198
  %v3752 = vpop.f32.mrf.mxu0
  %v3753 = vadd.f32 %v3291, %v3752
  %v3754 = vpop.f32.mrf.mxu0
  %v3755 = vadd.f32 %v3295, %v3754
  %v3756 = vpop.f32.mrf.mxu0
  %v3757 = vadd.f32 %v3291, %v3756
  %v3758 = vpop.f32.mrf.mxu0
  %v3759 = vadd.f32 %v3295, %v3758
  %3760 = vmatprep.mubr.bf16.mxu0 %v3203
  %3761 = vmatmul.mubr.bf16.gmra.mxu0 %v3202
  %v3762 = vpop.f32.mrf.mxu0
  %v3763 = vadd.f32 %v3291, %v3762
  %v3764 = vpop.f32.mrf.mxu0
  %v3765 = vadd.f32 %v3295, %v3764
  %v3766 = vpop.f32.mrf.mxu0
  %v3767 = vadd.f32 %v3291, %v3766
  %v3768 = vpop.f32.mrf.mxu0
  %v3769 = vadd.f32 %v3295, %v3768
  %3770 = vmatprep.mubr.bf16.mxu0 %v3207
  %3771 = vmatmul.mubr.bf16.gmra.mxu0 %v3206
  %v3772 = vpop.f32.mrf.mxu0
  %v3773 = vadd.f32 %v3291, %v3772
  %v3774 = vpop.f32.mrf.mxu0
  %v3775 = vadd.f32 %v3295, %v3774
  %v3776 = vpop.f32.mrf.mxu0
  %v3777 = vadd.f32 %v3291, %v3776
  %v3778 = vpop.f32.mrf.mxu0
  %v3779 = vadd.f32 %v3295, %v3778
  %3780 = vmatprep.mubr.bf16.mxu0 %v3211
  %3781 = vmatmul.mubr.bf16.gmra.mxu0 %v3210
  %v3782 = vpop.f32.mrf.mxu0
  %v3783 = vadd.f32 %v3291, %v3782
  %v3784 = vpop.f32.mrf.mxu0
  %v3785 = vadd.f32 %v3295, %v3784
  %v3786 = vpop.f32.mrf.mxu0
  %v3787 = vadd.f32 %v3291, %v3786
  %v3788 = vpop.f32.mrf.mxu0
  %v3789 = vadd.f32 %v3295, %v3788
  %3790 = vmatprep.mubr.bf16.mxu0 %v3215
  %3791 = vmatmul.mubr.bf16.gmra.mxu0 %v3214
  %v3792 = vpop.f32.mrf.mxu0
  %v3793 = vadd.f32 %v3291, %v3792
  %v3794 = vpop.f32.mrf.mxu0
  %v3795 = vadd.f32 %v3295, %v3794
  %v3796 = vpop.f32.mrf.mxu0
  %v3797 = vadd.f32 %v3291, %v3796
  %v3798 = vpop.f32.mrf.mxu0
  %v3799 = vadd.f32 %v3295, %v3798
  %3800 = vmatprep.mubr.bf16.mxu0 %v3219
  %3801 = vmatmul.mubr.bf16.gmra.mxu0 %v3218
  %v3802 = vpop.f32.mrf.mxu0
  %v3803 = vadd.f32 %v3291, %v3802
  %v3804 = vpop.f32.mrf.mxu0
  %v3805 = vadd.f32 %v3295, %v3804
  %v3806 = vpop.f32.mrf.mxu0
  %v3807 = vadd.f32 %v3291, %v3806
  %v3808 = vpop.f32.mrf.mxu0
  %v3809 = vadd.f32 %v3295, %v3808
  %3810 = vdwg.mxu0
  %3811 = vmatprep.subr.bf16.mxu0 %v3537
  %3812 = vmatpush1.bf16.msra.mxu0 %v3536
  %3813 = vmatprep.subr.bf16.mxu0 %v3535
  %3814 = vmatpush1.bf16.msra.mxu0 %v3534
  %3815 = vmatprep.subr.bf16.mxu0 %v3533
  %3816 = vmatpush1.bf16.msra.mxu0 %v3532
  %3817 = vmatprep.subr.bf16.mxu0 %v3531
  %3818 = vmatpush1.bf16.msra.mxu0 %v3530
  %3819 = vmatprep.subr.bf16.mxu0 %v3529
  %3820 = vmatpush1.bf16.msra.mxu0 %v3528
  %3821 = vmatprep.subr.bf16.mxu0 %v3527
  %3822 = vmatpush1.bf16.msra.mxu0 %v3526
  %3823 = vmatprep.subr.bf16.mxu0 %v3525
  %3824 = vmatpush1.bf16.msra.mxu0 %v3524
  %3825 = vmatprep.subr.bf16.mxu0 %v3523
  %3826 = vmatpush1.bf16.msra.mxu0 %v3522
  %3827 = vmatprep.subr.bf16.mxu0 %v3553
  %3828 = vmatpush2.bf16.msra.mxu0 %v3552
  %3829 = vmatprep.subr.bf16.mxu0 %v3551
  %3830 = vmatpush2.bf16.msra.mxu0 %v3550
  %3831 = vmatprep.subr.bf16.mxu0 %v3549
  %3832 = vmatpush2.bf16.msra.mxu0 %v3548
  %3833 = vmatprep.subr.bf16.mxu0 %v3547
  %3834 = vmatpush2.bf16.msra.mxu0 %v3546
  %3835 = vmatprep.subr.bf16.mxu0 %v3545
  %3836 = vmatpush2.bf16.msra.mxu0 %v3544
  %3837 = vmatprep.subr.bf16.mxu0 %v3543
  %3838 = vmatpush2.bf16.msra.mxu0 %v3542
  %3839 = vmatprep.subr.bf16.mxu0 %v3541
  %3840 = vmatpush2.bf16.msra.mxu0 %v3540
  %3841 = vmatprep.subr.bf16.mxu0 %v3539
  %3842 = vmatpush2.bf16.msra.mxu0 %v3538
  %3843 = vmatprep.mubr.bf16.mxu0 %v3161
  %3844 = vmatmul.mubr.bf16.gmra.mxu0 %v3160
  %v3845 = vpop.f32.mrf.mxu0
  %v3846 = vadd.f32 %v3653, %v3845
  %v3847 = vpop.f32.mrf.mxu0
  %v3848 = vadd.f32 %v3655, %v3847
  %v3849 = vpop.f32.mrf.mxu0
  %v3850 = vadd.f32 %v3657, %v3849
  %v3851 = vpop.f32.mrf.mxu0
  %v3852 = vadd.f32 %v3659, %v3851
  %3853 = vmatprep.mubr.bf16.mxu0 %v3165
  %3854 = vmatmul.mubr.bf16.gmra.mxu0 %v3164
  %v3855 = vpop.f32.mrf.mxu0
  %v3856 = vadd.f32 %v3663, %v3855
  %v3857 = vpop.f32.mrf.mxu0
  %v3858 = vadd.f32 %v3665, %v3857
  %v3859 = vpop.f32.mrf.mxu0
  %v3860 = vadd.f32 %v3667, %v3859
  %v3861 = vpop.f32.mrf.mxu0
  %v3862 = vadd.f32 %v3669, %v3861
  %3863 = vmatprep.mubr.bf16.mxu0 %v3169
  %3864 = vmatmul.mubr.bf16.gmra.mxu0 %v3168
  %v3865 = vpop.f32.mrf.mxu0
  %v3866 = vadd.f32 %v3673, %v3865
  %v3867 = vpop.f32.mrf.mxu0
  %v3868 = vadd.f32 %v3675, %v3867
  %v3869 = vpop.f32.mrf.mxu0
  %v3870 = vadd.f32 %v3677, %v3869
  %v3871 = vpop.f32.mrf.mxu0
  %v3872 = vadd.f32 %v3679, %v3871
  %3873 = vmatprep.mubr.bf16.mxu0 %v3173
  %3874 = vmatmul.mubr.bf16.gmra.mxu0 %v3172
  %v3875 = vpop.f32.mrf.mxu0
  %v3876 = vadd.f32 %v3683, %v3875
  %v3877 = vpop.f32.mrf.mxu0
  %v3878 = vadd.f32 %v3685, %v3877
  %v3879 = vpop.f32.mrf.mxu0
  %v3880 = vadd.f32 %v3687, %v3879
  %v3881 = vpop.f32.mrf.mxu0
  %v3882 = vadd.f32 %v3689, %v3881
  %3883 = vmatprep.mubr.bf16.mxu0 %v3177
  %3884 = vmatmul.mubr.bf16.gmra.mxu0 %v3176
  %v3885 = vpop.f32.mrf.mxu0
  %v3886 = vadd.f32 %v3693, %v3885
  %v3887 = vpop.f32.mrf.mxu0
  %v3888 = vadd.f32 %v3695, %v3887
  %v3889 = vpop.f32.mrf.mxu0
  %v3890 = vadd.f32 %v3697, %v3889
  %v3891 = vpop.f32.mrf.mxu0
  %v3892 = vadd.f32 %v3699, %v3891
  %3893 = vmatprep.mubr.bf16.mxu0 %v3181
  %3894 = vmatmul.mubr.bf16.gmra.mxu0 %v3180
  %v3895 = vpop.f32.mrf.mxu0
  %v3896 = vadd.f32 %v3703, %v3895
  %v3897 = vpop.f32.mrf.mxu0
  %v3898 = vadd.f32 %v3705, %v3897
  %v3899 = vpop.f32.mrf.mxu0
  %v3900 = vadd.f32 %v3707, %v3899
  %v3901 = vpop.f32.mrf.mxu0
  %v3902 = vadd.f32 %v3709, %v3901
  %3903 = vmatprep.mubr.bf16.mxu0 %v3185
  %3904 = vmatmul.mubr.bf16.gmra.mxu0 %v3184
  %v3905 = vpop.f32.mrf.mxu0
  %v3906 = vadd.f32 %v3713, %v3905
  %v3907 = vpop.f32.mrf.mxu0
  %v3908 = vadd.f32 %v3715, %v3907
  %v3909 = vpop.f32.mrf.mxu0
  %v3910 = vadd.f32 %v3717, %v3909
  %v3911 = vpop.f32.mrf.mxu0
  %v3912 = vadd.f32 %v3719, %v3911
  %3913 = vmatprep.mubr.bf16.mxu0 %v3189
  %3914 = vmatmul.mubr.bf16.gmra.mxu0 %v3188
  %v3915 = vpop.f32.mrf.mxu0
  %v3916 = vadd.f32 %v3723, %v3915
  %v3917 = vpop.f32.mrf.mxu0
  %v3918 = vadd.f32 %v3725, %v3917
  %v3919 = vpop.f32.mrf.mxu0
  %v3920 = vadd.f32 %v3727, %v3919
  %v3921 = vpop.f32.mrf.mxu0
  %v3922 = vadd.f32 %v3729, %v3921
  %3923 = vmatprep.mubr.bf16.mxu0 %v3193
  %3924 = vmatmul.mubr.bf16.gmra.mxu0 %v3192
  %v3925 = vpop.f32.mrf.mxu0
  %v3926 = vadd.f32 %v3733, %v3925
  %v3927 = vpop.f32.mrf.mxu0
  %v3928 = vadd.f32 %v3735, %v3927
  %v3929 = vpop.f32.mrf.mxu0
  %v3930 = vadd.f32 %v3737, %v3929
  %v3931 = vpop.f32.mrf.mxu0
  %v3932 = vadd.f32 %v3739, %v3931
  %3933 = vmatprep.mubr.bf16.mxu0 %v3197
  %3934 = vmatmul.mubr.bf16.gmra.mxu0 %v3196
  %v3935 = vpop.f32.mrf.mxu0
  %v3936 = vadd.f32 %v3743, %v3935
  %v3937 = vpop.f32.mrf.mxu0
  %v3938 = vadd.f32 %v3745, %v3937
  %v3939 = vpop.f32.mrf.mxu0
  %v3940 = vadd.f32 %v3747, %v3939
  %v3941 = vpop.f32.mrf.mxu0
  %v3942 = vadd.f32 %v3749, %v3941
  %3943 = vmatprep.mubr.bf16.mxu0 %v3201
  %3944 = vmatmul.mubr.bf16.gmra.mxu0 %v3200
  %v3945 = vpop.f32.mrf.mxu0
  %v3946 = vadd.f32 %v3753, %v3945
  %v3947 = vpop.f32.mrf.mxu0
  %v3948 = vadd.f32 %v3755, %v3947
  %v3949 = vpop.f32.mrf.mxu0
  %v3950 = vadd.f32 %v3757, %v3949
  %v3951 = vpop.f32.mrf.mxu0
  %v3952 = vadd.f32 %v3759, %v3951
  %3953 = vmatprep.mubr.bf16.mxu0 %v3205
  %3954 = vmatmul.mubr.bf16.gmra.mxu0 %v3204
  %v3955 = vpop.f32.mrf.mxu0
  %v3956 = vadd.f32 %v3763, %v3955
  %v3957 = vpop.f32.mrf.mxu0
  %v3958 = vadd.f32 %v3765, %v3957
  %v3959 = vpop.f32.mrf.mxu0
  %v3960 = vadd.f32 %v3767, %v3959
  %v3961 = vpop.f32.mrf.mxu0
  %v3962 = vadd.f32 %v3769, %v3961
  %3963 = vmatprep.mubr.bf16.mxu0 %v3209
  %3964 = vmatmul.mubr.bf16.gmra.mxu0 %v3208
  %v3965 = vpop.f32.mrf.mxu0
  %v3966 = vadd.f32 %v3773, %v3965
  %v3967 = vpop.f32.mrf.mxu0
  %v3968 = vadd.f32 %v3775, %v3967
  %v3969 = vpop.f32.mrf.mxu0
  %v3970 = vadd.f32 %v3777, %v3969
  %v3971 = vpop.f32.mrf.mxu0
  %v3972 = vadd.f32 %v3779, %v3971
  %3973 = vmatprep.mubr.bf16.mxu0 %v3213
  %3974 = vmatmul.mubr.bf16.gmra.mxu0 %v3212
  %v3975 = vpop.f32.mrf.mxu0
  %v3976 = vadd.f32 %v3783, %v3975
  %v3977 = vpop.f32.mrf.mxu0
  %v3978 = vadd.f32 %v3785, %v3977
  %v3979 = vpop.f32.mrf.mxu0
  %v3980 = vadd.f32 %v3787, %v3979
  %v3981 = vpop.f32.mrf.mxu0
  %v3982 = vadd.f32 %v3789, %v3981
  %3983 = vmatprep.mubr.bf16.mxu0 %v3217
  %3984 = vmatmul.mubr.bf16.gmra.mxu0 %v3216
  %v3985 = vpop.f32.mrf.mxu0
  %v3986 = vadd.f32 %v3793, %v3985
  %v3987 = vpop.f32.mrf.mxu0
  %v3988 = vadd.f32 %v3795, %v3987
  %v3989 = vpop.f32.mrf.mxu0
  %v3990 = vadd.f32 %v3797, %v3989
  %v3991 = vpop.f32.mrf.mxu0
  %v3992 = vadd.f32 %v3799, %v3991
  %3993 = vmatprep.mubr.bf16.mxu0 %v3221
  %3994 = vmatmul.mubr.bf16.gmra.mxu0 %v3220
  %v3995 = vpop.f32.mrf.mxu0
  %v3996 = vadd.f32 %v3803, %v3995
  %v3997 = vpop.f32.mrf.mxu0
  %v3998 = vadd.f32 %v3805, %v3997
  %v3999 = vpop.f32.mrf.mxu0
  %v4000 = vadd.f32 %v3807, %v3999
  %v4001 = vpop.f32.mrf.mxu0
  %v4002 = vadd.f32 %v3809, %v4001
  %4003 = vdwg.mxu0
  %4004 = vst [vmem:[%s9] sm:$0xff] %v3846
  %4005 = vst [vmem:[%s9 + $0x8] sm:$0xff] %v3848
  %4006 = vst [vmem:[%s9 + $0x10] sm:$0xff] %v3850
  %4007 = vst [vmem:[%s9 + $0x18] sm:$0xff] %v3852
  %4008 = vst [vmem:[%s9 + $0x20] sm:$0xff] %v3856
  %4009 = vst [vmem:[%s9 + $0x28] sm:$0xff] %v3858
  %4010 = vst [vmem:[%s9 + $0x30] sm:$0xff] %v3860
  %4011 = vst [vmem:[%s9 + $0x38] sm:$0xff] %v3862
  %4012 = vst [vmem:[%s9 + $0x40] sm:$0xff] %v3866
  %4013 = vst [vmem:[%s9 + $0x48] sm:$0xff] %v3868
  %4014 = vst [vmem:[%s9 + $0x50] sm:$0xff] %v3870
  %4015 = vst [vmem:[%s9 + $0x58] sm:$0xff] %v3872
  %4016 = vst [vmem:[%s9 + $0x60] sm:$0xff] %v3876
  %4017 = vst [vmem:[%s9 + $0x68] sm:$0xff] %v3878
  %4018 = vst [vmem:[%s9 + $0x70] sm:$0xff] %v3880
  %4019 = vst [vmem:[%s9 + $0x78] sm:$0xff] %v3882
  %4020 = vst [vmem:[%s9 + $0x80] sm:$0xff] %v3886
  %4021 = vst [vmem:[%s9 + $0x88] sm:$0xff] %v3888
  %4022 = vst [vmem:[%s9 + $0x90] sm:$0xff] %v3890
  %4023 = vst [vmem:[%s9 + $0x98] sm:$0xff] %v3892
  %4024 = vst [vmem:[%s9 + $0xa0] sm:$0xff] %v3896
  %4025 = vst [vmem:[%s9 + $0xa8] sm:$0xff] %v3898
  %4026 = vst [vmem:[%s9 + $0xb0] sm:$0xff] %v3900
  %4027 = vst [vmem:[%s9 + $0xb8] sm:$0xff] %v3902
  %4028 = vst [vmem:[%s9 + $0xc0] sm:$0xff] %v3906
  %4029 = vst [vmem:[%s9 + $0xc8] sm:$0xff] %v3908
  %4030 = vst [vmem:[%s9 + $0xd0] sm:$0xff] %v3910
  %4031 = vst [vmem:[%s9 + $0xd8] sm:$0xff] %v3912
  %4032 = vst [vmem:[%s9 + $0xe0] sm:$0xff] %v3916
  %4033 = vst [vmem:[%s9 + $0xe8] sm:$0xff] %v3918
  %4034 = vst [vmem:[%s9 + $0xf0] sm:$0xff] %v3920
  %4035 = vst [vmem:[%s9 + $0xf8] sm:$0xff] %v3922
  %4036 = vst [vmem:[%s9 + $0x100] sm:$0xff] %v3926
  %4037 = vst [vmem:[%s9 + $0x108] sm:$0xff] %v3928
  %4038 = vst [vmem:[%s9 + $0x110] sm:$0xff] %v3930
  %4039 = vst [vmem:[%s9 + $0x118] sm:$0xff] %v3932
  %4040 = vst [vmem:[%s9 + $0x120] sm:$0xff] %v3936
  %4041 = vst [vmem:[%s9 + $0x128] sm:$0xff] %v3938
  %4042 = vst [vmem:[%s9 + $0x130] sm:$0xff] %v3940
  %4043 = vst [vmem:[%s9 + $0x138] sm:$0xff] %v3942
  %4044 = vst [vmem:[%s9 + $0x140] sm:$0xff] %v3946
  %4045 = vst [vmem:[%s9 + $0x148] sm:$0xff] %v3948
  %4046 = vst [vmem:[%s9 + $0x150] sm:$0xff] %v3950
  %4047 = vst [vmem:[%s9 + $0x158] sm:$0xff] %v3952
  %4048 = vst [vmem:[%s9 + $0x160] sm:$0xff] %v3956
  %4049 = vst [vmem:[%s9 + $0x168] sm:$0xff] %v3958
  %4050 = vst [vmem:[%s9 + $0x170] sm:$0xff] %v3960
  %4051 = vst [vmem:[%s9 + $0x178] sm:$0xff] %v3962
  %4052 = vst [vmem:[%s9 + $0x180] sm:$0xff] %v3966
  %4053 = vst [vmem:[%s9 + $0x188] sm:$0xff] %v3968
  %4054 = vst [vmem:[%s9 + $0x190] sm:$0xff] %v3970
  %4055 = vst [vmem:[%s9 + $0x198] sm:$0xff] %v3972
  %4056 = vst [vmem:[%s9 + $0x1a0] sm:$0xff] %v3976
  %4057 = vst [vmem:[%s9 + $0x1a8] sm:$0xff] %v3978
  %4058 = vst [vmem:[%s9 + $0x1b0] sm:$0xff] %v3980
  %4059 = vst [vmem:[%s9 + $0x1b8] sm:$0xff] %v3982
  %4060 = vst [vmem:[%s9 + $0x1c0] sm:$0xff] %v3986
  %4061 = vst [vmem:[%s9 + $0x1c8] sm:$0xff] %v3988
  %4062 = vst [vmem:[%s9 + $0x1d0] sm:$0xff] %v3990
  %4063 = vst [vmem:[%s9 + $0x1d8] sm:$0xff] %v3992
  %4064 = vst [vmem:[%s9 + $0x1e0] sm:$0xff] %v3996
  %4065 = vst [vmem:[%s9 + $0x1e8] sm:$0xff] %v3998
  %4066 = vst [vmem:[%s9 + $0x1f0] sm:$0xff] %v4000
  %4067 = vst [vmem:[%s9 + $0x1f8] sm:$0xff] %v4002
  // Predicated region
  $region38: #{wae_forward_prepared.1} parent=0 // pred_check
    _
  $region39: #{wae_forward_prepared.1} parent=0 // pred_check_branch
    %4069 = sbr.rel (0) target = $region41
  $region40: #{wae_forward_prepared.1} parent=0 // pred_region
    _
  $region41: #{wae_forward_prepared.1} parent=0 // pred_fallthru
    _
  // Predicated region
  $region42: #{wae_forward_prepared.1} parent=0 // pred_check
    _
  $region43: #{wae_forward_prepared.1} parent=0 // pred_check_branch
    %4071 = sbr.rel (0) target = $region45
  $region44: #{wae_forward_prepared.1} parent=0 // pred_region
    _
  $region45: #{wae_forward_prepared.1} parent=0 // pred_fallthru
    _
  // Predicated region
  $region46: #{wae_forward_prepared.1} parent=0 // pred_check
    _
  $region47: #{wae_forward_prepared.1} parent=0 // pred_check_branch
    %4073 = sbr.rel (0) target = $region49
  $region48: #{wae_forward_prepared.1} parent=0 // pred_region
    _
  $region49: #{wae_forward_prepared.1} parent=0 // pred_fallthru
    _
  // Predicated region
  $region50: #{wae_forward_prepared.1} parent=0 // pred_check
    _
  $region51: #{wae_forward_prepared.1} parent=0 // pred_check_branch
    %4075 = sbr.rel (0) target = $region53
  $region52: #{wae_forward_prepared.1} parent=0 // pred_region
    _
  $region53: #{wae_forward_prepared.1} parent=0 // pred_fallthru
    _

</llo_original>
